<compile_context>
chip_gen: v5e
topology: v5e:2x2
jax: 0.10.0
libtpu: 0.0.40
codegen_flags: <defaults>
</compile_context>

<pallas_src>
import functools

import jax
import jax.numpy as jnp
import numpy as np
from jax.experimental import pallas as pl
from jax.experimental.pallas import tpu as pltpu


def _round_up(x, m):
    return (x + m - 1) // m * m


# PyTorch LSTM gate order is (i, f, g, o); we store gates as (i, f, o, g) so that
# one sigmoid covers the first three DP-wide blocks and tanh covers the last.
_GATE_PERM = (0, 1, 3, 2)


def _lstm_chunk_kernel(gx_ref, whh_ref, o_ref, h_sc, c_sc, *, t_chunk, dp, interleave):
    """One grid step == one (batch_chunk, time_chunk) tile of the recurrence.

    gx_ref : (T_CHUNK, B_CHUNK, 4*DP)  precomputed input gates (time-major)
    whh_ref: (DP, 4*DP)                W_hh^T, gate order (i, f, o, g)
    o_ref  : (B_CHUNK, T_CHUNK, DP)    hidden-state outputs (batch-first block)
    h_sc, c_sc: (B_CHUNK, DP)          recurrent state, persists across time chunks
    """
    # Reset state at the start of every batch chunk's time sweep.
    @pl.when(pl.program_id(1) == 0)
    def _():
        h_sc[...] = jnp.zeros_like(h_sc)
        c_sc[...] = jnp.zeros_like(c_sc)

    w_hh = whh_ref[...]          # constant block index -> DMA'd once, stays resident

    def cell(gx, h, c):
        # gx: (b, 4*dp) f32; h, c: (b, dp) f32.  Only MXU op on the serial path.
        gates = gx + jnp.dot(h.astype(w_hh.dtype), w_hh,
                             preferred_element_type=jnp.float32)
        ifo = jax.nn.sigmoid(gates[:, :3 * dp])      # one EUP pass for i, f, o
        g = jnp.tanh(gates[:, 3 * dp:])
        c = ifo[:, dp:2 * dp] * c + ifo[:, :dp] * g  # f*c + i*g   (f32 elementwise)
        h = ifo[:, 2 * dp:3 * dp] * jnp.tanh(c)      # o*tanh(c)
        return h, c

    if interleave:
        # Two independent batch sub-streams: the MXU matmul of one stream co-issues
        # with the EUP/VPU gate math of the other (the recurrence is latency-bound).
        half = h_sc.shape[0] // 2                    # sublane-aligned (b_chunk % 16 == 0)
        h_a, c_a = h_sc[:half], c_sc[:half]
        h_b, c_b = h_sc[half:], c_sc[half:]
        for tt in range(t_chunk):                    # fully unrolled, static indices
            gx = gx_ref[tt].astype(jnp.float32)
            h_a, c_a = cell(gx[:half], h_a, c_a)
            h_b, c_b = cell(gx[half:], h_b, c_b)
            o_ref[:half, tt, :] = h_a.astype(o_ref.dtype)   # lane-dense stores
            o_ref[half:, tt, :] = h_b.astype(o_ref.dtype)
        h_sc[:half] = h_a
        h_sc[half:] = h_b
        c_sc[:half] = c_a
        c_sc[half:] = c_b
    else:
        h, c = h_sc[...], c_sc[...]
        for tt in range(t_chunk):
            h, c = cell(gx_ref[tt].astype(jnp.float32), h, c)
            o_ref[:, tt, :] = h.astype(o_ref.dtype)         # lane-dense store
        h_sc[...] = h
        c_sc[...] = c


def sequence_model_forward(x, params, *, t_chunk=16, b_chunk=None,
                           matmul_dtype=jnp.bfloat16, gates_dtype=None):
    """x: (B, T, D) batch-first, like the PyTorch module. Returns (B, T, D)."""
    B, T, D = x.shape
    if gates_dtype is None:
        gates_dtype = matmul_dtype
    DP = _round_up(D, 128)                 # lane-aligned feature width (>= 128)
    BP = _round_up(B, 8)                   # sublane-aligned batch
    if b_chunk is None:
        if BP <= 8:
            b_chunk = BP
        else:
            # >= 2 batch chunks so the "parallel" axis spans both v7x TCs; cap at
            # 128 sublanes (v5e MXU rows).  On v6e with B >= 256 pass b_chunk=256.
            b_chunk = min(128, _round_up(BP // 2, 8))
    BP = _round_up(BP, b_chunk)
    TP = _round_up(T, t_chunk)
    interleave = (b_chunk >= 16) and (b_chunk % 16 == 0)

    w_l = params["linear_w"]               # (D, D):   y = x @ W_l^T + b_l
    b_l = params["linear_b"]               # (D,)
    w_ih = params["w_ih"]                  # (4D, D)
    w_hh = params["w_hh"]                  # (4D, D)
    b_lstm = params["b_ih"] + params["b_hh"]   # (4D,)

    # --- Fused x-projection (hoisted, time-parallel) -------------------------
    w_x = (w_ih @ w_l).T                   # (D, 4D) == W_l^T @ W_ih^T
    b_x = w_ih @ b_l + b_lstm              # (4D,)
    w_h = w_hh.T                           # (D, 4D)

    # --- Per-gate padding D->DP + gate reorder (i,f,g,o)->(i,f,o,g) ----------
    def pad_gate_mat(w):                   # (D, 4D) -> (DP, 4*DP)
        out = jnp.zeros((DP, 4 * DP), jnp.float32)
        for j, k in enumerate(_GATE_PERM):
            out = out.at[:D, j * DP:j * DP + D].set(w[:, k * D:(k + 1) * D])
        return out

    def pad_gate_vec(v):                   # (4D,) -> (4*DP,)
        out = jnp.zeros((4 * DP,), jnp.float32)
        for j, k in enumerate(_GATE_PERM):
            out = out.at[j * DP:j * DP + D].set(v[k * D:(k + 1) * D])
        return out

    w_x_p = pad_gate_mat(w_x)
    b_x_p = pad_gate_vec(b_x)
    w_hh_p = pad_gate_mat(w_h).astype(matmul_dtype)

    # Zero-pad activations (padded lanes/rows provably stay zero through the LSTM).
    x_p = jnp.zeros((BP, TP, DP), jnp.float32).at[:B, :T, :D].set(
        x.astype(jnp.float32))

    # Hoisted, time-parallel projection as ONE big well-shaped matmul (plain XLA).
    # The 'btd,dg->tbg' output layout folds the batch-first -> time-major transpose
    # into the matmul so x is never separately transposed in HBM.
    gates_x = (jnp.einsum("btd,dg->tbg", x_p, w_x_p,
                          preferred_element_type=jnp.float32)
               + b_x_p).astype(gates_dtype)          # (TP, BP, 4*DP)

    # --- Recurrent Pallas kernel ---------------------------------------------
    grid = (BP // b_chunk, TP // t_chunk)
    kernel = functools.partial(_lstm_chunk_kernel, t_chunk=t_chunk, dp=DP,
                               interleave=interleave)

    gx_item = jnp.dtype(gates_dtype).itemsize
    w_item = jnp.dtype(matmul_dtype).itemsize
    block_bytes = (2 * t_chunk * b_chunk * 4 * DP * gx_item   # gates_x (double-buffered)
                   + 2 * b_chunk * t_chunk * DP * 4           # output  (double-buffered)
                   + 2 * DP * 4 * DP * w_item                 # W_hh (default 2 buffers)
                   + 2 * b_chunk * DP * 4)                    # h/c scratch
    # Cap at v7x's 64 MiB physical VMEM per TensorCore.
    vmem_limit = int(min(max(2 * block_bytes, 16 * 1024 * 1024), 64 * 1024 * 1024))

    out_pad = pl.pallas_call(
        kernel,
        out_shape=jax.ShapeDtypeStruct((BP, TP, DP), jnp.float32),
        grid_spec=pltpu.PrefetchScalarGridSpec(
            num_scalar_prefetch=0,
            grid=grid,
            in_specs=[
                # precomputed input gates, time-major chunk
                pl.BlockSpec((t_chunk, b_chunk, 4 * DP), lambda b, t: (t, b, 0)),
                # recurrent weight, constant index -> fetched once
                pl.BlockSpec((DP, 4 * DP), lambda b, t: (0, 0)),
            ],
            # batch-first output blocks: no wrapper transpose needed afterwards
            out_specs=pl.BlockSpec((b_chunk, t_chunk, DP), lambda b, t: (b, t, 0)),
            scratch_shapes=[
                pltpu.VMEM((b_chunk, DP), jnp.float32),   # h
                pltpu.VMEM((b_chunk, DP), jnp.float32),   # c
            ],
        ),
        compiler_params=pltpu.CompilerParams(
            # batch chunks are independent (shardable across v7x's 2 TCs);
            # the time axis is the sequential recurrence.
            dimension_semantics=("parallel", "arbitrary"),
            vmem_limit_bytes=vmem_limit,
        ),
    )(gates_x, w_hh_p)

    out = out_pad[:B, :T, :D]              # already batch-first
    return out.astype(x.dtype)


def sequence_model_reference(x, params):
    """Pure-JAX reference identical to the PyTorch Linear + nn.LSTM forward."""
    B, T, D = x.shape
    z = x @ params["linear_w"].T + params["linear_b"]   # (B, T, D)

    w_ih, w_hh = params["w_ih"], params["w_hh"]
    b = params["b_ih"] + params["b_hh"]

    def step(carry, x_t):
        h, c = carry
        gates = x_t @ w_ih.T + h @ w_hh.T + b
        i, f, g, o = jnp.split(gates, 4, axis=-1)
        i, f, o = jax.nn.sigmoid(i), jax.nn.sigmoid(f), jax.nn.sigmoid(o)
        g = jnp.tanh(g)
        c = f * c + i * g
        h = o * jnp.tanh(c)
        return (h, c), h

    h0 = jnp.zeros((B, D), jnp.float32)
    c0 = jnp.zeros((B, D), jnp.float32)
    _, hs = jax.lax.scan(step, (h0, c0), jnp.transpose(z, (1, 0, 2)))
    return jnp.transpose(hs, (1, 0, 2))


def init_params(key, D):
    """Deterministic init mimicking PyTorch's U(-1/sqrt(D), 1/sqrt(D))."""
    bound = 1.0 / np.sqrt(D)
    keys = jax.random.split(key, 6)
    u = lambda k, shape: jax.random.uniform(k, shape, jnp.float32, -bound, bound)
    return {
        "linear_w": u(keys[0], (D, D)),
        "linear_b": u(keys[1], (D,)),
        "w_ih": u(keys[2], (4 * D, D)),
        "w_hh": u(keys[3], (4 * D, D)),
        "b_ih": u(keys[4], (4 * D,)),
        "b_hh": u(keys[5], (4 * D,)),
    }


if __name__ == "__main__":
    key = jax.random.PRNGKey(0)
    k_x, k_p = jax.random.split(key)

    # --- Config 1: toy shape implied by the module (B=2, T=8, D=16) ----------
    B, T, D = 2, 8, 16
    x = jax.random.normal(k_x, (B, T, D), dtype=jnp.float32)
    params = init_params(k_p, D)
    ref = sequence_model_reference(x, params)

    # Default path: bf16 MXU operands, f32 accumulation + f32 elementwise math.
    out_bf16 = jax.block_until_ready(sequence_model_forward(x, params))
    np.testing.assert_allclose(np.asarray(out_bf16), np.asarray(ref),
                               rtol=5e-2, atol=5e-2)

    # f32-operand path: exact parity with the PyTorch module (only fp-rounding
    # deltas from the W_l/W_ih fusion).
    out_f32 = jax.block_until_ready(
        sequence_model_forward(x, params, matmul_dtype=jnp.float32))
    np.testing.assert_allclose(np.asarray(out_f32), np.asarray(ref),
                               rtol=2e-5, atol=2e-5)

    # --- Config 2: exercises >=2 batch chunks (parallel axis), the interleaved
    # two-stream path, and state carry across multiple time chunks. -----------
    B2, T2 = 32, 20
    k_x2, _ = jax.random.split(k_x)
    x2 = jax.random.normal(k_x2, (B2, T2, D), dtype=jnp.float32)
    ref2 = sequence_model_reference(x2, params)
    out2 = jax.block_until_ready(sequence_model_forward(x2, params))
    np.testing.assert_allclose(np.asarray(out2), np.asarray(ref2),
                               rtol=5e-2, atol=5e-2)

    print("KERNEL_OK")
</pallas_src>

<mosaic_0001>
module attributes {stable_mosaic.version = 11 : i64} {
  func.func @_lstm_chunk_kernel(%arg0: i32, %arg1: i32, %arg2: memref<16x8x512xbf16, #tpu.memory_space<vmem>>, %arg3: memref<128x512xbf16, #tpu.memory_space<vmem>>, %arg4: memref<8x16x128xf32, #tpu.memory_space<vmem>>, %arg5: memref<8x128xf32, #tpu.memory_space<vmem>>, %arg6: memref<8x128xf32, #tpu.memory_space<vmem>>) attributes {dimension_semantics = [#tpu.dimension_semantics<parallel>, #tpu.dimension_semantics<arbitrary>], iteration_bounds = array<i64: 1, 1>, scalar_prefetch = 0 : i64, scratch_operands = 2 : i64, tpu.core_type = #tpu.core_type<tc>, window_params = [{transform_indices = @transform_0, window_bounds = array<i64: 16, 8, 512>}, {pipeline_mode = #tpu.pipeline_mode<synchronous>, transform_indices = @transform_1, window_bounds = array<i64: 128, 512>}, {transform_indices = @transform_2, window_bounds = array<i64: 8, 16, 128>}]} {
    %c0_i32 = arith.constant 0 : i32
    %0 = arith.cmpi eq, %arg1, %c0_i32 : i32
    %1 = arith.extui %0 : i1 to i32
    %c0_i32_0 = arith.constant 0 : i32
    %2 = arith.cmpi ne, %1, %c0_i32_0 : i32
    scf.if %2 {
      %cst_122 = arith.constant 0.000000e+00 : f32
      %408 = vector.broadcast %cst_122 : f32 to vector<8x128xf32>
      %c0_123 = arith.constant 0 : index
      %c0_124 = arith.constant 0 : index
      %409 = vector.load %arg5[%c0_123, %c0_124] : memref<8x128xf32, #tpu.memory_space<vmem>>, vector<8x128xf32>
      tpu.vector_store %arg5[%c0_123, %c0_124], %408 {strides = array<i32>} : memref<8x128xf32, #tpu.memory_space<vmem>>, vector<8x128xf32>,
      %cst_125 = arith.constant 0.000000e+00 : f32
      %410 = vector.broadcast %cst_125 : f32 to vector<8x128xf32>
      %c0_126 = arith.constant 0 : index
      %c0_127 = arith.constant 0 : index
      %411 = vector.load %arg6[%c0_126, %c0_127] : memref<8x128xf32, #tpu.memory_space<vmem>>, vector<8x128xf32>
      tpu.vector_store %arg6[%c0_126, %c0_127], %410 {strides = array<i32>} : memref<8x128xf32, #tpu.memory_space<vmem>>, vector<8x128xf32>,
    } else {
    }
    %c0 = arith.constant 0 : index
    %c0_1 = arith.constant 0 : index
    %3 = vector.load %arg3[%c0, %c0_1] : memref<128x512xbf16, #tpu.memory_space<vmem>>, vector<128x512xbf16>
    %c0_2 = arith.constant 0 : index
    %c0_3 = arith.constant 0 : index
    %4 = vector.load %arg5[%c0_2, %c0_3] : memref<8x128xf32, #tpu.memory_space<vmem>>, vector<8x128xf32>
    %c0_4 = arith.constant 0 : index
    %c0_5 = arith.constant 0 : index
    %5 = vector.load %arg6[%c0_4, %c0_5] : memref<8x128xf32, #tpu.memory_space<vmem>>, vector<8x128xf32>
    %c0_6 = arith.constant 0 : index
    %c0_7 = arith.constant 0 : index
    %c0_8 = arith.constant 0 : index
    %6 = vector.load %arg2[%c0_6, %c0_7, %c0_8] : memref<16x8x512xbf16, #tpu.memory_space<vmem>>, vector<1x8x512xbf16>
    %7 = vector.shape_cast %6 : vector<1x8x512xbf16> to vector<8x512xbf16>
    %8 = arith.extf %7 : vector<8x512xbf16> to vector<8x512xf32>
    %9 = arith.truncf %4 : vector<8x128xf32> to vector<8x128xbf16>
    %cst = arith.constant dense<0.000000e+00> : vector<8x512xf32>
    %10 = tpu.matmul %9, %3, %cst {dimension_numbers = #tpu.dot_dimension_numbers<[1], [0], [0], [1], [0, 0, 1, 1], [], []>} : vector<8x128xbf16>, vector<128x512xbf16>, vector<8x512xf32> -> vector<8x512xf32>
    %11 = arith.addf %8, %10 : vector<8x512xf32>
    %12 = vector.extract_strided_slice %11 {offsets = [0, 0], sizes = [8, 384], strides = [1, 1]} : vector<8x512xf32> to vector<8x384xf32>
    %13 = arith.negf %12 : vector<8x384xf32>
    %14 = math.exp %13 : vector<8x384xf32>
    %cst_9 = arith.constant 1.000000e+00 : f32
    %15 = vector.broadcast %cst_9 : f32 to vector<8x384xf32>
    %16 = arith.addf %15, %14 : vector<8x384xf32>
    %17 = arith.divf %15, %16 : vector<8x384xf32>
    %18 = vector.extract_strided_slice %11 {offsets = [0, 384], sizes = [8, 128], strides = [1, 1]} : vector<8x512xf32> to vector<8x128xf32>
    %19 = math.tanh %18 : vector<8x128xf32>
    %20 = vector.extract_strided_slice %17 {offsets = [0, 128], sizes = [8, 128], strides = [1, 1]} : vector<8x384xf32> to vector<8x128xf32>
    %21 = arith.mulf %20, %5 : vector<8x128xf32>
    %22 = vector.extract_strided_slice %17 {offsets = [0, 0], sizes = [8, 128], strides = [1, 1]} : vector<8x384xf32> to vector<8x128xf32>
    %23 = arith.mulf %22, %19 : vector<8x128xf32>
    %24 = arith.addf %21, %23 : vector<8x128xf32>
    %25 = vector.extract_strided_slice %17 {offsets = [0, 256], sizes = [8, 128], strides = [1, 1]} : vector<8x384xf32> to vector<8x128xf32>
    %26 = math.tanh %24 : vector<8x128xf32>
    %27 = arith.mulf %25, %26 : vector<8x128xf32>
    %c0_10 = arith.constant 0 : index
    %c0_11 = arith.constant 0 : index
    %c0_12 = arith.constant 0 : index
    %28 = vector.load %arg4[%c0_10, %c0_11, %c0_12] : memref<8x16x128xf32, #tpu.memory_space<vmem>>, vector<8x1x128xf32>
    %29 = vector.shape_cast %28 : vector<8x1x128xf32> to vector<8x128xf32>
    %30 = vector.shape_cast %27 : vector<8x128xf32> to vector<8x1x128xf32>
    tpu.vector_store %arg4[%c0_10, %c0_11, %c0_12], %30 {strides = array<i32>} : memref<8x16x128xf32, #tpu.memory_space<vmem>>, vector<8x1x128xf32>,
    %c1 = arith.constant 1 : index
    %c0_13 = arith.constant 0 : index
    %c0_14 = arith.constant 0 : index
    %31 = vector.load %arg2[%c1, %c0_13, %c0_14] : memref<16x8x512xbf16, #tpu.memory_space<vmem>>, vector<1x8x512xbf16>
    %32 = vector.shape_cast %31 : vector<1x8x512xbf16> to vector<8x512xbf16>
    %33 = arith.extf %32 : vector<8x512xbf16> to vector<8x512xf32>
    %34 = arith.truncf %27 : vector<8x128xf32> to vector<8x128xbf16>
    %cst_15 = arith.constant dense<0.000000e+00> : vector<8x512xf32>
    %35 = tpu.matmul %34, %3, %cst_15 {dimension_numbers = #tpu.dot_dimension_numbers<[1], [0], [0], [1], [0, 0, 1, 1], [], []>} : vector<8x128xbf16>, vector<128x512xbf16>, vector<8x512xf32> -> vector<8x512xf32>
    %36 = arith.addf %33, %35 : vector<8x512xf32>
    %37 = vector.extract_strided_slice %36 {offsets = [0, 0], sizes = [8, 384], strides = [1, 1]} : vector<8x512xf32> to vector<8x384xf32>
    %38 = arith.negf %37 : vector<8x384xf32>
    %39 = math.exp %38 : vector<8x384xf32>
    %cst_16 = arith.constant 1.000000e+00 : f32
    %40 = vector.broadcast %cst_16 : f32 to vector<8x384xf32>
    %41 = arith.addf %40, %39 : vector<8x384xf32>
    %42 = arith.divf %40, %41 : vector<8x384xf32>
    %43 = vector.extract_strided_slice %36 {offsets = [0, 384], sizes = [8, 128], strides = [1, 1]} : vector<8x512xf32> to vector<8x128xf32>
    %44 = math.tanh %43 : vector<8x128xf32>
    %45 = vector.extract_strided_slice %42 {offsets = [0, 128], sizes = [8, 128], strides = [1, 1]} : vector<8x384xf32> to vector<8x128xf32>
    %46 = arith.mulf %45, %24 : vector<8x128xf32>
    %47 = vector.extract_strided_slice %42 {offsets = [0, 0], sizes = [8, 128], strides = [1, 1]} : vector<8x384xf32> to vector<8x128xf32>
    %48 = arith.mulf %47, %44 : vector<8x128xf32>
    %49 = arith.addf %46, %48 : vector<8x128xf32>
    %50 = vector.extract_strided_slice %42 {offsets = [0, 256], sizes = [8, 128], strides = [1, 1]} : vector<8x384xf32> to vector<8x128xf32>
    %51 = math.tanh %49 : vector<8x128xf32>
    %52 = arith.mulf %50, %51 : vector<8x128xf32>
    %c0_17 = arith.constant 0 : index
    %c1_18 = arith.constant 1 : index
    %c0_19 = arith.constant 0 : index
    %53 = vector.load %arg4[%c0_17, %c1_18, %c0_19] : memref<8x16x128xf32, #tpu.memory_space<vmem>>, vector<8x1x128xf32>
    %54 = vector.shape_cast %53 : vector<8x1x128xf32> to vector<8x128xf32>
    %55 = vector.shape_cast %52 : vector<8x128xf32> to vector<8x1x128xf32>
    tpu.vector_store %arg4[%c0_17, %c1_18, %c0_19], %55 {strides = array<i32>} : memref<8x16x128xf32, #tpu.memory_space<vmem>>, vector<8x1x128xf32>,
    %c2 = arith.constant 2 : index
    %c0_20 = arith.constant 0 : index
    %c0_21 = arith.constant 0 : index
    %56 = vector.load %arg2[%c2, %c0_20, %c0_21] : memref<16x8x512xbf16, #tpu.memory_space<vmem>>, vector<1x8x512xbf16>
    %57 = vector.shape_cast %56 : vector<1x8x512xbf16> to vector<8x512xbf16>
    %58 = arith.extf %57 : vector<8x512xbf16> to vector<8x512xf32>
    %59 = arith.truncf %52 : vector<8x128xf32> to vector<8x128xbf16>
    %cst_22 = arith.constant dense<0.000000e+00> : vector<8x512xf32>
    %60 = tpu.matmul %59, %3, %cst_22 {dimension_numbers = #tpu.dot_dimension_numbers<[1], [0], [0], [1], [0, 0, 1, 1], [], []>} : vector<8x128xbf16>, vector<128x512xbf16>, vector<8x512xf32> -> vector<8x512xf32>
    %61 = arith.addf %58, %60 : vector<8x512xf32>
    %62 = vector.extract_strided_slice %61 {offsets = [0, 0], sizes = [8, 384], strides = [1, 1]} : vector<8x512xf32> to vector<8x384xf32>
    %63 = arith.negf %62 : vector<8x384xf32>
    %64 = math.exp %63 : vector<8x384xf32>
    %cst_23 = arith.constant 1.000000e+00 : f32
    %65 = vector.broadcast %cst_23 : f32 to vector<8x384xf32>
    %66 = arith.addf %65, %64 : vector<8x384xf32>
    %67 = arith.divf %65, %66 : vector<8x384xf32>
    %68 = vector.extract_strided_slice %61 {offsets = [0, 384], sizes = [8, 128], strides = [1, 1]} : vector<8x512xf32> to vector<8x128xf32>
    %69 = math.tanh %68 : vector<8x128xf32>
    %70 = vector.extract_strided_slice %67 {offsets = [0, 128], sizes = [8, 128], strides = [1, 1]} : vector<8x384xf32> to vector<8x128xf32>
    %71 = arith.mulf %70, %49 : vector<8x128xf32>
    %72 = vector.extract_strided_slice %67 {offsets = [0, 0], sizes = [8, 128], strides = [1, 1]} : vector<8x384xf32> to vector<8x128xf32>
    %73 = arith.mulf %72, %69 : vector<8x128xf32>
    %74 = arith.addf %71, %73 : vector<8x128xf32>
    %75 = vector.extract_strided_slice %67 {offsets = [0, 256], sizes = [8, 128], strides = [1, 1]} : vector<8x384xf32> to vector<8x128xf32>
    %76 = math.tanh %74 : vector<8x128xf32>
    %77 = arith.mulf %75, %76 : vector<8x128xf32>
    %c0_24 = arith.constant 0 : index
    %c2_25 = arith.constant 2 : index
    %c0_26 = arith.constant 0 : index
    %78 = vector.load %arg4[%c0_24, %c2_25, %c0_26] : memref<8x16x128xf32, #tpu.memory_space<vmem>>, vector<8x1x128xf32>
    %79 = vector.shape_cast %78 : vector<8x1x128xf32> to vector<8x128xf32>
    %80 = vector.shape_cast %77 : vector<8x128xf32> to vector<8x1x128xf32>
    tpu.vector_store %arg4[%c0_24, %c2_25, %c0_26], %80 {strides = array<i32>} : memref<8x16x128xf32, #tpu.memory_space<vmem>>, vector<8x1x128xf32>,
    %c3 = arith.constant 3 : index
    %c0_27 = arith.constant 0 : index
    %c0_28 = arith.constant 0 : index
    %81 = vector.load %arg2[%c3, %c0_27, %c0_28] : memref<16x8x512xbf16, #tpu.memory_space<vmem>>, vector<1x8x512xbf16>
    %82 = vector.shape_cast %81 : vector<1x8x512xbf16> to vector<8x512xbf16>
    %83 = arith.extf %82 : vector<8x512xbf16> to vector<8x512xf32>
    %84 = arith.truncf %77 : vector<8x128xf32> to vector<8x128xbf16>
    %cst_29 = arith.constant dense<0.000000e+00> : vector<8x512xf32>
    %85 = tpu.matmul %84, %3, %cst_29 {dimension_numbers = #tpu.dot_dimension_numbers<[1], [0], [0], [1], [0, 0, 1, 1], [], []>} : vector<8x128xbf16>, vector<128x512xbf16>, vector<8x512xf32> -> vector<8x512xf32>
    %86 = arith.addf %83, %85 : vector<8x512xf32>
    %87 = vector.extract_strided_slice %86 {offsets = [0, 0], sizes = [8, 384], strides = [1, 1]} : vector<8x512xf32> to vector<8x384xf32>
    %88 = arith.negf %87 : vector<8x384xf32>
    %89 = math.exp %88 : vector<8x384xf32>
    %cst_30 = arith.constant 1.000000e+00 : f32
    %90 = vector.broadcast %cst_30 : f32 to vector<8x384xf32>
    %91 = arith.addf %90, %89 : vector<8x384xf32>
    %92 = arith.divf %90, %91 : vector<8x384xf32>
    %93 = vector.extract_strided_slice %86 {offsets = [0, 384], sizes = [8, 128], strides = [1, 1]} : vector<8x512xf32> to vector<8x128xf32>
    %94 = math.tanh %93 : vector<8x128xf32>
    %95 = vector.extract_strided_slice %92 {offsets = [0, 128], sizes = [8, 128], strides = [1, 1]} : vector<8x384xf32> to vector<8x128xf32>
    %96 = arith.mulf %95, %74 : vector<8x128xf32>
    %97 = vector.extract_strided_slice %92 {offsets = [0, 0], sizes = [8, 128], strides = [1, 1]} : vector<8x384xf32> to vector<8x128xf32>
    %98 = arith.mulf %97, %94 : vector<8x128xf32>
    %99 = arith.addf %96, %98 : vector<8x128xf32>
    %100 = vector.extract_strided_slice %92 {offsets = [0, 256], sizes = [8, 128], strides = [1, 1]} : vector<8x384xf32> to vector<8x128xf32>
    %101 = math.tanh %99 : vector<8x128xf32>
    %102 = arith.mulf %100, %101 : vector<8x128xf32>
    %c0_31 = arith.constant 0 : index
    %c3_32 = arith.constant 3 : index
    %c0_33 = arith.constant 0 : index
    %103 = vector.load %arg4[%c0_31, %c3_32, %c0_33] : memref<8x16x128xf32, #tpu.memory_space<vmem>>, vector<8x1x128xf32>
    %104 = vector.shape_cast %103 : vector<8x1x128xf32> to vector<8x128xf32>
    %105 = vector.shape_cast %102 : vector<8x128xf32> to vector<8x1x128xf32>
    tpu.vector_store %arg4[%c0_31, %c3_32, %c0_33], %105 {strides = array<i32>} : memref<8x16x128xf32, #tpu.memory_space<vmem>>, vector<8x1x128xf32>,
    %c4 = arith.constant 4 : index
    %c0_34 = arith.constant 0 : index
    %c0_35 = arith.constant 0 : index
    %106 = vector.load %arg2[%c4, %c0_34, %c0_35] : memref<16x8x512xbf16, #tpu.memory_space<vmem>>, vector<1x8x512xbf16>
    %107 = vector.shape_cast %106 : vector<1x8x512xbf16> to vector<8x512xbf16>
    %108 = arith.extf %107 : vector<8x512xbf16> to vector<8x512xf32>
    %109 = arith.truncf %102 : vector<8x128xf32> to vector<8x128xbf16>
    %cst_36 = arith.constant dense<0.000000e+00> : vector<8x512xf32>
    %110 = tpu.matmul %109, %3, %cst_36 {dimension_numbers = #tpu.dot_dimension_numbers<[1], [0], [0], [1], [0, 0, 1, 1], [], []>} : vector<8x128xbf16>, vector<128x512xbf16>, vector<8x512xf32> -> vector<8x512xf32>
    %111 = arith.addf %108, %110 : vector<8x512xf32>
    %112 = vector.extract_strided_slice %111 {offsets = [0, 0], sizes = [8, 384], strides = [1, 1]} : vector<8x512xf32> to vector<8x384xf32>
    %113 = arith.negf %112 : vector<8x384xf32>
    %114 = math.exp %113 : vector<8x384xf32>
    %cst_37 = arith.constant 1.000000e+00 : f32
    %115 = vector.broadcast %cst_37 : f32 to vector<8x384xf32>
    %116 = arith.addf %115, %114 : vector<8x384xf32>
    %117 = arith.divf %115, %116 : vector<8x384xf32>
    %118 = vector.extract_strided_slice %111 {offsets = [0, 384], sizes = [8, 128], strides = [1, 1]} : vector<8x512xf32> to vector<8x128xf32>
    %119 = math.tanh %118 : vector<8x128xf32>
    %120 = vector.extract_strided_slice %117 {offsets = [0, 128], sizes = [8, 128], strides = [1, 1]} : vector<8x384xf32> to vector<8x128xf32>
    %121 = arith.mulf %120, %99 : vector<8x128xf32>
    %122 = vector.extract_strided_slice %117 {offsets = [0, 0], sizes = [8, 128], strides = [1, 1]} : vector<8x384xf32> to vector<8x128xf32>
    %123 = arith.mulf %122, %119 : vector<8x128xf32>
    %124 = arith.addf %121, %123 : vector<8x128xf32>
    %125 = vector.extract_strided_slice %117 {offsets = [0, 256], sizes = [8, 128], strides = [1, 1]} : vector<8x384xf32> to vector<8x128xf32>
    %126 = math.tanh %124 : vector<8x128xf32>
    %127 = arith.mulf %125, %126 : vector<8x128xf32>
    %c0_38 = arith.constant 0 : index
    %c4_39 = arith.constant 4 : index
    %c0_40 = arith.constant 0 : index
    %128 = vector.load %arg4[%c0_38, %c4_39, %c0_40] : memref<8x16x128xf32, #tpu.memory_space<vmem>>, vector<8x1x128xf32>
    %129 = vector.shape_cast %128 : vector<8x1x128xf32> to vector<8x128xf32>
    %130 = vector.shape_cast %127 : vector<8x128xf32> to vector<8x1x128xf32>
    tpu.vector_store %arg4[%c0_38, %c4_39, %c0_40], %130 {strides = array<i32>} : memref<8x16x128xf32, #tpu.memory_space<vmem>>, vector<8x1x128xf32>,
    %c5 = arith.constant 5 : index
    %c0_41 = arith.constant 0 : index
    %c0_42 = arith.constant 0 : index
    %131 = vector.load %arg2[%c5, %c0_41, %c0_42] : memref<16x8x512xbf16, #tpu.memory_space<vmem>>, vector<1x8x512xbf16>
    %132 = vector.shape_cast %131 : vector<1x8x512xbf16> to vector<8x512xbf16>
    %133 = arith.extf %132 : vector<8x512xbf16> to vector<8x512xf32>
    %134 = arith.truncf %127 : vector<8x128xf32> to vector<8x128xbf16>
    %cst_43 = arith.constant dense<0.000000e+00> : vector<8x512xf32>
    %135 = tpu.matmul %134, %3, %cst_43 {dimension_numbers = #tpu.dot_dimension_numbers<[1], [0], [0], [1], [0, 0, 1, 1], [], []>} : vector<8x128xbf16>, vector<128x512xbf16>, vector<8x512xf32> -> vector<8x512xf32>
    %136 = arith.addf %133, %135 : vector<8x512xf32>
    %137 = vector.extract_strided_slice %136 {offsets = [0, 0], sizes = [8, 384], strides = [1, 1]} : vector<8x512xf32> to vector<8x384xf32>
    %138 = arith.negf %137 : vector<8x384xf32>
    %139 = math.exp %138 : vector<8x384xf32>
    %cst_44 = arith.constant 1.000000e+00 : f32
    %140 = vector.broadcast %cst_44 : f32 to vector<8x384xf32>
    %141 = arith.addf %140, %139 : vector<8x384xf32>
    %142 = arith.divf %140, %141 : vector<8x384xf32>
    %143 = vector.extract_strided_slice %136 {offsets = [0, 384], sizes = [8, 128], strides = [1, 1]} : vector<8x512xf32> to vector<8x128xf32>
    %144 = math.tanh %143 : vector<8x128xf32>
    %145 = vector.extract_strided_slice %142 {offsets = [0, 128], sizes = [8, 128], strides = [1, 1]} : vector<8x384xf32> to vector<8x128xf32>
    %146 = arith.mulf %145, %124 : vector<8x128xf32>
    %147 = vector.extract_strided_slice %142 {offsets = [0, 0], sizes = [8, 128], strides = [1, 1]} : vector<8x384xf32> to vector<8x128xf32>
    %148 = arith.mulf %147, %144 : vector<8x128xf32>
    %149 = arith.addf %146, %148 : vector<8x128xf32>
    %150 = vector.extract_strided_slice %142 {offsets = [0, 256], sizes = [8, 128], strides = [1, 1]} : vector<8x384xf32> to vector<8x128xf32>
    %151 = math.tanh %149 : vector<8x128xf32>
    %152 = arith.mulf %150, %151 : vector<8x128xf32>
    %c0_45 = arith.constant 0 : index
    %c5_46 = arith.constant 5 : index
    %c0_47 = arith.constant 0 : index
    %153 = vector.load %arg4[%c0_45, %c5_46, %c0_47] : memref<8x16x128xf32, #tpu.memory_space<vmem>>, vector<8x1x128xf32>
    %154 = vector.shape_cast %153 : vector<8x1x128xf32> to vector<8x128xf32>
    %155 = vector.shape_cast %152 : vector<8x128xf32> to vector<8x1x128xf32>
    tpu.vector_store %arg4[%c0_45, %c5_46, %c0_47], %155 {strides = array<i32>} : memref<8x16x128xf32, #tpu.memory_space<vmem>>, vector<8x1x128xf32>,
    %c6 = arith.constant 6 : index
    %c0_48 = arith.constant 0 : index
    %c0_49 = arith.constant 0 : index
    %156 = vector.load %arg2[%c6, %c0_48, %c0_49] : memref<16x8x512xbf16, #tpu.memory_space<vmem>>, vector<1x8x512xbf16>
    %157 = vector.shape_cast %156 : vector<1x8x512xbf16> to vector<8x512xbf16>
    %158 = arith.extf %157 : vector<8x512xbf16> to vector<8x512xf32>
    %159 = arith.truncf %152 : vector<8x128xf32> to vector<8x128xbf16>
    %cst_50 = arith.constant dense<0.000000e+00> : vector<8x512xf32>
    %160 = tpu.matmul %159, %3, %cst_50 {dimension_numbers = #tpu.dot_dimension_numbers<[1], [0], [0], [1], [0, 0, 1, 1], [], []>} : vector<8x128xbf16>, vector<128x512xbf16>, vector<8x512xf32> -> vector<8x512xf32>
    %161 = arith.addf %158, %160 : vector<8x512xf32>
    %162 = vector.extract_strided_slice %161 {offsets = [0, 0], sizes = [8, 384], strides = [1, 1]} : vector<8x512xf32> to vector<8x384xf32>
    %163 = arith.negf %162 : vector<8x384xf32>
    %164 = math.exp %163 : vector<8x384xf32>
    %cst_51 = arith.constant 1.000000e+00 : f32
    %165 = vector.broadcast %cst_51 : f32 to vector<8x384xf32>
    %166 = arith.addf %165, %164 : vector<8x384xf32>
    %167 = arith.divf %165, %166 : vector<8x384xf32>
    %168 = vector.extract_strided_slice %161 {offsets = [0, 384], sizes = [8, 128], strides = [1, 1]} : vector<8x512xf32> to vector<8x128xf32>
    %169 = math.tanh %168 : vector<8x128xf32>
    %170 = vector.extract_strided_slice %167 {offsets = [0, 128], sizes = [8, 128], strides = [1, 1]} : vector<8x384xf32> to vector<8x128xf32>
    %171 = arith.mulf %170, %149 : vector<8x128xf32>
    %172 = vector.extract_strided_slice %167 {offsets = [0, 0], sizes = [8, 128], strides = [1, 1]} : vector<8x384xf32> to vector<8x128xf32>
    %173 = arith.mulf %172, %169 : vector<8x128xf32>
    %174 = arith.addf %171, %173 : vector<8x128xf32>
    %175 = vector.extract_strided_slice %167 {offsets = [0, 256], sizes = [8, 128], strides = [1, 1]} : vector<8x384xf32> to vector<8x128xf32>
    %176 = math.tanh %174 : vector<8x128xf32>
    %177 = arith.mulf %175, %176 : vector<8x128xf32>
    %c0_52 = arith.constant 0 : index
    %c6_53 = arith.constant 6 : index
    %c0_54 = arith.constant 0 : index
    %178 = vector.load %arg4[%c0_52, %c6_53, %c0_54] : memref<8x16x128xf32, #tpu.memory_space<vmem>>, vector<8x1x128xf32>
    %179 = vector.shape_cast %178 : vector<8x1x128xf32> to vector<8x128xf32>
    %180 = vector.shape_cast %177 : vector<8x128xf32> to vector<8x1x128xf32>
    tpu.vector_store %arg4[%c0_52, %c6_53, %c0_54], %180 {strides = array<i32>} : memref<8x16x128xf32, #tpu.memory_space<vmem>>, vector<8x1x128xf32>,
    %c7 = arith.constant 7 : index
    %c0_55 = arith.constant 0 : index
    %c0_56 = arith.constant 0 : index
    %181 = vector.load %arg2[%c7, %c0_55, %c0_56] : memref<16x8x512xbf16, #tpu.memory_space<vmem>>, vector<1x8x512xbf16>
    %182 = vector.shape_cast %181 : vector<1x8x512xbf16> to vector<8x512xbf16>
    %183 = arith.extf %182 : vector<8x512xbf16> to vector<8x512xf32>
    %184 = arith.truncf %177 : vector<8x128xf32> to vector<8x128xbf16>
    %cst_57 = arith.constant dense<0.000000e+00> : vector<8x512xf32>
    %185 = tpu.matmul %184, %3, %cst_57 {dimension_numbers = #tpu.dot_dimension_numbers<[1], [0], [0], [1], [0, 0, 1, 1], [], []>} : vector<8x128xbf16>, vector<128x512xbf16>, vector<8x512xf32> -> vector<8x512xf32>
    %186 = arith.addf %183, %185 : vector<8x512xf32>
    %187 = vector.extract_strided_slice %186 {offsets = [0, 0], sizes = [8, 384], strides = [1, 1]} : vector<8x512xf32> to vector<8x384xf32>
    %188 = arith.negf %187 : vector<8x384xf32>
    %189 = math.exp %188 : vector<8x384xf32>
    %cst_58 = arith.constant 1.000000e+00 : f32
    %190 = vector.broadcast %cst_58 : f32 to vector<8x384xf32>
    %191 = arith.addf %190, %189 : vector<8x384xf32>
    %192 = arith.divf %190, %191 : vector<8x384xf32>
    %193 = vector.extract_strided_slice %186 {offsets = [0, 384], sizes = [8, 128], strides = [1, 1]} : vector<8x512xf32> to vector<8x128xf32>
    %194 = math.tanh %193 : vector<8x128xf32>
    %195 = vector.extract_strided_slice %192 {offsets = [0, 128], sizes = [8, 128], strides = [1, 1]} : vector<8x384xf32> to vector<8x128xf32>
    %196 = arith.mulf %195, %174 : vector<8x128xf32>
    %197 = vector.extract_strided_slice %192 {offsets = [0, 0], sizes = [8, 128], strides = [1, 1]} : vector<8x384xf32> to vector<8x128xf32>
    %198 = arith.mulf %197, %194 : vector<8x128xf32>
    %199 = arith.addf %196, %198 : vector<8x128xf32>
    %200 = vector.extract_strided_slice %192 {offsets = [0, 256], sizes = [8, 128], strides = [1, 1]} : vector<8x384xf32> to vector<8x128xf32>
    %201 = math.tanh %199 : vector<8x128xf32>
    %202 = arith.mulf %200, %201 : vector<8x128xf32>
    %c0_59 = arith.constant 0 : index
    %c7_60 = arith.constant 7 : index
    %c0_61 = arith.constant 0 : index
    %203 = vector.load %arg4[%c0_59, %c7_60, %c0_61] : memref<8x16x128xf32, #tpu.memory_space<vmem>>, vector<8x1x128xf32>
    %204 = vector.shape_cast %203 : vector<8x1x128xf32> to vector<8x128xf32>
    %205 = vector.shape_cast %202 : vector<8x128xf32> to vector<8x1x128xf32>
    tpu.vector_store %arg4[%c0_59, %c7_60, %c0_61], %205 {strides = array<i32>} : memref<8x16x128xf32, #tpu.memory_space<vmem>>, vector<8x1x128xf32>,
    %c8 = arith.constant 8 : index
    %c0_62 = arith.constant 0 : index
    %c0_63 = arith.constant 0 : index
    %206 = vector.load %arg2[%c8, %c0_62, %c0_63] : memref<16x8x512xbf16, #tpu.memory_space<vmem>>, vector<1x8x512xbf16>
    %207 = vector.shape_cast %206 : vector<1x8x512xbf16> to vector<8x512xbf16>
    %208 = arith.extf %207 : vector<8x512xbf16> to vector<8x512xf32>
    %209 = arith.truncf %202 : vector<8x128xf32> to vector<8x128xbf16>
    %cst_64 = arith.constant dense<0.000000e+00> : vector<8x512xf32>
    %210 = tpu.matmul %209, %3, %cst_64 {dimension_numbers = #tpu.dot_dimension_numbers<[1], [0], [0], [1], [0, 0, 1, 1], [], []>} : vector<8x128xbf16>, vector<128x512xbf16>, vector<8x512xf32> -> vector<8x512xf32>
    %211 = arith.addf %208, %210 : vector<8x512xf32>
    %212 = vector.extract_strided_slice %211 {offsets = [0, 0], sizes = [8, 384], strides = [1, 1]} : vector<8x512xf32> to vector<8x384xf32>
    %213 = arith.negf %212 : vector<8x384xf32>
    %214 = math.exp %213 : vector<8x384xf32>
    %cst_65 = arith.constant 1.000000e+00 : f32
    %215 = vector.broadcast %cst_65 : f32 to vector<8x384xf32>
    %216 = arith.addf %215, %214 : vector<8x384xf32>
    %217 = arith.divf %215, %216 : vector<8x384xf32>
    %218 = vector.extract_strided_slice %211 {offsets = [0, 384], sizes = [8, 128], strides = [1, 1]} : vector<8x512xf32> to vector<8x128xf32>
    %219 = math.tanh %218 : vector<8x128xf32>
    %220 = vector.extract_strided_slice %217 {offsets = [0, 128], sizes = [8, 128], strides = [1, 1]} : vector<8x384xf32> to vector<8x128xf32>
    %221 = arith.mulf %220, %199 : vector<8x128xf32>
    %222 = vector.extract_strided_slice %217 {offsets = [0, 0], sizes = [8, 128], strides = [1, 1]} : vector<8x384xf32> to vector<8x128xf32>
    %223 = arith.mulf %222, %219 : vector<8x128xf32>
    %224 = arith.addf %221, %223 : vector<8x128xf32>
    %225 = vector.extract_strided_slice %217 {offsets = [0, 256], sizes = [8, 128], strides = [1, 1]} : vector<8x384xf32> to vector<8x128xf32>
    %226 = math.tanh %224 : vector<8x128xf32>
    %227 = arith.mulf %225, %226 : vector<8x128xf32>
    %c0_66 = arith.constant 0 : index
    %c8_67 = arith.constant 8 : index
    %c0_68 = arith.constant 0 : index
    %228 = vector.load %arg4[%c0_66, %c8_67, %c0_68] : memref<8x16x128xf32, #tpu.memory_space<vmem>>, vector<8x1x128xf32>
    %229 = vector.shape_cast %228 : vector<8x1x128xf32> to vector<8x128xf32>
    %230 = vector.shape_cast %227 : vector<8x128xf32> to vector<8x1x128xf32>
    tpu.vector_store %arg4[%c0_66, %c8_67, %c0_68], %230 {strides = array<i32>} : memref<8x16x128xf32, #tpu.memory_space<vmem>>, vector<8x1x128xf32>,
    %c9 = arith.constant 9 : index
    %c0_69 = arith.constant 0 : index
    %c0_70 = arith.constant 0 : index
    %231 = vector.load %arg2[%c9, %c0_69, %c0_70] : memref<16x8x512xbf16, #tpu.memory_space<vmem>>, vector<1x8x512xbf16>
    %232 = vector.shape_cast %231 : vector<1x8x512xbf16> to vector<8x512xbf16>
    %233 = arith.extf %232 : vector<8x512xbf16> to vector<8x512xf32>
    %234 = arith.truncf %227 : vector<8x128xf32> to vector<8x128xbf16>
    %cst_71 = arith.constant dense<0.000000e+00> : vector<8x512xf32>
    %235 = tpu.matmul %234, %3, %cst_71 {dimension_numbers = #tpu.dot_dimension_numbers<[1], [0], [0], [1], [0, 0, 1, 1], [], []>} : vector<8x128xbf16>, vector<128x512xbf16>, vector<8x512xf32> -> vector<8x512xf32>
    %236 = arith.addf %233, %235 : vector<8x512xf32>
    %237 = vector.extract_strided_slice %236 {offsets = [0, 0], sizes = [8, 384], strides = [1, 1]} : vector<8x512xf32> to vector<8x384xf32>
    %238 = arith.negf %237 : vector<8x384xf32>
    %239 = math.exp %238 : vector<8x384xf32>
    %cst_72 = arith.constant 1.000000e+00 : f32
    %240 = vector.broadcast %cst_72 : f32 to vector<8x384xf32>
    %241 = arith.addf %240, %239 : vector<8x384xf32>
    %242 = arith.divf %240, %241 : vector<8x384xf32>
    %243 = vector.extract_strided_slice %236 {offsets = [0, 384], sizes = [8, 128], strides = [1, 1]} : vector<8x512xf32> to vector<8x128xf32>
    %244 = math.tanh %243 : vector<8x128xf32>
    %245 = vector.extract_strided_slice %242 {offsets = [0, 128], sizes = [8, 128], strides = [1, 1]} : vector<8x384xf32> to vector<8x128xf32>
    %246 = arith.mulf %245, %224 : vector<8x128xf32>
    %247 = vector.extract_strided_slice %242 {offsets = [0, 0], sizes = [8, 128], strides = [1, 1]} : vector<8x384xf32> to vector<8x128xf32>
    %248 = arith.mulf %247, %244 : vector<8x128xf32>
    %249 = arith.addf %246, %248 : vector<8x128xf32>
    %250 = vector.extract_strided_slice %242 {offsets = [0, 256], sizes = [8, 128], strides = [1, 1]} : vector<8x384xf32> to vector<8x128xf32>
    %251 = math.tanh %249 : vector<8x128xf32>
    %252 = arith.mulf %250, %251 : vector<8x128xf32>
    %c0_73 = arith.constant 0 : index
    %c9_74 = arith.constant 9 : index
    %c0_75 = arith.constant 0 : index
    %253 = vector.load %arg4[%c0_73, %c9_74, %c0_75] : memref<8x16x128xf32, #tpu.memory_space<vmem>>, vector<8x1x128xf32>
    %254 = vector.shape_cast %253 : vector<8x1x128xf32> to vector<8x128xf32>
    %255 = vector.shape_cast %252 : vector<8x128xf32> to vector<8x1x128xf32>
    tpu.vector_store %arg4[%c0_73, %c9_74, %c0_75], %255 {strides = array<i32>} : memref<8x16x128xf32, #tpu.memory_space<vmem>>, vector<8x1x128xf32>,
    %c10 = arith.constant 10 : index
    %c0_76 = arith.constant 0 : index
    %c0_77 = arith.constant 0 : index
    %256 = vector.load %arg2[%c10, %c0_76, %c0_77] : memref<16x8x512xbf16, #tpu.memory_space<vmem>>, vector<1x8x512xbf16>
    %257 = vector.shape_cast %256 : vector<1x8x512xbf16> to vector<8x512xbf16>
    %258 = arith.extf %257 : vector<8x512xbf16> to vector<8x512xf32>
    %259 = arith.truncf %252 : vector<8x128xf32> to vector<8x128xbf16>
    %cst_78 = arith.constant dense<0.000000e+00> : vector<8x512xf32>
    %260 = tpu.matmul %259, %3, %cst_78 {dimension_numbers = #tpu.dot_dimension_numbers<[1], [0], [0], [1], [0, 0, 1, 1], [], []>} : vector<8x128xbf16>, vector<128x512xbf16>, vector<8x512xf32> -> vector<8x512xf32>
    %261 = arith.addf %258, %260 : vector<8x512xf32>
    %262 = vector.extract_strided_slice %261 {offsets = [0, 0], sizes = [8, 384], strides = [1, 1]} : vector<8x512xf32> to vector<8x384xf32>
    %263 = arith.negf %262 : vector<8x384xf32>
    %264 = math.exp %263 : vector<8x384xf32>
    %cst_79 = arith.constant 1.000000e+00 : f32
    %265 = vector.broadcast %cst_79 : f32 to vector<8x384xf32>
    %266 = arith.addf %265, %264 : vector<8x384xf32>
    %267 = arith.divf %265, %266 : vector<8x384xf32>
    %268 = vector.extract_strided_slice %261 {offsets = [0, 384], sizes = [8, 128], strides = [1, 1]} : vector<8x512xf32> to vector<8x128xf32>
    %269 = math.tanh %268 : vector<8x128xf32>
    %270 = vector.extract_strided_slice %267 {offsets = [0, 128], sizes = [8, 128], strides = [1, 1]} : vector<8x384xf32> to vector<8x128xf32>
    %271 = arith.mulf %270, %249 : vector<8x128xf32>
    %272 = vector.extract_strided_slice %267 {offsets = [0, 0], sizes = [8, 128], strides = [1, 1]} : vector<8x384xf32> to vector<8x128xf32>
    %273 = arith.mulf %272, %269 : vector<8x128xf32>
    %274 = arith.addf %271, %273 : vector<8x128xf32>
    %275 = vector.extract_strided_slice %267 {offsets = [0, 256], sizes = [8, 128], strides = [1, 1]} : vector<8x384xf32> to vector<8x128xf32>
    %276 = math.tanh %274 : vector<8x128xf32>
    %277 = arith.mulf %275, %276 : vector<8x128xf32>
    %c0_80 = arith.constant 0 : index
    %c10_81 = arith.constant 10 : index
    %c0_82 = arith.constant 0 : index
    %278 = vector.load %arg4[%c0_80, %c10_81, %c0_82] : memref<8x16x128xf32, #tpu.memory_space<vmem>>, vector<8x1x128xf32>
    %279 = vector.shape_cast %278 : vector<8x1x128xf32> to vector<8x128xf32>
    %280 = vector.shape_cast %277 : vector<8x128xf32> to vector<8x1x128xf32>
    tpu.vector_store %arg4[%c0_80, %c10_81, %c0_82], %280 {strides = array<i32>} : memref<8x16x128xf32, #tpu.memory_space<vmem>>, vector<8x1x128xf32>,
    %c11 = arith.constant 11 : index
    %c0_83 = arith.constant 0 : index
    %c0_84 = arith.constant 0 : index
    %281 = vector.load %arg2[%c11, %c0_83, %c0_84] : memref<16x8x512xbf16, #tpu.memory_space<vmem>>, vector<1x8x512xbf16>
    %282 = vector.shape_cast %281 : vector<1x8x512xbf16> to vector<8x512xbf16>
    %283 = arith.extf %282 : vector<8x512xbf16> to vector<8x512xf32>
    %284 = arith.truncf %277 : vector<8x128xf32> to vector<8x128xbf16>
    %cst_85 = arith.constant dense<0.000000e+00> : vector<8x512xf32>
    %285 = tpu.matmul %284, %3, %cst_85 {dimension_numbers = #tpu.dot_dimension_numbers<[1], [0], [0], [1], [0, 0, 1, 1], [], []>} : vector<8x128xbf16>, vector<128x512xbf16>, vector<8x512xf32> -> vector<8x512xf32>
    %286 = arith.addf %283, %285 : vector<8x512xf32>
    %287 = vector.extract_strided_slice %286 {offsets = [0, 0], sizes = [8, 384], strides = [1, 1]} : vector<8x512xf32> to vector<8x384xf32>
    %288 = arith.negf %287 : vector<8x384xf32>
    %289 = math.exp %288 : vector<8x384xf32>
    %cst_86 = arith.constant 1.000000e+00 : f32
    %290 = vector.broadcast %cst_86 : f32 to vector<8x384xf32>
    %291 = arith.addf %290, %289 : vector<8x384xf32>
    %292 = arith.divf %290, %291 : vector<8x384xf32>
    %293 = vector.extract_strided_slice %286 {offsets = [0, 384], sizes = [8, 128], strides = [1, 1]} : vector<8x512xf32> to vector<8x128xf32>
    %294 = math.tanh %293 : vector<8x128xf32>
    %295 = vector.extract_strided_slice %292 {offsets = [0, 128], sizes = [8, 128], strides = [1, 1]} : vector<8x384xf32> to vector<8x128xf32>
    %296 = arith.mulf %295, %274 : vector<8x128xf32>
    %297 = vector.extract_strided_slice %292 {offsets = [0, 0], sizes = [8, 128], strides = [1, 1]} : vector<8x384xf32> to vector<8x128xf32>
    %298 = arith.mulf %297, %294 : vector<8x128xf32>
    %299 = arith.addf %296, %298 : vector<8x128xf32>
    %300 = vector.extract_strided_slice %292 {offsets = [0, 256], sizes = [8, 128], strides = [1, 1]} : vector<8x384xf32> to vector<8x128xf32>
    %301 = math.tanh %299 : vector<8x128xf32>
    %302 = arith.mulf %300, %301 : vector<8x128xf32>
    %c0_87 = arith.constant 0 : index
    %c11_88 = arith.constant 11 : index
    %c0_89 = arith.constant 0 : index
    %303 = vector.load %arg4[%c0_87, %c11_88, %c0_89] : memref<8x16x128xf32, #tpu.memory_space<vmem>>, vector<8x1x128xf32>
    %304 = vector.shape_cast %303 : vector<8x1x128xf32> to vector<8x128xf32>
    %305 = vector.shape_cast %302 : vector<8x128xf32> to vector<8x1x128xf32>
    tpu.vector_store %arg4[%c0_87, %c11_88, %c0_89], %305 {strides = array<i32>} : memref<8x16x128xf32, #tpu.memory_space<vmem>>, vector<8x1x128xf32>,
    %c12 = arith.constant 12 : index
    %c0_90 = arith.constant 0 : index
    %c0_91 = arith.constant 0 : index
    %306 = vector.load %arg2[%c12, %c0_90, %c0_91] : memref<16x8x512xbf16, #tpu.memory_space<vmem>>, vector<1x8x512xbf16>
    %307 = vector.shape_cast %306 : vector<1x8x512xbf16> to vector<8x512xbf16>
    %308 = arith.extf %307 : vector<8x512xbf16> to vector<8x512xf32>
    %309 = arith.truncf %302 : vector<8x128xf32> to vector<8x128xbf16>
    %cst_92 = arith.constant dense<0.000000e+00> : vector<8x512xf32>
    %310 = tpu.matmul %309, %3, %cst_92 {dimension_numbers = #tpu.dot_dimension_numbers<[1], [0], [0], [1], [0, 0, 1, 1], [], []>} : vector<8x128xbf16>, vector<128x512xbf16>, vector<8x512xf32> -> vector<8x512xf32>
    %311 = arith.addf %308, %310 : vector<8x512xf32>
    %312 = vector.extract_strided_slice %311 {offsets = [0, 0], sizes = [8, 384], strides = [1, 1]} : vector<8x512xf32> to vector<8x384xf32>
    %313 = arith.negf %312 : vector<8x384xf32>
    %314 = math.exp %313 : vector<8x384xf32>
    %cst_93 = arith.constant 1.000000e+00 : f32
    %315 = vector.broadcast %cst_93 : f32 to vector<8x384xf32>
    %316 = arith.addf %315, %314 : vector<8x384xf32>
    %317 = arith.divf %315, %316 : vector<8x384xf32>
    %318 = vector.extract_strided_slice %311 {offsets = [0, 384], sizes = [8, 128], strides = [1, 1]} : vector<8x512xf32> to vector<8x128xf32>
    %319 = math.tanh %318 : vector<8x128xf32>
    %320 = vector.extract_strided_slice %317 {offsets = [0, 128], sizes = [8, 128], strides = [1, 1]} : vector<8x384xf32> to vector<8x128xf32>
    %321 = arith.mulf %320, %299 : vector<8x128xf32>
    %322 = vector.extract_strided_slice %317 {offsets = [0, 0], sizes = [8, 128], strides = [1, 1]} : vector<8x384xf32> to vector<8x128xf32>
    %323 = arith.mulf %322, %319 : vector<8x128xf32>
    %324 = arith.addf %321, %323 : vector<8x128xf32>
    %325 = vector.extract_strided_slice %317 {offsets = [0, 256], sizes = [8, 128], strides = [1, 1]} : vector<8x384xf32> to vector<8x128xf32>
    %326 = math.tanh %324 : vector<8x128xf32>
    %327 = arith.mulf %325, %326 : vector<8x128xf32>
    %c0_94 = arith.constant 0 : index
    %c12_95 = arith.constant 12 : index
    %c0_96 = arith.constant 0 : index
    %328 = vector.load %arg4[%c0_94, %c12_95, %c0_96] : memref<8x16x128xf32, #tpu.memory_space<vmem>>, vector<8x1x128xf32>
    %329 = vector.shape_cast %328 : vector<8x1x128xf32> to vector<8x128xf32>
    %330 = vector.shape_cast %327 : vector<8x128xf32> to vector<8x1x128xf32>
    tpu.vector_store %arg4[%c0_94, %c12_95, %c0_96], %330 {strides = array<i32>} : memref<8x16x128xf32, #tpu.memory_space<vmem>>, vector<8x1x128xf32>,
    %c13 = arith.constant 13 : index
    %c0_97 = arith.constant 0 : index
    %c0_98 = arith.constant 0 : index
    %331 = vector.load %arg2[%c13, %c0_97, %c0_98] : memref<16x8x512xbf16, #tpu.memory_space<vmem>>, vector<1x8x512xbf16>
    %332 = vector.shape_cast %331 : vector<1x8x512xbf16> to vector<8x512xbf16>
    %333 = arith.extf %332 : vector<8x512xbf16> to vector<8x512xf32>
    %334 = arith.truncf %327 : vector<8x128xf32> to vector<8x128xbf16>
    %cst_99 = arith.constant dense<0.000000e+00> : vector<8x512xf32>
    %335 = tpu.matmul %334, %3, %cst_99 {dimension_numbers = #tpu.dot_dimension_numbers<[1], [0], [0], [1], [0, 0, 1, 1], [], []>} : vector<8x128xbf16>, vector<128x512xbf16>, vector<8x512xf32> -> vector<8x512xf32>
    %336 = arith.addf %333, %335 : vector<8x512xf32>
    %337 = vector.extract_strided_slice %336 {offsets = [0, 0], sizes = [8, 384], strides = [1, 1]} : vector<8x512xf32> to vector<8x384xf32>
    %338 = arith.negf %337 : vector<8x384xf32>
    %339 = math.exp %338 : vector<8x384xf32>
    %cst_100 = arith.constant 1.000000e+00 : f32
    %340 = vector.broadcast %cst_100 : f32 to vector<8x384xf32>
    %341 = arith.addf %340, %339 : vector<8x384xf32>
    %342 = arith.divf %340, %341 : vector<8x384xf32>
    %343 = vector.extract_strided_slice %336 {offsets = [0, 384], sizes = [8, 128], strides = [1, 1]} : vector<8x512xf32> to vector<8x128xf32>
    %344 = math.tanh %343 : vector<8x128xf32>
    %345 = vector.extract_strided_slice %342 {offsets = [0, 128], sizes = [8, 128], strides = [1, 1]} : vector<8x384xf32> to vector<8x128xf32>
    %346 = arith.mulf %345, %324 : vector<8x128xf32>
    %347 = vector.extract_strided_slice %342 {offsets = [0, 0], sizes = [8, 128], strides = [1, 1]} : vector<8x384xf32> to vector<8x128xf32>
    %348 = arith.mulf %347, %344 : vector<8x128xf32>
    %349 = arith.addf %346, %348 : vector<8x128xf32>
    %350 = vector.extract_strided_slice %342 {offsets = [0, 256], sizes = [8, 128], strides = [1, 1]} : vector<8x384xf32> to vector<8x128xf32>
    %351 = math.tanh %349 : vector<8x128xf32>
    %352 = arith.mulf %350, %351 : vector<8x128xf32>
    %c0_101 = arith.constant 0 : index
    %c13_102 = arith.constant 13 : index
    %c0_103 = arith.constant 0 : index
    %353 = vector.load %arg4[%c0_101, %c13_102, %c0_103] : memref<8x16x128xf32, #tpu.memory_space<vmem>>, vector<8x1x128xf32>
    %354 = vector.shape_cast %353 : vector<8x1x128xf32> to vector<8x128xf32>
    %355 = vector.shape_cast %352 : vector<8x128xf32> to vector<8x1x128xf32>
    tpu.vector_store %arg4[%c0_101, %c13_102, %c0_103], %355 {strides = array<i32>} : memref<8x16x128xf32, #tpu.memory_space<vmem>>, vector<8x1x128xf32>,
    %c14 = arith.constant 14 : index
    %c0_104 = arith.constant 0 : index
    %c0_105 = arith.constant 0 : index
    %356 = vector.load %arg2[%c14, %c0_104, %c0_105] : memref<16x8x512xbf16, #tpu.memory_space<vmem>>, vector<1x8x512xbf16>
    %357 = vector.shape_cast %356 : vector<1x8x512xbf16> to vector<8x512xbf16>
    %358 = arith.extf %357 : vector<8x512xbf16> to vector<8x512xf32>
    %359 = arith.truncf %352 : vector<8x128xf32> to vector<8x128xbf16>
    %cst_106 = arith.constant dense<0.000000e+00> : vector<8x512xf32>
    %360 = tpu.matmul %359, %3, %cst_106 {dimension_numbers = #tpu.dot_dimension_numbers<[1], [0], [0], [1], [0, 0, 1, 1], [], []>} : vector<8x128xbf16>, vector<128x512xbf16>, vector<8x512xf32> -> vector<8x512xf32>
    %361 = arith.addf %358, %360 : vector<8x512xf32>
    %362 = vector.extract_strided_slice %361 {offsets = [0, 0], sizes = [8, 384], strides = [1, 1]} : vector<8x512xf32> to vector<8x384xf32>
    %363 = arith.negf %362 : vector<8x384xf32>
    %364 = math.exp %363 : vector<8x384xf32>
    %cst_107 = arith.constant 1.000000e+00 : f32
    %365 = vector.broadcast %cst_107 : f32 to vector<8x384xf32>
    %366 = arith.addf %365, %364 : vector<8x384xf32>
    %367 = arith.divf %365, %366 : vector<8x384xf32>
    %368 = vector.extract_strided_slice %361 {offsets = [0, 384], sizes = [8, 128], strides = [1, 1]} : vector<8x512xf32> to vector<8x128xf32>
    %369 = math.tanh %368 : vector<8x128xf32>
    %370 = vector.extract_strided_slice %367 {offsets = [0, 128], sizes = [8, 128], strides = [1, 1]} : vector<8x384xf32> to vector<8x128xf32>
    %371 = arith.mulf %370, %349 : vector<8x128xf32>
    %372 = vector.extract_strided_slice %367 {offsets = [0, 0], sizes = [8, 128], strides = [1, 1]} : vector<8x384xf32> to vector<8x128xf32>
    %373 = arith.mulf %372, %369 : vector<8x128xf32>
    %374 = arith.addf %371, %373 : vector<8x128xf32>
    %375 = vector.extract_strided_slice %367 {offsets = [0, 256], sizes = [8, 128], strides = [1, 1]} : vector<8x384xf32> to vector<8x128xf32>
    %376 = math.tanh %374 : vector<8x128xf32>
    %377 = arith.mulf %375, %376 : vector<8x128xf32>
    %c0_108 = arith.constant 0 : index
    %c14_109 = arith.constant 14 : index
    %c0_110 = arith.constant 0 : index
    %378 = vector.load %arg4[%c0_108, %c14_109, %c0_110] : memref<8x16x128xf32, #tpu.memory_space<vmem>>, vector<8x1x128xf32>
    %379 = vector.shape_cast %378 : vector<8x1x128xf32> to vector<8x128xf32>
    %380 = vector.shape_cast %377 : vector<8x128xf32> to vector<8x1x128xf32>
    tpu.vector_store %arg4[%c0_108, %c14_109, %c0_110], %380 {strides = array<i32>} : memref<8x16x128xf32, #tpu.memory_space<vmem>>, vector<8x1x128xf32>,
    %c15 = arith.constant 15 : index
    %c0_111 = arith.constant 0 : index
    %c0_112 = arith.constant 0 : index
    %381 = vector.load %arg2[%c15, %c0_111, %c0_112] : memref<16x8x512xbf16, #tpu.memory_space<vmem>>, vector<1x8x512xbf16>
    %382 = vector.shape_cast %381 : vector<1x8x512xbf16> to vector<8x512xbf16>
    %383 = arith.extf %382 : vector<8x512xbf16> to vector<8x512xf32>
    %384 = arith.truncf %377 : vector<8x128xf32> to vector<8x128xbf16>
    %cst_113 = arith.constant dense<0.000000e+00> : vector<8x512xf32>
    %385 = tpu.matmul %384, %3, %cst_113 {dimension_numbers = #tpu.dot_dimension_numbers<[1], [0], [0], [1], [0, 0, 1, 1], [], []>} : vector<8x128xbf16>, vector<128x512xbf16>, vector<8x512xf32> -> vector<8x512xf32>
    %386 = arith.addf %383, %385 : vector<8x512xf32>
    %387 = vector.extract_strided_slice %386 {offsets = [0, 0], sizes = [8, 384], strides = [1, 1]} : vector<8x512xf32> to vector<8x384xf32>
    %388 = arith.negf %387 : vector<8x384xf32>
    %389 = math.exp %388 : vector<8x384xf32>
    %cst_114 = arith.constant 1.000000e+00 : f32
    %390 = vector.broadcast %cst_114 : f32 to vector<8x384xf32>
    %391 = arith.addf %390, %389 : vector<8x384xf32>
    %392 = arith.divf %390, %391 : vector<8x384xf32>
    %393 = vector.extract_strided_slice %386 {offsets = [0, 384], sizes = [8, 128], strides = [1, 1]} : vector<8x512xf32> to vector<8x128xf32>
    %394 = math.tanh %393 : vector<8x128xf32>
    %395 = vector.extract_strided_slice %392 {offsets = [0, 128], sizes = [8, 128], strides = [1, 1]} : vector<8x384xf32> to vector<8x128xf32>
    %396 = arith.mulf %395, %374 : vector<8x128xf32>
    %397 = vector.extract_strided_slice %392 {offsets = [0, 0], sizes = [8, 128], strides = [1, 1]} : vector<8x384xf32> to vector<8x128xf32>
    %398 = arith.mulf %397, %394 : vector<8x128xf32>
    %399 = arith.addf %396, %398 : vector<8x128xf32>
    %400 = vector.extract_strided_slice %392 {offsets = [0, 256], sizes = [8, 128], strides = [1, 1]} : vector<8x384xf32> to vector<8x128xf32>
    %401 = math.tanh %399 : vector<8x128xf32>
    %402 = arith.mulf %400, %401 : vector<8x128xf32>
    %c0_115 = arith.constant 0 : index
    %c15_116 = arith.constant 15 : index
    %c0_117 = arith.constant 0 : index
    %403 = vector.load %arg4[%c0_115, %c15_116, %c0_117] : memref<8x16x128xf32, #tpu.memory_space<vmem>>, vector<8x1x128xf32>
    %404 = vector.shape_cast %403 : vector<8x1x128xf32> to vector<8x128xf32>
    %405 = vector.shape_cast %402 : vector<8x128xf32> to vector<8x1x128xf32>
    tpu.vector_store %arg4[%c0_115, %c15_116, %c0_117], %405 {strides = array<i32>} : memref<8x16x128xf32, #tpu.memory_space<vmem>>, vector<8x1x128xf32>,
    %c0_118 = arith.constant 0 : index
    %c0_119 = arith.constant 0 : index
    %406 = vector.load %arg5[%c0_118, %c0_119] : memref<8x128xf32, #tpu.memory_space<vmem>>, vector<8x128xf32>
    tpu.vector_store %arg5[%c0_118, %c0_119], %402 {strides = array<i32>} : memref<8x128xf32, #tpu.memory_space<vmem>>, vector<8x128xf32>,
    %c0_120 = arith.constant 0 : index
    %c0_121 = arith.constant 0 : index
    %407 = vector.load %arg6[%c0_120, %c0_121] : memref<8x128xf32, #tpu.memory_space<vmem>>, vector<8x128xf32>
    tpu.vector_store %arg6[%c0_120, %c0_121], %399 {strides = array<i32>} : memref<8x128xf32, #tpu.memory_space<vmem>>, vector<8x128xf32>,
    return
  }
  func.func @transform_0(%arg0: i32, %arg1: i32) -> (i32, i32, i32) {
    %c0_i32 = arith.constant 0 : i32
    %c0_i32_0 = arith.constant 0 : i32
    return %arg1, %arg0, %c0_i32 : i32, i32, i32
  }
  func.func @transform_1(%arg0: i32, %arg1: i32) -> (i32, i32) {
    %c0_i32 = arith.constant 0 : i32
    %c0_i32_0 = arith.constant 0 : i32
    %c0_i32_1 = arith.constant 0 : i32
    return %c0_i32, %c0_i32_0 : i32, i32
  }
  func.func @transform_2(%arg0: i32, %arg1: i32) -> (i32, i32, i32) {
    %c0_i32 = arith.constant 0 : i32
    %c0_i32_0 = arith.constant 0 : i32
    return %arg0, %arg1, %c0_i32 : i32, i32, i32
  }
}

</mosaic_0001>

<llo_original>
// kernel: tpu_custom_call.1
$region0: #{tpu_custom_call.1}
  #allocation0 [shape = 'u32[]', space=smem, size = 0x4, offset = 0x4, fixed_abs, tag = 'smem constant byte address 0x4 - core index']
  #allocation1 [shape = 'u32[72,128]{1,0:T(1,128)}', space=vmem, size = 0x9000, scoped, tag = 'internal scratch']
  #allocation2 [shape = 'f32[8,128]{1,0:T(8,128)}', space=vmem, size = 0x1000, scoped, tag = 'scratch operand']
  #allocation3 [shape = 'f32[8,128]{1,0:T(8,128)}', space=vmem, size = 0x1000, scoped, tag = 'scratch operand']
  %s0 = inlined_call_operand.hbm [shape: bf16[16,8,512], index: 0, kind: input, shape index: {}]
  %s1 = inlined_call_operand.hbm [shape: bf16[128,512], index: 1, kind: input, shape index: {}]
  %s2 = inlined_call_operand.hbm [shape: f32[8,16,128], index: 2, kind: output, shape index: {}]
  %s3 = sld [smem:[#allocation0]]
  $region30: #{tpu_custom_call.1} parent=0
    _
  %s5 = ssub.s32 1, %s3
  %s6 = scalar_select 0, %s5, %s3
  $region1: #{tpu_custom_call.1} parent=0
    #allocation4 [shape = 'u8[131072]{0}', space=vmem, size = 0x20000, scoped, tag = 'input window, operand 0, single buffered']
    #allocation5 [shape = 's32[1]{0}', space=sflag, size = 0x4, scoped, tag = 'scoped memory for tpu_custom_call.1']
    #allocation6 [shape = 's32[1]{0}', space=sflag, size = 0x4, scoped, tag = 'scoped memory for tpu_custom_call.1']
    #allocation7 [shape = 'u8[131072]{0}', space=vmem, size = 0x20000, scoped, tag = 'input window, operand 1, single buffered']
    #allocation8 [shape = 's32[1]{0}', space=sflag, size = 0x4, scoped, tag = 'scoped memory for tpu_custom_call.1']
    #allocation9 [shape = 'u8[65536]{0}', space=vmem, size = 0x10000, scoped, tag = 'output window, operand 0, single buffered']
    %7 = vsyncpa [#allocation5], 0
    %8 = vsyncpa [#allocation8], 0
    %9 = vsyncpa [#allocation6], 0
    // Predicated region
    $region2: #{tpu_custom_call.1} parent=1 // pred_check
      _
    $region3: #{tpu_custom_call.1} parent=1 // pred_check_branch
      %11 = sbr.rel (0) target = $region5
    $region4: #{tpu_custom_call.1} parent=1 // pred_region
      %13 = vsyncadd [#allocation5], 0
      %s14 = sshll.u32 %s0, 4
      %s15 = int_to_ptr.hbm [resolvable:$true] %s14
      %s16 = sshll.u32 [#allocation4], 4
      %s17 = int_to_ptr.vmem [resolvable:$true] %s16
      %22 = dma.hbm_to_vmem [thread:$0]  %s15, 4096, %s17, [#allocation5], 256, 256, 16
    $region5: #{tpu_custom_call.1} parent=1 // pred_fallthru
      _
    // Predicated region
    $region6: #{tpu_custom_call.1} parent=1 // pred_check
      _
    $region7: #{tpu_custom_call.1} parent=1 // pred_check_branch
      %24 = sbr.rel (0) target = $region9
    $region8: #{tpu_custom_call.1} parent=1 // pred_region
      %26 = vsyncadd [#allocation8], 0
      %s27 = sshll.u32 %s1, 4
      %s28 = int_to_ptr.hbm [resolvable:$true] %s27
      %s29 = sshll.u32 [#allocation7], 4
      %s30 = int_to_ptr.vmem [resolvable:$true] %s29
      %35 = dma.hbm_to_vmem [thread:$0]  %s28, 4096, %s30, [#allocation8], 256, 256, 16
    $region9: #{tpu_custom_call.1} parent=1 // pred_fallthru
      _
    // Predicated region
    $region10: #{tpu_custom_call.1} parent=1 // pred_check
      _
    $region11: #{tpu_custom_call.1} parent=1 // pred_check_branch
      %37 = sbr.rel (0) target = $region13
    $region12: #{tpu_custom_call.1} parent=1 // pred_region
      %39 = dma.done [#allocation5], 4096
    $region13: #{tpu_custom_call.1} parent=1 // pred_fallthru
      _
    // Predicated region
    $region14: #{tpu_custom_call.1} parent=1 // pred_check
      _
    $region15: #{tpu_custom_call.1} parent=1 // pred_check_branch
      %41 = sbr.rel (0) target = $region17
    $region16: #{tpu_custom_call.1} parent=1 // pred_region
      %43 = dma.done [#allocation8], 4096
    $region17: #{tpu_custom_call.1} parent=1 // pred_fallthru
      _
    %p44 = scmp.eq.s32.totalorder 0, 0
    // Predicated region
    $region18: #{tpu_custom_call.1} parent=1 // pred_check
      %p45 = pneg %p44
    $region19: #{tpu_custom_call.1} parent=1 // pred_check_branch
      %47 = sbr.rel (%p45) target = $region21
    $region20: #{tpu_custom_call.1} parent=1 // pred_region
      %48 = vst [vmem:[#allocation2] sm:$0xff] 0.0
      %49 = vst [vmem:[#allocation3] sm:$0xff] 0.0
    $region21: #{tpu_custom_call.1} parent=1 // pred_fallthru
      _
    %v50 = vld [vmem:[#allocation7] sm:$0xff]
    %v51 = vld [vmem:[#allocation7 + $0x8] sm:$0xff]
    %v52 = vld [vmem:[#allocation7 + $0x10] sm:$0xff]
    %v53 = vld [vmem:[#allocation7 + $0x18] sm:$0xff]
    %v54 = vld [vmem:[#allocation7 + $0x20] sm:$0xff]
    %v55 = vld [vmem:[#allocation7 + $0x28] sm:$0xff]
    %v56 = vld [vmem:[#allocation7 + $0x30] sm:$0xff]
    %v57 = vld [vmem:[#allocation7 + $0x38] sm:$0xff]
    %v58 = vld [vmem:[#allocation7 + $0x40] sm:$0xff]
    %v59 = vld [vmem:[#allocation7 + $0x48] sm:$0xff]
    %v60 = vld [vmem:[#allocation7 + $0x50] sm:$0xff]
    %v61 = vld [vmem:[#allocation7 + $0x58] sm:$0xff]
    %v62 = vld [vmem:[#allocation7 + $0x60] sm:$0xff]
    %v63 = vld [vmem:[#allocation7 + $0x68] sm:$0xff]
    %v64 = vld [vmem:[#allocation7 + $0x70] sm:$0xff]
    %v65 = vld [vmem:[#allocation7 + $0x78] sm:$0xff]
    %v66 = vld [vmem:[#allocation7 + $0x80] sm:$0xff]
    %v67 = vld [vmem:[#allocation7 + $0x88] sm:$0xff]
    %v68 = vld [vmem:[#allocation7 + $0x90] sm:$0xff]
    %v69 = vld [vmem:[#allocation7 + $0x98] sm:$0xff]
    %v70 = vld [vmem:[#allocation7 + $0xa0] sm:$0xff]
    %v71 = vld [vmem:[#allocation7 + $0xa8] sm:$0xff]
    %v72 = vld [vmem:[#allocation7 + $0xb0] sm:$0xff]
    %v73 = vld [vmem:[#allocation7 + $0xb8] sm:$0xff]
    %v74 = vld [vmem:[#allocation7 + $0xc0] sm:$0xff]
    %v75 = vld [vmem:[#allocation7 + $0xc8] sm:$0xff]
    %v76 = vld [vmem:[#allocation7 + $0xd0] sm:$0xff]
    %v77 = vld [vmem:[#allocation7 + $0xd8] sm:$0xff]
    %v78 = vld [vmem:[#allocation7 + $0xe0] sm:$0xff]
    %v79 = vld [vmem:[#allocation7 + $0xe8] sm:$0xff]
    %v80 = vld [vmem:[#allocation7 + $0xf0] sm:$0xff]
    %v81 = vld [vmem:[#allocation7 + $0xf8] sm:$0xff]
    %v82 = vld [vmem:[#allocation2] sm:$0xff]
    %v83 = vld [vmem:[#allocation3] sm:$0xff]
    %v84 = vld [vmem:[#allocation4] sm:$0xff]
    %v85 = vld [vmem:[#allocation4 + $0x8] sm:$0xff]
    %v86 = vunpack.c.l.bf16 %v84
    %v87 = vunpack.c.h.bf16 %v84
    %v88 = vunpack.c.l.bf16 %v85
    %v89 = vunpack.c.h.bf16 %v85
    %v90 = vpack.c.bf16 %v82, %v82
    %v123 = vunpack.c.l.b16 %v50
    %v124 = vunpack.c.h.b16 %v50
    %v125 = vunpack.c.l.b16 %v51
    %v126 = vunpack.c.h.b16 %v51
    %v127 = vunpack.c.l.b16 %v52
    %v128 = vunpack.c.h.b16 %v52
    %v129 = vunpack.c.l.b16 %v53
    %v130 = vunpack.c.h.b16 %v53
    %v131 = vunpack.c.l.b16 %v54
    %v132 = vunpack.c.h.b16 %v54
    %v133 = vunpack.c.l.b16 %v55
    %v134 = vunpack.c.h.b16 %v55
    %v135 = vunpack.c.l.b16 %v56
    %v136 = vunpack.c.h.b16 %v56
    %v137 = vunpack.c.l.b16 %v57
    %v138 = vunpack.c.h.b16 %v57
    %v139 = vunpack.c.l.b16 %v58
    %v140 = vunpack.c.h.b16 %v58
    %v141 = vunpack.c.l.b16 %v59
    %v142 = vunpack.c.h.b16 %v59
    %v143 = vunpack.c.l.b16 %v60
    %v144 = vunpack.c.h.b16 %v60
    %v145 = vunpack.c.l.b16 %v61
    %v146 = vunpack.c.h.b16 %v61
    %v147 = vunpack.c.l.b16 %v62
    %v148 = vunpack.c.h.b16 %v62
    %v149 = vunpack.c.l.b16 %v63
    %v150 = vunpack.c.h.b16 %v63
    %v151 = vunpack.c.l.b16 %v64
    %v152 = vunpack.c.h.b16 %v64
    %v153 = vunpack.c.l.b16 %v65
    %v154 = vunpack.c.h.b16 %v65
    %v155 = vunpack.c.l.b16 %v66
    %v156 = vunpack.c.h.b16 %v66
    %v157 = vunpack.c.l.b16 %v67
    %v158 = vunpack.c.h.b16 %v67
    %v159 = vunpack.c.l.b16 %v68
    %v160 = vunpack.c.h.b16 %v68
    %v161 = vunpack.c.l.b16 %v69
    %v162 = vunpack.c.h.b16 %v69
    %v163 = vunpack.c.l.b16 %v70
    %v164 = vunpack.c.h.b16 %v70
    %v165 = vunpack.c.l.b16 %v71
    %v166 = vunpack.c.h.b16 %v71
    %v167 = vunpack.c.l.b16 %v72
    %v168 = vunpack.c.h.b16 %v72
    %v169 = vunpack.c.l.b16 %v73
    %v170 = vunpack.c.h.b16 %v73
    %v171 = vunpack.c.l.b16 %v74
    %v172 = vunpack.c.h.b16 %v74
    %v173 = vunpack.c.l.b16 %v75
    %v174 = vunpack.c.h.b16 %v75
    %v175 = vunpack.c.l.b16 %v76
    %v176 = vunpack.c.h.b16 %v76
    %v177 = vunpack.c.l.b16 %v77
    %v178 = vunpack.c.h.b16 %v77
    %v179 = vunpack.c.l.b16 %v78
    %v180 = vunpack.c.h.b16 %v78
    %v181 = vunpack.c.l.b16 %v79
    %v182 = vunpack.c.h.b16 %v79
    %v183 = vunpack.c.l.b16 %v80
    %v184 = vunpack.c.h.b16 %v80
    %v185 = vunpack.c.l.b16 %v81
    %v186 = vunpack.c.h.b16 %v81
    %v187 = vpack.c.b16 %v127, %v123
    %v188 = vpack.c.b16 %v128, %v124
    %v189 = vpack.c.b16 %v129, %v125
    %v190 = vpack.c.b16 %v130, %v126
    %v191 = vpack.c.b16 %v135, %v131
    %v192 = vpack.c.b16 %v136, %v132
    %v193 = vpack.c.b16 %v137, %v133
    %v194 = vpack.c.b16 %v138, %v134
    %v195 = vpack.c.b16 %v143, %v139
    %v196 = vpack.c.b16 %v144, %v140
    %v197 = vpack.c.b16 %v145, %v141
    %v198 = vpack.c.b16 %v146, %v142
    %v199 = vpack.c.b16 %v151, %v147
    %v200 = vpack.c.b16 %v152, %v148
    %v201 = vpack.c.b16 %v153, %v149
    %v202 = vpack.c.b16 %v154, %v150
    %v203 = vpack.c.b16 %v159, %v155
    %v204 = vpack.c.b16 %v160, %v156
    %v205 = vpack.c.b16 %v161, %v157
    %v206 = vpack.c.b16 %v162, %v158
    %v207 = vpack.c.b16 %v167, %v163
    %v208 = vpack.c.b16 %v168, %v164
    %v209 = vpack.c.b16 %v169, %v165
    %v210 = vpack.c.b16 %v170, %v166
    %v211 = vpack.c.b16 %v175, %v171
    %v212 = vpack.c.b16 %v176, %v172
    %v213 = vpack.c.b16 %v177, %v173
    %v214 = vpack.c.b16 %v178, %v174
    %v215 = vpack.c.b16 %v183, %v179
    %v216 = vpack.c.b16 %v184, %v180
    %v217 = vpack.c.b16 %v185, %v181
    %v218 = vpack.c.b16 %v186, %v182
    %251 = vmatpush.bf16.msra.mxu0 %v215
    %252 = vmatpush.bf16.msra.mxu0 %v211
    %253 = vmatpush.bf16.msra.mxu0 %v207
    %254 = vmatpush.bf16.msra.mxu0 %v203
    %255 = vmatpush.bf16.msra.mxu0 %v199
    %256 = vmatpush.bf16.msra.mxu0 %v195
    %257 = vmatpush.bf16.msra.mxu0 %v191
    %258 = vmatpush.bf16.msra.mxu0 %v187
    %259 = vmatmul.bf16.gmra.mxu0 %v90
    %v260 = vpop.f32.mrf.mxu0
    %v261 = vadd.f32 0.0, %v260
    %v262 = vpop.f32.mrf.mxu0
    %263 = vdwg.mxu0
    %264 = vmatpush.bf16.msra.mxu0 %v216
    %265 = vmatpush.bf16.msra.mxu0 %v212
    %266 = vmatpush.bf16.msra.mxu0 %v208
    %267 = vmatpush.bf16.msra.mxu0 %v204
    %268 = vmatpush.bf16.msra.mxu0 %v200
    %269 = vmatpush.bf16.msra.mxu0 %v196
    %270 = vmatpush.bf16.msra.mxu0 %v192
    %271 = vmatpush.bf16.msra.mxu0 %v188
    %272 = vmatmul.bf16.gmra.mxu0 %v90
    %v273 = vpop.f32.mrf.mxu0
    %v274 = vadd.f32 0.0, %v273
    %v275 = vpop.f32.mrf.mxu0
    %276 = vdwg.mxu0
    %277 = vmatpush.bf16.msra.mxu0 %v217
    %278 = vmatpush.bf16.msra.mxu0 %v213
    %279 = vmatpush.bf16.msra.mxu0 %v209
    %280 = vmatpush.bf16.msra.mxu0 %v205
    %281 = vmatpush.bf16.msra.mxu0 %v201
    %282 = vmatpush.bf16.msra.mxu0 %v197
    %283 = vmatpush.bf16.msra.mxu0 %v193
    %284 = vmatpush.bf16.msra.mxu0 %v189
    %285 = vmatmul.bf16.gmra.mxu0 %v90
    %v286 = vpop.f32.mrf.mxu0
    %v287 = vadd.f32 0.0, %v286
    %v288 = vpop.f32.mrf.mxu0
    %289 = vdwg.mxu0
    %290 = vmatpush.bf16.msra.mxu0 %v218
    %291 = vmatpush.bf16.msra.mxu0 %v214
    %292 = vmatpush.bf16.msra.mxu0 %v210
    %293 = vmatpush.bf16.msra.mxu0 %v206
    %294 = vmatpush.bf16.msra.mxu0 %v202
    %295 = vmatpush.bf16.msra.mxu0 %v198
    %296 = vmatpush.bf16.msra.mxu0 %v194
    %297 = vmatpush.bf16.msra.mxu0 %v190
    %298 = vmatmul.bf16.gmra.mxu0 %v90
    %v299 = vpop.f32.mrf.mxu0
    %v300 = vadd.f32 0.0, %v299
    %v301 = vpop.f32.mrf.mxu0
    %302 = vdwg.mxu0
    %v303 = vadd.f32 %v86, %v261
    %v304 = vadd.f32 %v87, %v274
    %v305 = vadd.f32 %v88, %v287
    %v306 = vadd.f32 %v89, %v300
    %v307 = vxor.u32 %v303, 2147483648
    %v308 = vxor.u32 %v304, 2147483648
    %v309 = vxor.u32 %v305, 2147483648
    %v310 = vmul.f32 %v307, 1.442695
    %v311 = vpow.pop %v310
    %v312 = vmul.f32 %v308, 1.442695
    %v313 = vpow.pop %v312
    %v314 = vmul.f32 %v309, 1.442695
    %v315 = vpow.pop %v314
    %v316 = vadd.f32 %v311, 1.0
    %v317 = vadd.f32 %v313, 1.0
    %v318 = vadd.f32 %v315, 1.0
    %v319 = vrcp.pop %v316
    %v320 = vmul.f32 %v316, %v319
    %v321 = vsub.f32 1.0, %v320
    %v322 = vmul.f32 %v319, %v321
    %v323 = vadd.f32 %v319, %v322
    %vm324 = vweird.f32 %v316
    %vm325 = vweird.f32 %v319
    %vm326 = vmor %vm324, %vm325
    %v327 = vsel %vm326, %v319, %v323
    %v328 = vand.u32 2147483647, %v316
    %vm329 = vcmp.eq.f32.partialorder %v328, 8.507059e+37
    %v330 = vand.u32 %v316, 2147483648
    %v331 = vor.u32 1.1754944e-38, %v330
    %v332 = vsel %vm329, %v331, %v327
    %v333 = vmul.f32 1.0, %v332
    %v334 = vrcp.pop %v317
    %v335 = vmul.f32 %v317, %v334
    %v336 = vsub.f32 1.0, %v335
    %v337 = vmul.f32 %v334, %v336
    %v338 = vadd.f32 %v334, %v337
    %vm339 = vweird.f32 %v317
    %vm340 = vweird.f32 %v334
    %vm341 = vmor %vm339, %vm340
    %v342 = vsel %vm341, %v334, %v338
    %v343 = vand.u32 2147483647, %v317
    %vm344 = vcmp.eq.f32.partialorder %v343, 8.507059e+37
    %v345 = vand.u32 %v317, 2147483648
    %v346 = vor.u32 1.1754944e-38, %v345
    %v347 = vsel %vm344, %v346, %v342
    %v348 = vmul.f32 1.0, %v347
    %v349 = vrcp.pop %v318
    %v350 = vmul.f32 %v318, %v349
    %v351 = vsub.f32 1.0, %v350
    %v352 = vmul.f32 %v349, %v351
    %v353 = vadd.f32 %v349, %v352
    %vm354 = vweird.f32 %v318
    %vm355 = vweird.f32 %v349
    %vm356 = vmor %vm354, %vm355
    %v357 = vsel %vm356, %v349, %v353
    %v358 = vand.u32 2147483647, %v318
    %vm359 = vcmp.eq.f32.partialorder %v358, 8.507059e+37
    %v360 = vand.u32 %v318, 2147483648
    %v361 = vor.u32 1.1754944e-38, %v360
    %v362 = vsel %vm359, %v361, %v357
    %v363 = vmul.f32 1.0, %v362
    %v364 = vtanh.pop %v306
    %v365 = vmul.f32 %v348, %v83
    %v366 = vmul.f32 %v333, %v364
    %v367 = vadd.f32 %v365, %v366
    %v368 = vtanh.pop %v367
    %v369 = vmul.f32 %v363, %v368
    %v371 = vrot.slane %v369, 1
    %v372 = vrot.slane %v369, 2
    %v373 = vrot.slane %v369, 3
    %v374 = vrot.slane %v369, 4
    %v375 = vrot.slane %v369, 5
    %v376 = vrot.slane %v369, 6
    %v377 = vrot.slane %v369, 7
    %385 = vst [vmem:[#allocation9] sm:$0x1] %v369
    %386 = vst [vmem:[#allocation9 + $0x10] sm:$0x1] %v371
    %387 = vst [vmem:[#allocation9 + $0x20] sm:$0x1] %v372
    %388 = vst [vmem:[#allocation9 + $0x30] sm:$0x1] %v373
    %389 = vst [vmem:[#allocation9 + $0x40] sm:$0x1] %v374
    %390 = vst [vmem:[#allocation9 + $0x50] sm:$0x1] %v375
    %391 = vst [vmem:[#allocation9 + $0x60] sm:$0x1] %v376
    %392 = vst [vmem:[#allocation9 + $0x70] sm:$0x1] %v377
    %s393 = scalar_lea.vmem [#allocation4], 16
    %v394 = vld [vmem:[%s393] sm:$0xff]
    %v395 = vld [vmem:[%s393 + $0x8] sm:$0xff]
    %v396 = vunpack.c.l.bf16 %v394
    %v397 = vunpack.c.h.bf16 %v394
    %v398 = vunpack.c.l.bf16 %v395
    %v399 = vunpack.c.h.bf16 %v395
    %v400 = vpack.c.bf16 %v369, %v369
    %401 = vmatpush.bf16.msra.mxu0 %v215
    %402 = vmatpush.bf16.msra.mxu0 %v211
    %403 = vmatpush.bf16.msra.mxu0 %v207
    %404 = vmatpush.bf16.msra.mxu0 %v203
    %405 = vmatpush.bf16.msra.mxu0 %v199
    %406 = vmatpush.bf16.msra.mxu0 %v195
    %407 = vmatpush.bf16.msra.mxu0 %v191
    %408 = vmatpush.bf16.msra.mxu0 %v187
    %409 = vmatmul.bf16.gmra.mxu0 %v400
    %v410 = vpop.f32.mrf.mxu0
    %v411 = vadd.f32 0.0, %v410
    %v412 = vpop.f32.mrf.mxu0
    %413 = vdwg.mxu0
    %414 = vmatpush.bf16.msra.mxu0 %v216
    %415 = vmatpush.bf16.msra.mxu0 %v212
    %416 = vmatpush.bf16.msra.mxu0 %v208
    %417 = vmatpush.bf16.msra.mxu0 %v204
    %418 = vmatpush.bf16.msra.mxu0 %v200
    %419 = vmatpush.bf16.msra.mxu0 %v196
    %420 = vmatpush.bf16.msra.mxu0 %v192
    %421 = vmatpush.bf16.msra.mxu0 %v188
    %422 = vmatmul.bf16.gmra.mxu0 %v400
    %v423 = vpop.f32.mrf.mxu0
    %v424 = vadd.f32 0.0, %v423
    %v425 = vpop.f32.mrf.mxu0
    %426 = vdwg.mxu0
    %427 = vmatpush.bf16.msra.mxu0 %v217
    %428 = vmatpush.bf16.msra.mxu0 %v213
    %429 = vmatpush.bf16.msra.mxu0 %v209
    %430 = vmatpush.bf16.msra.mxu0 %v205
    %431 = vmatpush.bf16.msra.mxu0 %v201
    %432 = vmatpush.bf16.msra.mxu0 %v197
    %433 = vmatpush.bf16.msra.mxu0 %v193
    %434 = vmatpush.bf16.msra.mxu0 %v189
    %435 = vmatmul.bf16.gmra.mxu0 %v400
    %v436 = vpop.f32.mrf.mxu0
    %v437 = vadd.f32 0.0, %v436
    %v438 = vpop.f32.mrf.mxu0
    %439 = vdwg.mxu0
    %440 = vmatpush.bf16.msra.mxu0 %v218
    %441 = vmatpush.bf16.msra.mxu0 %v214
    %442 = vmatpush.bf16.msra.mxu0 %v210
    %443 = vmatpush.bf16.msra.mxu0 %v206
    %444 = vmatpush.bf16.msra.mxu0 %v202
    %445 = vmatpush.bf16.msra.mxu0 %v198
    %446 = vmatpush.bf16.msra.mxu0 %v194
    %447 = vmatpush.bf16.msra.mxu0 %v190
    %448 = vmatmul.bf16.gmra.mxu0 %v400
    %v449 = vpop.f32.mrf.mxu0
    %v450 = vadd.f32 0.0, %v449
    %v451 = vpop.f32.mrf.mxu0
    %452 = vdwg.mxu0
    %v453 = vadd.f32 %v396, %v411
    %v454 = vadd.f32 %v397, %v424
    %v455 = vadd.f32 %v398, %v437
    %v456 = vadd.f32 %v399, %v450
    %v457 = vxor.u32 %v453, 2147483648
    %v458 = vxor.u32 %v454, 2147483648
    %v459 = vxor.u32 %v455, 2147483648
    %v460 = vmul.f32 %v457, 1.442695
    %v461 = vpow.pop %v460
    %v462 = vmul.f32 %v458, 1.442695
    %v463 = vpow.pop %v462
    %v464 = vmul.f32 %v459, 1.442695
    %v465 = vpow.pop %v464
    %v466 = vadd.f32 %v461, 1.0
    %v467 = vadd.f32 %v463, 1.0
    %v468 = vadd.f32 %v465, 1.0
    %v469 = vrcp.pop %v466
    %v470 = vmul.f32 %v466, %v469
    %v471 = vsub.f32 1.0, %v470
    %v472 = vmul.f32 %v469, %v471
    %v473 = vadd.f32 %v469, %v472
    %vm474 = vweird.f32 %v466
    %vm475 = vweird.f32 %v469
    %vm476 = vmor %vm474, %vm475
    %v477 = vsel %vm476, %v469, %v473
    %v478 = vand.u32 2147483647, %v466
    %vm479 = vcmp.eq.f32.partialorder %v478, 8.507059e+37
    %v480 = vand.u32 %v466, 2147483648
    %v481 = vor.u32 1.1754944e-38, %v480
    %v482 = vsel %vm479, %v481, %v477
    %v483 = vmul.f32 1.0, %v482
    %v484 = vrcp.pop %v467
    %v485 = vmul.f32 %v467, %v484
    %v486 = vsub.f32 1.0, %v485
    %v487 = vmul.f32 %v484, %v486
    %v488 = vadd.f32 %v484, %v487
    %vm489 = vweird.f32 %v467
    %vm490 = vweird.f32 %v484
    %vm491 = vmor %vm489, %vm490
    %v492 = vsel %vm491, %v484, %v488
    %v493 = vand.u32 2147483647, %v467
    %vm494 = vcmp.eq.f32.partialorder %v493, 8.507059e+37
    %v495 = vand.u32 %v467, 2147483648
    %v496 = vor.u32 1.1754944e-38, %v495
    %v497 = vsel %vm494, %v496, %v492
    %v498 = vmul.f32 1.0, %v497
    %v499 = vrcp.pop %v468
    %v500 = vmul.f32 %v468, %v499
    %v501 = vsub.f32 1.0, %v500
    %v502 = vmul.f32 %v499, %v501
    %v503 = vadd.f32 %v499, %v502
    %vm504 = vweird.f32 %v468
    %vm505 = vweird.f32 %v499
    %vm506 = vmor %vm504, %vm505
    %v507 = vsel %vm506, %v499, %v503
    %v508 = vand.u32 2147483647, %v468
    %vm509 = vcmp.eq.f32.partialorder %v508, 8.507059e+37
    %v510 = vand.u32 %v468, 2147483648
    %v511 = vor.u32 1.1754944e-38, %v510
    %v512 = vsel %vm509, %v511, %v507
    %v513 = vmul.f32 1.0, %v512
    %v514 = vtanh.pop %v456
    %v515 = vmul.f32 %v498, %v367
    %v516 = vmul.f32 %v483, %v514
    %v517 = vadd.f32 %v515, %v516
    %v518 = vtanh.pop %v517
    %v519 = vmul.f32 %v513, %v518
    %v521 = vrot.slane %v519, 1
    %v522 = vrot.slane %v519, 2
    %v523 = vrot.slane %v519, 3
    %v524 = vrot.slane %v519, 4
    %v525 = vrot.slane %v519, 5
    %v526 = vrot.slane %v519, 6
    %v527 = vrot.slane %v519, 7
    %535 = vst [vmem:[#allocation9 + $0x1] sm:$0x1] %v519
    %536 = vst [vmem:[#allocation9 + $0x11] sm:$0x1] %v521
    %537 = vst [vmem:[#allocation9 + $0x21] sm:$0x1] %v522
    %538 = vst [vmem:[#allocation9 + $0x31] sm:$0x1] %v523
    %539 = vst [vmem:[#allocation9 + $0x41] sm:$0x1] %v524
    %540 = vst [vmem:[#allocation9 + $0x51] sm:$0x1] %v525
    %541 = vst [vmem:[#allocation9 + $0x61] sm:$0x1] %v526
    %542 = vst [vmem:[#allocation9 + $0x71] sm:$0x1] %v527
    %s543 = scalar_lea.vmem [#allocation4], 32
    %v544 = vld [vmem:[%s543] sm:$0xff]
    %v545 = vld [vmem:[%s543 + $0x8] sm:$0xff]
    %v546 = vunpack.c.l.bf16 %v544
    %v547 = vunpack.c.h.bf16 %v544
    %v548 = vunpack.c.l.bf16 %v545
    %v549 = vunpack.c.h.bf16 %v545
    %v550 = vpack.c.bf16 %v519, %v519
    %551 = vmatpush.bf16.msra.mxu0 %v215
    %552 = vmatpush.bf16.msra.mxu0 %v211
    %553 = vmatpush.bf16.msra.mxu0 %v207
    %554 = vmatpush.bf16.msra.mxu0 %v203
    %555 = vmatpush.bf16.msra.mxu0 %v199
    %556 = vmatpush.bf16.msra.mxu0 %v195
    %557 = vmatpush.bf16.msra.mxu0 %v191
    %558 = vmatpush.bf16.msra.mxu0 %v187
    %559 = vmatmul.bf16.gmra.mxu0 %v550
    %v560 = vpop.f32.mrf.mxu0
    %v561 = vadd.f32 0.0, %v560
    %v562 = vpop.f32.mrf.mxu0
    %563 = vdwg.mxu0
    %564 = vmatpush.bf16.msra.mxu0 %v216
    %565 = vmatpush.bf16.msra.mxu0 %v212
    %566 = vmatpush.bf16.msra.mxu0 %v208
    %567 = vmatpush.bf16.msra.mxu0 %v204
    %568 = vmatpush.bf16.msra.mxu0 %v200
    %569 = vmatpush.bf16.msra.mxu0 %v196
    %570 = vmatpush.bf16.msra.mxu0 %v192
    %571 = vmatpush.bf16.msra.mxu0 %v188
    %572 = vmatmul.bf16.gmra.mxu0 %v550
    %v573 = vpop.f32.mrf.mxu0
    %v574 = vadd.f32 0.0, %v573
    %v575 = vpop.f32.mrf.mxu0
    %576 = vdwg.mxu0
    %577 = vmatpush.bf16.msra.mxu0 %v217
    %578 = vmatpush.bf16.msra.mxu0 %v213
    %579 = vmatpush.bf16.msra.mxu0 %v209
    %580 = vmatpush.bf16.msra.mxu0 %v205
    %581 = vmatpush.bf16.msra.mxu0 %v201
    %582 = vmatpush.bf16.msra.mxu0 %v197
    %583 = vmatpush.bf16.msra.mxu0 %v193
    %584 = vmatpush.bf16.msra.mxu0 %v189
    %585 = vmatmul.bf16.gmra.mxu0 %v550
    %v586 = vpop.f32.mrf.mxu0
    %v587 = vadd.f32 0.0, %v586
    %v588 = vpop.f32.mrf.mxu0
    %589 = vdwg.mxu0
    %590 = vmatpush.bf16.msra.mxu0 %v218
    %591 = vmatpush.bf16.msra.mxu0 %v214
    %592 = vmatpush.bf16.msra.mxu0 %v210
    %593 = vmatpush.bf16.msra.mxu0 %v206
    %594 = vmatpush.bf16.msra.mxu0 %v202
    %595 = vmatpush.bf16.msra.mxu0 %v198
    %596 = vmatpush.bf16.msra.mxu0 %v194
    %597 = vmatpush.bf16.msra.mxu0 %v190
    %598 = vmatmul.bf16.gmra.mxu0 %v550
    %v599 = vpop.f32.mrf.mxu0
    %v600 = vadd.f32 0.0, %v599
    %v601 = vpop.f32.mrf.mxu0
    %602 = vdwg.mxu0
    %v603 = vadd.f32 %v546, %v561
    %v604 = vadd.f32 %v547, %v574
    %v605 = vadd.f32 %v548, %v587
    %v606 = vadd.f32 %v549, %v600
    %v607 = vxor.u32 %v603, 2147483648
    %v608 = vxor.u32 %v604, 2147483648
    %v609 = vxor.u32 %v605, 2147483648
    %v610 = vmul.f32 %v607, 1.442695
    %v611 = vpow.pop %v610
    %v612 = vmul.f32 %v608, 1.442695
    %v613 = vpow.pop %v612
    %v614 = vmul.f32 %v609, 1.442695
    %v615 = vpow.pop %v614
    %v616 = vadd.f32 %v611, 1.0
    %v617 = vadd.f32 %v613, 1.0
    %v618 = vadd.f32 %v615, 1.0
    %v619 = vrcp.pop %v616
    %v620 = vmul.f32 %v616, %v619
    %v621 = vsub.f32 1.0, %v620
    %v622 = vmul.f32 %v619, %v621
    %v623 = vadd.f32 %v619, %v622
    %vm624 = vweird.f32 %v616
    %vm625 = vweird.f32 %v619
    %vm626 = vmor %vm624, %vm625
    %v627 = vsel %vm626, %v619, %v623
    %v628 = vand.u32 2147483647, %v616
    %vm629 = vcmp.eq.f32.partialorder %v628, 8.507059e+37
    %v630 = vand.u32 %v616, 2147483648
    %v631 = vor.u32 1.1754944e-38, %v630
    %v632 = vsel %vm629, %v631, %v627
    %v633 = vmul.f32 1.0, %v632
    %v634 = vrcp.pop %v617
    %v635 = vmul.f32 %v617, %v634
    %v636 = vsub.f32 1.0, %v635
    %v637 = vmul.f32 %v634, %v636
    %v638 = vadd.f32 %v634, %v637
    %vm639 = vweird.f32 %v617
    %vm640 = vweird.f32 %v634
    %vm641 = vmor %vm639, %vm640
    %v642 = vsel %vm641, %v634, %v638
    %v643 = vand.u32 2147483647, %v617
    %vm644 = vcmp.eq.f32.partialorder %v643, 8.507059e+37
    %v645 = vand.u32 %v617, 2147483648
    %v646 = vor.u32 1.1754944e-38, %v645
    %v647 = vsel %vm644, %v646, %v642
    %v648 = vmul.f32 1.0, %v647
    %v649 = vrcp.pop %v618
    %v650 = vmul.f32 %v618, %v649
    %v651 = vsub.f32 1.0, %v650
    %v652 = vmul.f32 %v649, %v651
    %v653 = vadd.f32 %v649, %v652
    %vm654 = vweird.f32 %v618
    %vm655 = vweird.f32 %v649
    %vm656 = vmor %vm654, %vm655
    %v657 = vsel %vm656, %v649, %v653
    %v658 = vand.u32 2147483647, %v618
    %vm659 = vcmp.eq.f32.partialorder %v658, 8.507059e+37
    %v660 = vand.u32 %v618, 2147483648
    %v661 = vor.u32 1.1754944e-38, %v660
    %v662 = vsel %vm659, %v661, %v657
    %v663 = vmul.f32 1.0, %v662
    %v664 = vtanh.pop %v606
    %v665 = vmul.f32 %v648, %v517
    %v666 = vmul.f32 %v633, %v664
    %v667 = vadd.f32 %v665, %v666
    %v668 = vtanh.pop %v667
    %v669 = vmul.f32 %v663, %v668
    %v671 = vrot.slane %v669, 1
    %v672 = vrot.slane %v669, 2
    %v673 = vrot.slane %v669, 3
    %v674 = vrot.slane %v669, 4
    %v675 = vrot.slane %v669, 5
    %v676 = vrot.slane %v669, 6
    %v677 = vrot.slane %v669, 7
    %685 = vst [vmem:[#allocation9 + $0x2] sm:$0x1] %v669
    %686 = vst [vmem:[#allocation9 + $0x12] sm:$0x1] %v671
    %687 = vst [vmem:[#allocation9 + $0x22] sm:$0x1] %v672
    %688 = vst [vmem:[#allocation9 + $0x32] sm:$0x1] %v673
    %689 = vst [vmem:[#allocation9 + $0x42] sm:$0x1] %v674
    %690 = vst [vmem:[#allocation9 + $0x52] sm:$0x1] %v675
    %691 = vst [vmem:[#allocation9 + $0x62] sm:$0x1] %v676
    %692 = vst [vmem:[#allocation9 + $0x72] sm:$0x1] %v677
    %s693 = scalar_lea.vmem [#allocation4], 48
    %v694 = vld [vmem:[%s693] sm:$0xff]
    %v695 = vld [vmem:[%s693 + $0x8] sm:$0xff]
    %v696 = vunpack.c.l.bf16 %v694
    %v697 = vunpack.c.h.bf16 %v694
    %v698 = vunpack.c.l.bf16 %v695
    %v699 = vunpack.c.h.bf16 %v695
    %v700 = vpack.c.bf16 %v669, %v669
    %701 = vmatpush.bf16.msra.mxu0 %v215
    %702 = vmatpush.bf16.msra.mxu0 %v211
    %703 = vmatpush.bf16.msra.mxu0 %v207
    %704 = vmatpush.bf16.msra.mxu0 %v203
    %705 = vmatpush.bf16.msra.mxu0 %v199
    %706 = vmatpush.bf16.msra.mxu0 %v195
    %707 = vmatpush.bf16.msra.mxu0 %v191
    %708 = vmatpush.bf16.msra.mxu0 %v187
    %709 = vmatmul.bf16.gmra.mxu0 %v700
    %v710 = vpop.f32.mrf.mxu0
    %v711 = vadd.f32 0.0, %v710
    %v712 = vpop.f32.mrf.mxu0
    %713 = vdwg.mxu0
    %714 = vmatpush.bf16.msra.mxu0 %v216
    %715 = vmatpush.bf16.msra.mxu0 %v212
    %716 = vmatpush.bf16.msra.mxu0 %v208
    %717 = vmatpush.bf16.msra.mxu0 %v204
    %718 = vmatpush.bf16.msra.mxu0 %v200
    %719 = vmatpush.bf16.msra.mxu0 %v196
    %720 = vmatpush.bf16.msra.mxu0 %v192
    %721 = vmatpush.bf16.msra.mxu0 %v188
    %722 = vmatmul.bf16.gmra.mxu0 %v700
    %v723 = vpop.f32.mrf.mxu0
    %v724 = vadd.f32 0.0, %v723
    %v725 = vpop.f32.mrf.mxu0
    %726 = vdwg.mxu0
    %727 = vmatpush.bf16.msra.mxu0 %v217
    %728 = vmatpush.bf16.msra.mxu0 %v213
    %729 = vmatpush.bf16.msra.mxu0 %v209
    %730 = vmatpush.bf16.msra.mxu0 %v205
    %731 = vmatpush.bf16.msra.mxu0 %v201
    %732 = vmatpush.bf16.msra.mxu0 %v197
    %733 = vmatpush.bf16.msra.mxu0 %v193
    %734 = vmatpush.bf16.msra.mxu0 %v189
    %735 = vmatmul.bf16.gmra.mxu0 %v700
    %v736 = vpop.f32.mrf.mxu0
    %v737 = vadd.f32 0.0, %v736
    %v738 = vpop.f32.mrf.mxu0
    %739 = vdwg.mxu0
    %740 = vmatpush.bf16.msra.mxu0 %v218
    %741 = vmatpush.bf16.msra.mxu0 %v214
    %742 = vmatpush.bf16.msra.mxu0 %v210
    %743 = vmatpush.bf16.msra.mxu0 %v206
    %744 = vmatpush.bf16.msra.mxu0 %v202
    %745 = vmatpush.bf16.msra.mxu0 %v198
    %746 = vmatpush.bf16.msra.mxu0 %v194
    %747 = vmatpush.bf16.msra.mxu0 %v190
    %748 = vmatmul.bf16.gmra.mxu0 %v700
    %v749 = vpop.f32.mrf.mxu0
    %v750 = vadd.f32 0.0, %v749
    %v751 = vpop.f32.mrf.mxu0
    %752 = vdwg.mxu0
    %v753 = vadd.f32 %v696, %v711
    %v754 = vadd.f32 %v697, %v724
    %v755 = vadd.f32 %v698, %v737
    %v756 = vadd.f32 %v699, %v750
    %v757 = vxor.u32 %v753, 2147483648
    %v758 = vxor.u32 %v754, 2147483648
    %v759 = vxor.u32 %v755, 2147483648
    %v760 = vmul.f32 %v757, 1.442695
    %v761 = vpow.pop %v760
    %v762 = vmul.f32 %v758, 1.442695
    %v763 = vpow.pop %v762
    %v764 = vmul.f32 %v759, 1.442695
    %v765 = vpow.pop %v764
    %v766 = vadd.f32 %v761, 1.0
    %v767 = vadd.f32 %v763, 1.0
    %v768 = vadd.f32 %v765, 1.0
    %v769 = vrcp.pop %v766
    %v770 = vmul.f32 %v766, %v769
    %v771 = vsub.f32 1.0, %v770
    %v772 = vmul.f32 %v769, %v771
    %v773 = vadd.f32 %v769, %v772
    %vm774 = vweird.f32 %v766
    %vm775 = vweird.f32 %v769
    %vm776 = vmor %vm774, %vm775
    %v777 = vsel %vm776, %v769, %v773
    %v778 = vand.u32 2147483647, %v766
    %vm779 = vcmp.eq.f32.partialorder %v778, 8.507059e+37
    %v780 = vand.u32 %v766, 2147483648
    %v781 = vor.u32 1.1754944e-38, %v780
    %v782 = vsel %vm779, %v781, %v777
    %v783 = vmul.f32 1.0, %v782
    %v784 = vrcp.pop %v767
    %v785 = vmul.f32 %v767, %v784
    %v786 = vsub.f32 1.0, %v785
    %v787 = vmul.f32 %v784, %v786
    %v788 = vadd.f32 %v784, %v787
    %vm789 = vweird.f32 %v767
    %vm790 = vweird.f32 %v784
    %vm791 = vmor %vm789, %vm790
    %v792 = vsel %vm791, %v784, %v788
    %v793 = vand.u32 2147483647, %v767
    %vm794 = vcmp.eq.f32.partialorder %v793, 8.507059e+37
    %v795 = vand.u32 %v767, 2147483648
    %v796 = vor.u32 1.1754944e-38, %v795
    %v797 = vsel %vm794, %v796, %v792
    %v798 = vmul.f32 1.0, %v797
    %v799 = vrcp.pop %v768
    %v800 = vmul.f32 %v768, %v799
    %v801 = vsub.f32 1.0, %v800
    %v802 = vmul.f32 %v799, %v801
    %v803 = vadd.f32 %v799, %v802
    %vm804 = vweird.f32 %v768
    %vm805 = vweird.f32 %v799
    %vm806 = vmor %vm804, %vm805
    %v807 = vsel %vm806, %v799, %v803
    %v808 = vand.u32 2147483647, %v768
    %vm809 = vcmp.eq.f32.partialorder %v808, 8.507059e+37
    %v810 = vand.u32 %v768, 2147483648
    %v811 = vor.u32 1.1754944e-38, %v810
    %v812 = vsel %vm809, %v811, %v807
    %v813 = vmul.f32 1.0, %v812
    %v814 = vtanh.pop %v756
    %v815 = vmul.f32 %v798, %v667
    %v816 = vmul.f32 %v783, %v814
    %v817 = vadd.f32 %v815, %v816
    %v818 = vtanh.pop %v817
    %v819 = vmul.f32 %v813, %v818
    %v821 = vrot.slane %v819, 1
    %v822 = vrot.slane %v819, 2
    %v823 = vrot.slane %v819, 3
    %v824 = vrot.slane %v819, 4
    %v825 = vrot.slane %v819, 5
    %v826 = vrot.slane %v819, 6
    %v827 = vrot.slane %v819, 7
    %835 = vst [vmem:[#allocation9 + $0x3] sm:$0x1] %v819
    %836 = vst [vmem:[#allocation9 + $0x13] sm:$0x1] %v821
    %837 = vst [vmem:[#allocation9 + $0x23] sm:$0x1] %v822
    %838 = vst [vmem:[#allocation9 + $0x33] sm:$0x1] %v823
    %839 = vst [vmem:[#allocation9 + $0x43] sm:$0x1] %v824
    %840 = vst [vmem:[#allocation9 + $0x53] sm:$0x1] %v825
    %841 = vst [vmem:[#allocation9 + $0x63] sm:$0x1] %v826
    %842 = vst [vmem:[#allocation9 + $0x73] sm:$0x1] %v827
    %s843 = scalar_lea.vmem [#allocation4], 64
    %v844 = vld [vmem:[%s843] sm:$0xff]
    %v845 = vld [vmem:[%s843 + $0x8] sm:$0xff]
    %v846 = vunpack.c.l.bf16 %v844
    %v847 = vunpack.c.h.bf16 %v844
    %v848 = vunpack.c.l.bf16 %v845
    %v849 = vunpack.c.h.bf16 %v845
    %v850 = vpack.c.bf16 %v819, %v819
    %851 = vmatpush.bf16.msra.mxu0 %v215
    %852 = vmatpush.bf16.msra.mxu0 %v211
    %853 = vmatpush.bf16.msra.mxu0 %v207
    %854 = vmatpush.bf16.msra.mxu0 %v203
    %855 = vmatpush.bf16.msra.mxu0 %v199
    %856 = vmatpush.bf16.msra.mxu0 %v195
    %857 = vmatpush.bf16.msra.mxu0 %v191
    %858 = vmatpush.bf16.msra.mxu0 %v187
    %859 = vmatmul.bf16.gmra.mxu0 %v850
    %v860 = vpop.f32.mrf.mxu0
    %v861 = vadd.f32 0.0, %v860
    %v862 = vpop.f32.mrf.mxu0
    %863 = vdwg.mxu0
    %864 = vmatpush.bf16.msra.mxu0 %v216
    %865 = vmatpush.bf16.msra.mxu0 %v212
    %866 = vmatpush.bf16.msra.mxu0 %v208
    %867 = vmatpush.bf16.msra.mxu0 %v204
    %868 = vmatpush.bf16.msra.mxu0 %v200
    %869 = vmatpush.bf16.msra.mxu0 %v196
    %870 = vmatpush.bf16.msra.mxu0 %v192
    %871 = vmatpush.bf16.msra.mxu0 %v188
    %872 = vmatmul.bf16.gmra.mxu0 %v850
    %v873 = vpop.f32.mrf.mxu0
    %v874 = vadd.f32 0.0, %v873
    %v875 = vpop.f32.mrf.mxu0
    %876 = vdwg.mxu0
    %877 = vmatpush.bf16.msra.mxu0 %v217
    %878 = vmatpush.bf16.msra.mxu0 %v213
    %879 = vmatpush.bf16.msra.mxu0 %v209
    %880 = vmatpush.bf16.msra.mxu0 %v205
    %881 = vmatpush.bf16.msra.mxu0 %v201
    %882 = vmatpush.bf16.msra.mxu0 %v197
    %883 = vmatpush.bf16.msra.mxu0 %v193
    %884 = vmatpush.bf16.msra.mxu0 %v189
    %885 = vmatmul.bf16.gmra.mxu0 %v850
    %v886 = vpop.f32.mrf.mxu0
    %v887 = vadd.f32 0.0, %v886
    %v888 = vpop.f32.mrf.mxu0
    %889 = vdwg.mxu0
    %890 = vmatpush.bf16.msra.mxu0 %v218
    %891 = vmatpush.bf16.msra.mxu0 %v214
    %892 = vmatpush.bf16.msra.mxu0 %v210
    %893 = vmatpush.bf16.msra.mxu0 %v206
    %894 = vmatpush.bf16.msra.mxu0 %v202
    %895 = vmatpush.bf16.msra.mxu0 %v198
    %896 = vmatpush.bf16.msra.mxu0 %v194
    %897 = vmatpush.bf16.msra.mxu0 %v190
    %898 = vmatmul.bf16.gmra.mxu0 %v850
    %v899 = vpop.f32.mrf.mxu0
    %v900 = vadd.f32 0.0, %v899
    %v901 = vpop.f32.mrf.mxu0
    %902 = vdwg.mxu0
    %v903 = vadd.f32 %v846, %v861
    %v904 = vadd.f32 %v847, %v874
    %v905 = vadd.f32 %v848, %v887
    %v906 = vadd.f32 %v849, %v900
    %v907 = vxor.u32 %v903, 2147483648
    %v908 = vxor.u32 %v904, 2147483648
    %v909 = vxor.u32 %v905, 2147483648
    %v910 = vmul.f32 %v907, 1.442695
    %v911 = vpow.pop %v910
    %v912 = vmul.f32 %v908, 1.442695
    %v913 = vpow.pop %v912
    %v914 = vmul.f32 %v909, 1.442695
    %v915 = vpow.pop %v914
    %v916 = vadd.f32 %v911, 1.0
    %v917 = vadd.f32 %v913, 1.0
    %v918 = vadd.f32 %v915, 1.0
    %v919 = vrcp.pop %v916
    %v920 = vmul.f32 %v916, %v919
    %v921 = vsub.f32 1.0, %v920
    %v922 = vmul.f32 %v919, %v921
    %v923 = vadd.f32 %v919, %v922
    %vm924 = vweird.f32 %v916
    %vm925 = vweird.f32 %v919
    %vm926 = vmor %vm924, %vm925
    %v927 = vsel %vm926, %v919, %v923
    %v928 = vand.u32 2147483647, %v916
    %vm929 = vcmp.eq.f32.partialorder %v928, 8.507059e+37
    %v930 = vand.u32 %v916, 2147483648
    %v931 = vor.u32 1.1754944e-38, %v930
    %v932 = vsel %vm929, %v931, %v927
    %v933 = vmul.f32 1.0, %v932
    %v934 = vrcp.pop %v917
    %v935 = vmul.f32 %v917, %v934
    %v936 = vsub.f32 1.0, %v935
    %v937 = vmul.f32 %v934, %v936
    %v938 = vadd.f32 %v934, %v937
    %vm939 = vweird.f32 %v917
    %vm940 = vweird.f32 %v934
    %vm941 = vmor %vm939, %vm940
    %v942 = vsel %vm941, %v934, %v938
    %v943 = vand.u32 2147483647, %v917
    %vm944 = vcmp.eq.f32.partialorder %v943, 8.507059e+37
    %v945 = vand.u32 %v917, 2147483648
    %v946 = vor.u32 1.1754944e-38, %v945
    %v947 = vsel %vm944, %v946, %v942
    %v948 = vmul.f32 1.0, %v947
    %v949 = vrcp.pop %v918
    %v950 = vmul.f32 %v918, %v949
    %v951 = vsub.f32 1.0, %v950
    %v952 = vmul.f32 %v949, %v951
    %v953 = vadd.f32 %v949, %v952
    %vm954 = vweird.f32 %v918
    %vm955 = vweird.f32 %v949
    %vm956 = vmor %vm954, %vm955
    %v957 = vsel %vm956, %v949, %v953
    %v958 = vand.u32 2147483647, %v918
    %vm959 = vcmp.eq.f32.partialorder %v958, 8.507059e+37
    %v960 = vand.u32 %v918, 2147483648
    %v961 = vor.u32 1.1754944e-38, %v960
    %v962 = vsel %vm959, %v961, %v957
    %v963 = vmul.f32 1.0, %v962
    %v964 = vtanh.pop %v906
    %v965 = vmul.f32 %v948, %v817
    %v966 = vmul.f32 %v933, %v964
    %v967 = vadd.f32 %v965, %v966
    %v968 = vtanh.pop %v967
    %v969 = vmul.f32 %v963, %v968
    %v971 = vrot.slane %v969, 1
    %v972 = vrot.slane %v969, 2
    %v973 = vrot.slane %v969, 3
    %v974 = vrot.slane %v969, 4
    %v975 = vrot.slane %v969, 5
    %v976 = vrot.slane %v969, 6
    %v977 = vrot.slane %v969, 7
    %985 = vst [vmem:[#allocation9 + $0x4] sm:$0x1] %v969
    %986 = vst [vmem:[#allocation9 + $0x14] sm:$0x1] %v971
    %987 = vst [vmem:[#allocation9 + $0x24] sm:$0x1] %v972
    %988 = vst [vmem:[#allocation9 + $0x34] sm:$0x1] %v973
    %989 = vst [vmem:[#allocation9 + $0x44] sm:$0x1] %v974
    %990 = vst [vmem:[#allocation9 + $0x54] sm:$0x1] %v975
    %991 = vst [vmem:[#allocation9 + $0x64] sm:$0x1] %v976
    %992 = vst [vmem:[#allocation9 + $0x74] sm:$0x1] %v977
    %s993 = scalar_lea.vmem [#allocation4], 80
    %v994 = vld [vmem:[%s993] sm:$0xff]
    %v995 = vld [vmem:[%s993 + $0x8] sm:$0xff]
    %v996 = vunpack.c.l.bf16 %v994
    %v997 = vunpack.c.h.bf16 %v994
    %v998 = vunpack.c.l.bf16 %v995
    %v999 = vunpack.c.h.bf16 %v995
    %v1000 = vpack.c.bf16 %v969, %v969
    %1001 = vmatpush.bf16.msra.mxu0 %v215
    %1002 = vmatpush.bf16.msra.mxu0 %v211
    %1003 = vmatpush.bf16.msra.mxu0 %v207
    %1004 = vmatpush.bf16.msra.mxu0 %v203
    %1005 = vmatpush.bf16.msra.mxu0 %v199
    %1006 = vmatpush.bf16.msra.mxu0 %v195
    %1007 = vmatpush.bf16.msra.mxu0 %v191
    %1008 = vmatpush.bf16.msra.mxu0 %v187
    %1009 = vmatmul.bf16.gmra.mxu0 %v1000
    %v1010 = vpop.f32.mrf.mxu0
    %v1011 = vadd.f32 0.0, %v1010
    %v1012 = vpop.f32.mrf.mxu0
    %1013 = vdwg.mxu0
    %1014 = vmatpush.bf16.msra.mxu0 %v216
    %1015 = vmatpush.bf16.msra.mxu0 %v212
    %1016 = vmatpush.bf16.msra.mxu0 %v208
    %1017 = vmatpush.bf16.msra.mxu0 %v204
    %1018 = vmatpush.bf16.msra.mxu0 %v200
    %1019 = vmatpush.bf16.msra.mxu0 %v196
    %1020 = vmatpush.bf16.msra.mxu0 %v192
    %1021 = vmatpush.bf16.msra.mxu0 %v188
    %1022 = vmatmul.bf16.gmra.mxu0 %v1000
    %v1023 = vpop.f32.mrf.mxu0
    %v1024 = vadd.f32 0.0, %v1023
    %v1025 = vpop.f32.mrf.mxu0
    %1026 = vdwg.mxu0
    %1027 = vmatpush.bf16.msra.mxu0 %v217
    %1028 = vmatpush.bf16.msra.mxu0 %v213
    %1029 = vmatpush.bf16.msra.mxu0 %v209
    %1030 = vmatpush.bf16.msra.mxu0 %v205
    %1031 = vmatpush.bf16.msra.mxu0 %v201
    %1032 = vmatpush.bf16.msra.mxu0 %v197
    %1033 = vmatpush.bf16.msra.mxu0 %v193
    %1034 = vmatpush.bf16.msra.mxu0 %v189
    %1035 = vmatmul.bf16.gmra.mxu0 %v1000
    %v1036 = vpop.f32.mrf.mxu0
    %v1037 = vadd.f32 0.0, %v1036
    %v1038 = vpop.f32.mrf.mxu0
    %1039 = vdwg.mxu0
    %1040 = vmatpush.bf16.msra.mxu0 %v218
    %1041 = vmatpush.bf16.msra.mxu0 %v214
    %1042 = vmatpush.bf16.msra.mxu0 %v210
    %1043 = vmatpush.bf16.msra.mxu0 %v206
    %1044 = vmatpush.bf16.msra.mxu0 %v202
    %1045 = vmatpush.bf16.msra.mxu0 %v198
    %1046 = vmatpush.bf16.msra.mxu0 %v194
    %1047 = vmatpush.bf16.msra.mxu0 %v190
    %1048 = vmatmul.bf16.gmra.mxu0 %v1000
    %v1049 = vpop.f32.mrf.mxu0
    %v1050 = vadd.f32 0.0, %v1049
    %v1051 = vpop.f32.mrf.mxu0
    %1052 = vdwg.mxu0
    %v1053 = vadd.f32 %v996, %v1011
    %v1054 = vadd.f32 %v997, %v1024
    %v1055 = vadd.f32 %v998, %v1037
    %v1056 = vadd.f32 %v999, %v1050
    %v1057 = vxor.u32 %v1053, 2147483648
    %v1058 = vxor.u32 %v1054, 2147483648
    %v1059 = vxor.u32 %v1055, 2147483648
    %v1060 = vmul.f32 %v1057, 1.442695
    %v1061 = vpow.pop %v1060
    %v1062 = vmul.f32 %v1058, 1.442695
    %v1063 = vpow.pop %v1062
    %v1064 = vmul.f32 %v1059, 1.442695
    %v1065 = vpow.pop %v1064
    %v1066 = vadd.f32 %v1061, 1.0
    %v1067 = vadd.f32 %v1063, 1.0
    %v1068 = vadd.f32 %v1065, 1.0
    %v1069 = vrcp.pop %v1066
    %v1070 = vmul.f32 %v1066, %v1069
    %v1071 = vsub.f32 1.0, %v1070
    %v1072 = vmul.f32 %v1069, %v1071
    %v1073 = vadd.f32 %v1069, %v1072
    %vm1074 = vweird.f32 %v1066
    %vm1075 = vweird.f32 %v1069
    %vm1076 = vmor %vm1074, %vm1075
    %v1077 = vsel %vm1076, %v1069, %v1073
    %v1078 = vand.u32 2147483647, %v1066
    %vm1079 = vcmp.eq.f32.partialorder %v1078, 8.507059e+37
    %v1080 = vand.u32 %v1066, 2147483648
    %v1081 = vor.u32 1.1754944e-38, %v1080
    %v1082 = vsel %vm1079, %v1081, %v1077
    %v1083 = vmul.f32 1.0, %v1082
    %v1084 = vrcp.pop %v1067
    %v1085 = vmul.f32 %v1067, %v1084
    %v1086 = vsub.f32 1.0, %v1085
    %v1087 = vmul.f32 %v1084, %v1086
    %v1088 = vadd.f32 %v1084, %v1087
    %vm1089 = vweird.f32 %v1067
    %vm1090 = vweird.f32 %v1084
    %vm1091 = vmor %vm1089, %vm1090
    %v1092 = vsel %vm1091, %v1084, %v1088
    %v1093 = vand.u32 2147483647, %v1067
    %vm1094 = vcmp.eq.f32.partialorder %v1093, 8.507059e+37
    %v1095 = vand.u32 %v1067, 2147483648
    %v1096 = vor.u32 1.1754944e-38, %v1095
    %v1097 = vsel %vm1094, %v1096, %v1092
    %v1098 = vmul.f32 1.0, %v1097
    %v1099 = vrcp.pop %v1068
    %v1100 = vmul.f32 %v1068, %v1099
    %v1101 = vsub.f32 1.0, %v1100
    %v1102 = vmul.f32 %v1099, %v1101
    %v1103 = vadd.f32 %v1099, %v1102
    %vm1104 = vweird.f32 %v1068
    %vm1105 = vweird.f32 %v1099
    %vm1106 = vmor %vm1104, %vm1105
    %v1107 = vsel %vm1106, %v1099, %v1103
    %v1108 = vand.u32 2147483647, %v1068
    %vm1109 = vcmp.eq.f32.partialorder %v1108, 8.507059e+37
    %v1110 = vand.u32 %v1068, 2147483648
    %v1111 = vor.u32 1.1754944e-38, %v1110
    %v1112 = vsel %vm1109, %v1111, %v1107
    %v1113 = vmul.f32 1.0, %v1112
    %v1114 = vtanh.pop %v1056
    %v1115 = vmul.f32 %v1098, %v967
    %v1116 = vmul.f32 %v1083, %v1114
    %v1117 = vadd.f32 %v1115, %v1116
    %v1118 = vtanh.pop %v1117
    %v1119 = vmul.f32 %v1113, %v1118
    %v1121 = vrot.slane %v1119, 1
    %v1122 = vrot.slane %v1119, 2
    %v1123 = vrot.slane %v1119, 3
    %v1124 = vrot.slane %v1119, 4
    %v1125 = vrot.slane %v1119, 5
    %v1126 = vrot.slane %v1119, 6
    %v1127 = vrot.slane %v1119, 7
    %1135 = vst [vmem:[#allocation9 + $0x5] sm:$0x1] %v1119
    %1136 = vst [vmem:[#allocation9 + $0x15] sm:$0x1] %v1121
    %1137 = vst [vmem:[#allocation9 + $0x25] sm:$0x1] %v1122
    %1138 = vst [vmem:[#allocation9 + $0x35] sm:$0x1] %v1123
    %1139 = vst [vmem:[#allocation9 + $0x45] sm:$0x1] %v1124
    %1140 = vst [vmem:[#allocation9 + $0x55] sm:$0x1] %v1125
    %1141 = vst [vmem:[#allocation9 + $0x65] sm:$0x1] %v1126
    %1142 = vst [vmem:[#allocation9 + $0x75] sm:$0x1] %v1127
    %s1143 = scalar_lea.vmem [#allocation4], 96
    %v1144 = vld [vmem:[%s1143] sm:$0xff]
    %v1145 = vld [vmem:[%s1143 + $0x8] sm:$0xff]
    %v1146 = vunpack.c.l.bf16 %v1144
    %v1147 = vunpack.c.h.bf16 %v1144
    %v1148 = vunpack.c.l.bf16 %v1145
    %v1149 = vunpack.c.h.bf16 %v1145
    %v1150 = vpack.c.bf16 %v1119, %v1119
    %1151 = vmatpush.bf16.msra.mxu0 %v215
    %1152 = vmatpush.bf16.msra.mxu0 %v211
    %1153 = vmatpush.bf16.msra.mxu0 %v207
    %1154 = vmatpush.bf16.msra.mxu0 %v203
    %1155 = vmatpush.bf16.msra.mxu0 %v199
    %1156 = vmatpush.bf16.msra.mxu0 %v195
    %1157 = vmatpush.bf16.msra.mxu0 %v191
    %1158 = vmatpush.bf16.msra.mxu0 %v187
    %1159 = vmatmul.bf16.gmra.mxu0 %v1150
    %v1160 = vpop.f32.mrf.mxu0
    %v1161 = vadd.f32 0.0, %v1160
    %v1162 = vpop.f32.mrf.mxu0
    %1163 = vdwg.mxu0
    %1164 = vmatpush.bf16.msra.mxu0 %v216
    %1165 = vmatpush.bf16.msra.mxu0 %v212
    %1166 = vmatpush.bf16.msra.mxu0 %v208
    %1167 = vmatpush.bf16.msra.mxu0 %v204
    %1168 = vmatpush.bf16.msra.mxu0 %v200
    %1169 = vmatpush.bf16.msra.mxu0 %v196
    %1170 = vmatpush.bf16.msra.mxu0 %v192
    %1171 = vmatpush.bf16.msra.mxu0 %v188
    %1172 = vmatmul.bf16.gmra.mxu0 %v1150
    %v1173 = vpop.f32.mrf.mxu0
    %v1174 = vadd.f32 0.0, %v1173
    %v1175 = vpop.f32.mrf.mxu0
    %1176 = vdwg.mxu0
    %1177 = vmatpush.bf16.msra.mxu0 %v217
    %1178 = vmatpush.bf16.msra.mxu0 %v213
    %1179 = vmatpush.bf16.msra.mxu0 %v209
    %1180 = vmatpush.bf16.msra.mxu0 %v205
    %1181 = vmatpush.bf16.msra.mxu0 %v201
    %1182 = vmatpush.bf16.msra.mxu0 %v197
    %1183 = vmatpush.bf16.msra.mxu0 %v193
    %1184 = vmatpush.bf16.msra.mxu0 %v189
    %1185 = vmatmul.bf16.gmra.mxu0 %v1150
    %v1186 = vpop.f32.mrf.mxu0
    %v1187 = vadd.f32 0.0, %v1186
    %v1188 = vpop.f32.mrf.mxu0
    %1189 = vdwg.mxu0
    %1190 = vmatpush.bf16.msra.mxu0 %v218
    %1191 = vmatpush.bf16.msra.mxu0 %v214
    %1192 = vmatpush.bf16.msra.mxu0 %v210
    %1193 = vmatpush.bf16.msra.mxu0 %v206
    %1194 = vmatpush.bf16.msra.mxu0 %v202
    %1195 = vmatpush.bf16.msra.mxu0 %v198
    %1196 = vmatpush.bf16.msra.mxu0 %v194
    %1197 = vmatpush.bf16.msra.mxu0 %v190
    %1198 = vmatmul.bf16.gmra.mxu0 %v1150
    %v1199 = vpop.f32.mrf.mxu0
    %v1200 = vadd.f32 0.0, %v1199
    %v1201 = vpop.f32.mrf.mxu0
    %1202 = vdwg.mxu0
    %v1203 = vadd.f32 %v1146, %v1161
    %v1204 = vadd.f32 %v1147, %v1174
    %v1205 = vadd.f32 %v1148, %v1187
    %v1206 = vadd.f32 %v1149, %v1200
    %v1207 = vxor.u32 %v1203, 2147483648
    %v1208 = vxor.u32 %v1204, 2147483648
    %v1209 = vxor.u32 %v1205, 2147483648
    %v1210 = vmul.f32 %v1207, 1.442695
    %v1211 = vpow.pop %v1210
    %v1212 = vmul.f32 %v1208, 1.442695
    %v1213 = vpow.pop %v1212
    %v1214 = vmul.f32 %v1209, 1.442695
    %v1215 = vpow.pop %v1214
    %v1216 = vadd.f32 %v1211, 1.0
    %v1217 = vadd.f32 %v1213, 1.0
    %v1218 = vadd.f32 %v1215, 1.0
    %v1219 = vrcp.pop %v1216
    %v1220 = vmul.f32 %v1216, %v1219
    %v1221 = vsub.f32 1.0, %v1220
    %v1222 = vmul.f32 %v1219, %v1221
    %v1223 = vadd.f32 %v1219, %v1222
    %vm1224 = vweird.f32 %v1216
    %vm1225 = vweird.f32 %v1219
    %vm1226 = vmor %vm1224, %vm1225
    %v1227 = vsel %vm1226, %v1219, %v1223
    %v1228 = vand.u32 2147483647, %v1216
    %vm1229 = vcmp.eq.f32.partialorder %v1228, 8.507059e+37
    %v1230 = vand.u32 %v1216, 2147483648
    %v1231 = vor.u32 1.1754944e-38, %v1230
    %v1232 = vsel %vm1229, %v1231, %v1227
    %v1233 = vmul.f32 1.0, %v1232
    %v1234 = vrcp.pop %v1217
    %v1235 = vmul.f32 %v1217, %v1234
    %v1236 = vsub.f32 1.0, %v1235
    %v1237 = vmul.f32 %v1234, %v1236
    %v1238 = vadd.f32 %v1234, %v1237
    %vm1239 = vweird.f32 %v1217
    %vm1240 = vweird.f32 %v1234
    %vm1241 = vmor %vm1239, %vm1240
    %v1242 = vsel %vm1241, %v1234, %v1238
    %v1243 = vand.u32 2147483647, %v1217
    %vm1244 = vcmp.eq.f32.partialorder %v1243, 8.507059e+37
    %v1245 = vand.u32 %v1217, 2147483648
    %v1246 = vor.u32 1.1754944e-38, %v1245
    %v1247 = vsel %vm1244, %v1246, %v1242
    %v1248 = vmul.f32 1.0, %v1247
    %v1249 = vrcp.pop %v1218
    %v1250 = vmul.f32 %v1218, %v1249
    %v1251 = vsub.f32 1.0, %v1250
    %v1252 = vmul.f32 %v1249, %v1251
    %v1253 = vadd.f32 %v1249, %v1252
    %vm1254 = vweird.f32 %v1218
    %vm1255 = vweird.f32 %v1249
    %vm1256 = vmor %vm1254, %vm1255
    %v1257 = vsel %vm1256, %v1249, %v1253
    %v1258 = vand.u32 2147483647, %v1218
    %vm1259 = vcmp.eq.f32.partialorder %v1258, 8.507059e+37
    %v1260 = vand.u32 %v1218, 2147483648
    %v1261 = vor.u32 1.1754944e-38, %v1260
    %v1262 = vsel %vm1259, %v1261, %v1257
    %v1263 = vmul.f32 1.0, %v1262
    %v1264 = vtanh.pop %v1206
    %v1265 = vmul.f32 %v1248, %v1117
    %v1266 = vmul.f32 %v1233, %v1264
    %v1267 = vadd.f32 %v1265, %v1266
    %v1268 = vtanh.pop %v1267
    %v1269 = vmul.f32 %v1263, %v1268
    %v1271 = vrot.slane %v1269, 1
    %v1272 = vrot.slane %v1269, 2
    %v1273 = vrot.slane %v1269, 3
    %v1274 = vrot.slane %v1269, 4
    %v1275 = vrot.slane %v1269, 5
    %v1276 = vrot.slane %v1269, 6
    %v1277 = vrot.slane %v1269, 7
    %1285 = vst [vmem:[#allocation9 + $0x6] sm:$0x1] %v1269
    %1286 = vst [vmem:[#allocation9 + $0x16] sm:$0x1] %v1271
    %1287 = vst [vmem:[#allocation9 + $0x26] sm:$0x1] %v1272
    %1288 = vst [vmem:[#allocation9 + $0x36] sm:$0x1] %v1273
    %1289 = vst [vmem:[#allocation9 + $0x46] sm:$0x1] %v1274
    %1290 = vst [vmem:[#allocation9 + $0x56] sm:$0x1] %v1275
    %1291 = vst [vmem:[#allocation9 + $0x66] sm:$0x1] %v1276
    %1292 = vst [vmem:[#allocation9 + $0x76] sm:$0x1] %v1277
    %s1293 = scalar_lea.vmem [#allocation4], 112
    %v1294 = vld [vmem:[%s1293] sm:$0xff]
    %v1295 = vld [vmem:[%s1293 + $0x8] sm:$0xff]
    %v1296 = vunpack.c.l.bf16 %v1294
    %v1297 = vunpack.c.h.bf16 %v1294
    %v1298 = vunpack.c.l.bf16 %v1295
    %v1299 = vunpack.c.h.bf16 %v1295
    %v1300 = vpack.c.bf16 %v1269, %v1269
    %1301 = vmatpush.bf16.msra.mxu0 %v215
    %1302 = vmatpush.bf16.msra.mxu0 %v211
    %1303 = vmatpush.bf16.msra.mxu0 %v207
    %1304 = vmatpush.bf16.msra.mxu0 %v203
    %1305 = vmatpush.bf16.msra.mxu0 %v199
    %1306 = vmatpush.bf16.msra.mxu0 %v195
    %1307 = vmatpush.bf16.msra.mxu0 %v191
    %1308 = vmatpush.bf16.msra.mxu0 %v187
    %1309 = vmatmul.bf16.gmra.mxu0 %v1300
    %v1310 = vpop.f32.mrf.mxu0
    %v1311 = vadd.f32 0.0, %v1310
    %v1312 = vpop.f32.mrf.mxu0
    %1313 = vdwg.mxu0
    %1314 = vmatpush.bf16.msra.mxu0 %v216
    %1315 = vmatpush.bf16.msra.mxu0 %v212
    %1316 = vmatpush.bf16.msra.mxu0 %v208
    %1317 = vmatpush.bf16.msra.mxu0 %v204
    %1318 = vmatpush.bf16.msra.mxu0 %v200
    %1319 = vmatpush.bf16.msra.mxu0 %v196
    %1320 = vmatpush.bf16.msra.mxu0 %v192
    %1321 = vmatpush.bf16.msra.mxu0 %v188
    %1322 = vmatmul.bf16.gmra.mxu0 %v1300
    %v1323 = vpop.f32.mrf.mxu0
    %v1324 = vadd.f32 0.0, %v1323
    %v1325 = vpop.f32.mrf.mxu0
    %1326 = vdwg.mxu0
    %1327 = vmatpush.bf16.msra.mxu0 %v217
    %1328 = vmatpush.bf16.msra.mxu0 %v213
    %1329 = vmatpush.bf16.msra.mxu0 %v209
    %1330 = vmatpush.bf16.msra.mxu0 %v205
    %1331 = vmatpush.bf16.msra.mxu0 %v201
    %1332 = vmatpush.bf16.msra.mxu0 %v197
    %1333 = vmatpush.bf16.msra.mxu0 %v193
    %1334 = vmatpush.bf16.msra.mxu0 %v189
    %1335 = vmatmul.bf16.gmra.mxu0 %v1300
    %v1336 = vpop.f32.mrf.mxu0
    %v1337 = vadd.f32 0.0, %v1336
    %v1338 = vpop.f32.mrf.mxu0
    %1339 = vdwg.mxu0
    %1340 = vmatpush.bf16.msra.mxu0 %v218
    %1341 = vmatpush.bf16.msra.mxu0 %v214
    %1342 = vmatpush.bf16.msra.mxu0 %v210
    %1343 = vmatpush.bf16.msra.mxu0 %v206
    %1344 = vmatpush.bf16.msra.mxu0 %v202
    %1345 = vmatpush.bf16.msra.mxu0 %v198
    %1346 = vmatpush.bf16.msra.mxu0 %v194
    %1347 = vmatpush.bf16.msra.mxu0 %v190
    %1348 = vmatmul.bf16.gmra.mxu0 %v1300
    %v1349 = vpop.f32.mrf.mxu0
    %v1350 = vadd.f32 0.0, %v1349
    %v1351 = vpop.f32.mrf.mxu0
    %1352 = vdwg.mxu0
    %v1353 = vadd.f32 %v1296, %v1311
    %v1354 = vadd.f32 %v1297, %v1324
    %v1355 = vadd.f32 %v1298, %v1337
    %v1356 = vadd.f32 %v1299, %v1350
    %v1357 = vxor.u32 %v1353, 2147483648
    %v1358 = vxor.u32 %v1354, 2147483648
    %v1359 = vxor.u32 %v1355, 2147483648
    %v1360 = vmul.f32 %v1357, 1.442695
    %v1361 = vpow.pop %v1360
    %v1362 = vmul.f32 %v1358, 1.442695
    %v1363 = vpow.pop %v1362
    %v1364 = vmul.f32 %v1359, 1.442695
    %v1365 = vpow.pop %v1364
    %v1366 = vadd.f32 %v1361, 1.0
    %v1367 = vadd.f32 %v1363, 1.0
    %v1368 = vadd.f32 %v1365, 1.0
    %v1369 = vrcp.pop %v1366
    %v1370 = vmul.f32 %v1366, %v1369
    %v1371 = vsub.f32 1.0, %v1370
    %v1372 = vmul.f32 %v1369, %v1371
    %v1373 = vadd.f32 %v1369, %v1372
    %vm1374 = vweird.f32 %v1366
    %vm1375 = vweird.f32 %v1369
    %vm1376 = vmor %vm1374, %vm1375
    %v1377 = vsel %vm1376, %v1369, %v1373
    %v1378 = vand.u32 2147483647, %v1366
    %vm1379 = vcmp.eq.f32.partialorder %v1378, 8.507059e+37
    %v1380 = vand.u32 %v1366, 2147483648
    %v1381 = vor.u32 1.1754944e-38, %v1380
    %v1382 = vsel %vm1379, %v1381, %v1377
    %v1383 = vmul.f32 1.0, %v1382
    %v1384 = vrcp.pop %v1367
    %v1385 = vmul.f32 %v1367, %v1384
    %v1386 = vsub.f32 1.0, %v1385
    %v1387 = vmul.f32 %v1384, %v1386
    %v1388 = vadd.f32 %v1384, %v1387
    %vm1389 = vweird.f32 %v1367
    %vm1390 = vweird.f32 %v1384
    %vm1391 = vmor %vm1389, %vm1390
    %v1392 = vsel %vm1391, %v1384, %v1388
    %v1393 = vand.u32 2147483647, %v1367
    %vm1394 = vcmp.eq.f32.partialorder %v1393, 8.507059e+37
    %v1395 = vand.u32 %v1367, 2147483648
    %v1396 = vor.u32 1.1754944e-38, %v1395
    %v1397 = vsel %vm1394, %v1396, %v1392
    %v1398 = vmul.f32 1.0, %v1397
    %v1399 = vrcp.pop %v1368
    %v1400 = vmul.f32 %v1368, %v1399
    %v1401 = vsub.f32 1.0, %v1400
    %v1402 = vmul.f32 %v1399, %v1401
    %v1403 = vadd.f32 %v1399, %v1402
    %vm1404 = vweird.f32 %v1368
    %vm1405 = vweird.f32 %v1399
    %vm1406 = vmor %vm1404, %vm1405
    %v1407 = vsel %vm1406, %v1399, %v1403
    %v1408 = vand.u32 2147483647, %v1368
    %vm1409 = vcmp.eq.f32.partialorder %v1408, 8.507059e+37
    %v1410 = vand.u32 %v1368, 2147483648
    %v1411 = vor.u32 1.1754944e-38, %v1410
    %v1412 = vsel %vm1409, %v1411, %v1407
    %v1413 = vmul.f32 1.0, %v1412
    %v1414 = vtanh.pop %v1356
    %v1415 = vmul.f32 %v1398, %v1267
    %v1416 = vmul.f32 %v1383, %v1414
    %v1417 = vadd.f32 %v1415, %v1416
    %v1418 = vtanh.pop %v1417
    %v1419 = vmul.f32 %v1413, %v1418
    %v1421 = vrot.slane %v1419, 1
    %v1422 = vrot.slane %v1419, 2
    %v1423 = vrot.slane %v1419, 3
    %v1424 = vrot.slane %v1419, 4
    %v1425 = vrot.slane %v1419, 5
    %v1426 = vrot.slane %v1419, 6
    %v1427 = vrot.slane %v1419, 7
    %1435 = vst [vmem:[#allocation9 + $0x7] sm:$0x1] %v1419
    %1436 = vst [vmem:[#allocation9 + $0x17] sm:$0x1] %v1421
    %1437 = vst [vmem:[#allocation9 + $0x27] sm:$0x1] %v1422
    %1438 = vst [vmem:[#allocation9 + $0x37] sm:$0x1] %v1423
    %1439 = vst [vmem:[#allocation9 + $0x47] sm:$0x1] %v1424
    %1440 = vst [vmem:[#allocation9 + $0x57] sm:$0x1] %v1425
    %1441 = vst [vmem:[#allocation9 + $0x67] sm:$0x1] %v1426
    %1442 = vst [vmem:[#allocation9 + $0x77] sm:$0x1] %v1427
    %s1443 = scalar_lea.vmem [#allocation4], 128
    %v1444 = vld [vmem:[%s1443] sm:$0xff]
    %v1445 = vld [vmem:[%s1443 + $0x8] sm:$0xff]
    %v1446 = vunpack.c.l.bf16 %v1444
    %v1447 = vunpack.c.h.bf16 %v1444
    %v1448 = vunpack.c.l.bf16 %v1445
    %v1449 = vunpack.c.h.bf16 %v1445
    %v1450 = vpack.c.bf16 %v1419, %v1419
    %1451 = vmatpush.bf16.msra.mxu0 %v215
    %1452 = vmatpush.bf16.msra.mxu0 %v211
    %1453 = vmatpush.bf16.msra.mxu0 %v207
    %1454 = vmatpush.bf16.msra.mxu0 %v203
    %1455 = vmatpush.bf16.msra.mxu0 %v199
    %1456 = vmatpush.bf16.msra.mxu0 %v195
    %1457 = vmatpush.bf16.msra.mxu0 %v191
    %1458 = vmatpush.bf16.msra.mxu0 %v187
    %1459 = vmatmul.bf16.gmra.mxu0 %v1450
    %v1460 = vpop.f32.mrf.mxu0
    %v1461 = vadd.f32 0.0, %v1460
    %v1462 = vpop.f32.mrf.mxu0
    %1463 = vdwg.mxu0
    %1464 = vmatpush.bf16.msra.mxu0 %v216
    %1465 = vmatpush.bf16.msra.mxu0 %v212
    %1466 = vmatpush.bf16.msra.mxu0 %v208
    %1467 = vmatpush.bf16.msra.mxu0 %v204
    %1468 = vmatpush.bf16.msra.mxu0 %v200
    %1469 = vmatpush.bf16.msra.mxu0 %v196
    %1470 = vmatpush.bf16.msra.mxu0 %v192
    %1471 = vmatpush.bf16.msra.mxu0 %v188
    %1472 = vmatmul.bf16.gmra.mxu0 %v1450
    %v1473 = vpop.f32.mrf.mxu0
    %v1474 = vadd.f32 0.0, %v1473
    %v1475 = vpop.f32.mrf.mxu0
    %1476 = vdwg.mxu0
    %1477 = vmatpush.bf16.msra.mxu0 %v217
    %1478 = vmatpush.bf16.msra.mxu0 %v213
    %1479 = vmatpush.bf16.msra.mxu0 %v209
    %1480 = vmatpush.bf16.msra.mxu0 %v205
    %1481 = vmatpush.bf16.msra.mxu0 %v201
    %1482 = vmatpush.bf16.msra.mxu0 %v197
    %1483 = vmatpush.bf16.msra.mxu0 %v193
    %1484 = vmatpush.bf16.msra.mxu0 %v189
    %1485 = vmatmul.bf16.gmra.mxu0 %v1450
    %v1486 = vpop.f32.mrf.mxu0
    %v1487 = vadd.f32 0.0, %v1486
    %v1488 = vpop.f32.mrf.mxu0
    %1489 = vdwg.mxu0
    %1490 = vmatpush.bf16.msra.mxu0 %v218
    %1491 = vmatpush.bf16.msra.mxu0 %v214
    %1492 = vmatpush.bf16.msra.mxu0 %v210
    %1493 = vmatpush.bf16.msra.mxu0 %v206
    %1494 = vmatpush.bf16.msra.mxu0 %v202
    %1495 = vmatpush.bf16.msra.mxu0 %v198
    %1496 = vmatpush.bf16.msra.mxu0 %v194
    %1497 = vmatpush.bf16.msra.mxu0 %v190
    %1498 = vmatmul.bf16.gmra.mxu0 %v1450
    %v1499 = vpop.f32.mrf.mxu0
    %v1500 = vadd.f32 0.0, %v1499
    %v1501 = vpop.f32.mrf.mxu0
    %1502 = vdwg.mxu0
    %v1503 = vadd.f32 %v1446, %v1461
    %v1504 = vadd.f32 %v1447, %v1474
    %v1505 = vadd.f32 %v1448, %v1487
    %v1506 = vadd.f32 %v1449, %v1500
    %v1507 = vxor.u32 %v1503, 2147483648
    %v1508 = vxor.u32 %v1504, 2147483648
    %v1509 = vxor.u32 %v1505, 2147483648
    %v1510 = vmul.f32 %v1507, 1.442695
    %v1511 = vpow.pop %v1510
    %v1512 = vmul.f32 %v1508, 1.442695
    %v1513 = vpow.pop %v1512
    %v1514 = vmul.f32 %v1509, 1.442695
    %v1515 = vpow.pop %v1514
    %v1516 = vadd.f32 %v1511, 1.0
    %v1517 = vadd.f32 %v1513, 1.0
    %v1518 = vadd.f32 %v1515, 1.0
    %v1519 = vrcp.pop %v1516
    %v1520 = vmul.f32 %v1516, %v1519
    %v1521 = vsub.f32 1.0, %v1520
    %v1522 = vmul.f32 %v1519, %v1521
    %v1523 = vadd.f32 %v1519, %v1522
    %vm1524 = vweird.f32 %v1516
    %vm1525 = vweird.f32 %v1519
    %vm1526 = vmor %vm1524, %vm1525
    %v1527 = vsel %vm1526, %v1519, %v1523
    %v1528 = vand.u32 2147483647, %v1516
    %vm1529 = vcmp.eq.f32.partialorder %v1528, 8.507059e+37
    %v1530 = vand.u32 %v1516, 2147483648
    %v1531 = vor.u32 1.1754944e-38, %v1530
    %v1532 = vsel %vm1529, %v1531, %v1527
    %v1533 = vmul.f32 1.0, %v1532
    %v1534 = vrcp.pop %v1517
    %v1535 = vmul.f32 %v1517, %v1534
    %v1536 = vsub.f32 1.0, %v1535
    %v1537 = vmul.f32 %v1534, %v1536
    %v1538 = vadd.f32 %v1534, %v1537
    %vm1539 = vweird.f32 %v1517
    %vm1540 = vweird.f32 %v1534
    %vm1541 = vmor %vm1539, %vm1540
    %v1542 = vsel %vm1541, %v1534, %v1538
    %v1543 = vand.u32 2147483647, %v1517
    %vm1544 = vcmp.eq.f32.partialorder %v1543, 8.507059e+37
    %v1545 = vand.u32 %v1517, 2147483648
    %v1546 = vor.u32 1.1754944e-38, %v1545
    %v1547 = vsel %vm1544, %v1546, %v1542
    %v1548 = vmul.f32 1.0, %v1547
    %v1549 = vrcp.pop %v1518
    %v1550 = vmul.f32 %v1518, %v1549
    %v1551 = vsub.f32 1.0, %v1550
    %v1552 = vmul.f32 %v1549, %v1551
    %v1553 = vadd.f32 %v1549, %v1552
    %vm1554 = vweird.f32 %v1518
    %vm1555 = vweird.f32 %v1549
    %vm1556 = vmor %vm1554, %vm1555
    %v1557 = vsel %vm1556, %v1549, %v1553
    %v1558 = vand.u32 2147483647, %v1518
    %vm1559 = vcmp.eq.f32.partialorder %v1558, 8.507059e+37
    %v1560 = vand.u32 %v1518, 2147483648
    %v1561 = vor.u32 1.1754944e-38, %v1560
    %v1562 = vsel %vm1559, %v1561, %v1557
    %v1563 = vmul.f32 1.0, %v1562
    %v1564 = vtanh.pop %v1506
    %v1565 = vmul.f32 %v1548, %v1417
    %v1566 = vmul.f32 %v1533, %v1564
    %v1567 = vadd.f32 %v1565, %v1566
    %v1568 = vtanh.pop %v1567
    %v1569 = vmul.f32 %v1563, %v1568
    %v1571 = vrot.slane %v1569, 1
    %v1572 = vrot.slane %v1569, 2
    %v1573 = vrot.slane %v1569, 3
    %v1574 = vrot.slane %v1569, 4
    %v1575 = vrot.slane %v1569, 5
    %v1576 = vrot.slane %v1569, 6
    %v1577 = vrot.slane %v1569, 7
    %1585 = vst [vmem:[#allocation9 + $0x8] sm:$0x1] %v1569
    %1586 = vst [vmem:[#allocation9 + $0x18] sm:$0x1] %v1571
    %1587 = vst [vmem:[#allocation9 + $0x28] sm:$0x1] %v1572
    %1588 = vst [vmem:[#allocation9 + $0x38] sm:$0x1] %v1573
    %1589 = vst [vmem:[#allocation9 + $0x48] sm:$0x1] %v1574
    %1590 = vst [vmem:[#allocation9 + $0x58] sm:$0x1] %v1575
    %1591 = vst [vmem:[#allocation9 + $0x68] sm:$0x1] %v1576
    %1592 = vst [vmem:[#allocation9 + $0x78] sm:$0x1] %v1577
    %s1593 = scalar_lea.vmem [#allocation4], 144
    %v1594 = vld [vmem:[%s1593] sm:$0xff]
    %v1595 = vld [vmem:[%s1593 + $0x8] sm:$0xff]
    %v1596 = vunpack.c.l.bf16 %v1594
    %v1597 = vunpack.c.h.bf16 %v1594
    %v1598 = vunpack.c.l.bf16 %v1595
    %v1599 = vunpack.c.h.bf16 %v1595
    %v1600 = vpack.c.bf16 %v1569, %v1569
    %1601 = vmatpush.bf16.msra.mxu0 %v215
    %1602 = vmatpush.bf16.msra.mxu0 %v211
    %1603 = vmatpush.bf16.msra.mxu0 %v207
    %1604 = vmatpush.bf16.msra.mxu0 %v203
    %1605 = vmatpush.bf16.msra.mxu0 %v199
    %1606 = vmatpush.bf16.msra.mxu0 %v195
    %1607 = vmatpush.bf16.msra.mxu0 %v191
    %1608 = vmatpush.bf16.msra.mxu0 %v187
    %1609 = vmatmul.bf16.gmra.mxu0 %v1600
    %v1610 = vpop.f32.mrf.mxu0
    %v1611 = vadd.f32 0.0, %v1610
    %v1612 = vpop.f32.mrf.mxu0
    %1613 = vdwg.mxu0
    %1614 = vmatpush.bf16.msra.mxu0 %v216
    %1615 = vmatpush.bf16.msra.mxu0 %v212
    %1616 = vmatpush.bf16.msra.mxu0 %v208
    %1617 = vmatpush.bf16.msra.mxu0 %v204
    %1618 = vmatpush.bf16.msra.mxu0 %v200
    %1619 = vmatpush.bf16.msra.mxu0 %v196
    %1620 = vmatpush.bf16.msra.mxu0 %v192
    %1621 = vmatpush.bf16.msra.mxu0 %v188
    %1622 = vmatmul.bf16.gmra.mxu0 %v1600
    %v1623 = vpop.f32.mrf.mxu0
    %v1624 = vadd.f32 0.0, %v1623
    %v1625 = vpop.f32.mrf.mxu0
    %1626 = vdwg.mxu0
    %1627 = vmatpush.bf16.msra.mxu0 %v217
    %1628 = vmatpush.bf16.msra.mxu0 %v213
    %1629 = vmatpush.bf16.msra.mxu0 %v209
    %1630 = vmatpush.bf16.msra.mxu0 %v205
    %1631 = vmatpush.bf16.msra.mxu0 %v201
    %1632 = vmatpush.bf16.msra.mxu0 %v197
    %1633 = vmatpush.bf16.msra.mxu0 %v193
    %1634 = vmatpush.bf16.msra.mxu0 %v189
    %1635 = vmatmul.bf16.gmra.mxu0 %v1600
    %v1636 = vpop.f32.mrf.mxu0
    %v1637 = vadd.f32 0.0, %v1636
    %v1638 = vpop.f32.mrf.mxu0
    %1639 = vdwg.mxu0
    %1640 = vmatpush.bf16.msra.mxu0 %v218
    %1641 = vmatpush.bf16.msra.mxu0 %v214
    %1642 = vmatpush.bf16.msra.mxu0 %v210
    %1643 = vmatpush.bf16.msra.mxu0 %v206
    %1644 = vmatpush.bf16.msra.mxu0 %v202
    %1645 = vmatpush.bf16.msra.mxu0 %v198
    %1646 = vmatpush.bf16.msra.mxu0 %v194
    %1647 = vmatpush.bf16.msra.mxu0 %v190
    %1648 = vmatmul.bf16.gmra.mxu0 %v1600
    %v1649 = vpop.f32.mrf.mxu0
    %v1650 = vadd.f32 0.0, %v1649
    %v1651 = vpop.f32.mrf.mxu0
    %1652 = vdwg.mxu0
    %v1653 = vadd.f32 %v1596, %v1611
    %v1654 = vadd.f32 %v1597, %v1624
    %v1655 = vadd.f32 %v1598, %v1637
    %v1656 = vadd.f32 %v1599, %v1650
    %v1657 = vxor.u32 %v1653, 2147483648
    %v1658 = vxor.u32 %v1654, 2147483648
    %v1659 = vxor.u32 %v1655, 2147483648
    %v1660 = vmul.f32 %v1657, 1.442695
    %v1661 = vpow.pop %v1660
    %v1662 = vmul.f32 %v1658, 1.442695
    %v1663 = vpow.pop %v1662
    %v1664 = vmul.f32 %v1659, 1.442695
    %v1665 = vpow.pop %v1664
    %v1666 = vadd.f32 %v1661, 1.0
    %v1667 = vadd.f32 %v1663, 1.0
    %v1668 = vadd.f32 %v1665, 1.0
    %v1669 = vrcp.pop %v1666
    %v1670 = vmul.f32 %v1666, %v1669
    %v1671 = vsub.f32 1.0, %v1670
    %v1672 = vmul.f32 %v1669, %v1671
    %v1673 = vadd.f32 %v1669, %v1672
    %vm1674 = vweird.f32 %v1666
    %vm1675 = vweird.f32 %v1669
    %vm1676 = vmor %vm1674, %vm1675
    %v1677 = vsel %vm1676, %v1669, %v1673
    %v1678 = vand.u32 2147483647, %v1666
    %vm1679 = vcmp.eq.f32.partialorder %v1678, 8.507059e+37
    %v1680 = vand.u32 %v1666, 2147483648
    %v1681 = vor.u32 1.1754944e-38, %v1680
    %v1682 = vsel %vm1679, %v1681, %v1677
    %v1683 = vmul.f32 1.0, %v1682
    %v1684 = vrcp.pop %v1667
    %v1685 = vmul.f32 %v1667, %v1684
    %v1686 = vsub.f32 1.0, %v1685
    %v1687 = vmul.f32 %v1684, %v1686
    %v1688 = vadd.f32 %v1684, %v1687
    %vm1689 = vweird.f32 %v1667
    %vm1690 = vweird.f32 %v1684
    %vm1691 = vmor %vm1689, %vm1690
    %v1692 = vsel %vm1691, %v1684, %v1688
    %v1693 = vand.u32 2147483647, %v1667
    %vm1694 = vcmp.eq.f32.partialorder %v1693, 8.507059e+37
    %v1695 = vand.u32 %v1667, 2147483648
    %v1696 = vor.u32 1.1754944e-38, %v1695
    %v1697 = vsel %vm1694, %v1696, %v1692
    %v1698 = vmul.f32 1.0, %v1697
    %v1699 = vrcp.pop %v1668
    %v1700 = vmul.f32 %v1668, %v1699
    %v1701 = vsub.f32 1.0, %v1700
    %v1702 = vmul.f32 %v1699, %v1701
    %v1703 = vadd.f32 %v1699, %v1702
    %vm1704 = vweird.f32 %v1668
    %vm1705 = vweird.f32 %v1699
    %vm1706 = vmor %vm1704, %vm1705
    %v1707 = vsel %vm1706, %v1699, %v1703
    %v1708 = vand.u32 2147483647, %v1668
    %vm1709 = vcmp.eq.f32.partialorder %v1708, 8.507059e+37
    %v1710 = vand.u32 %v1668, 2147483648
    %v1711 = vor.u32 1.1754944e-38, %v1710
    %v1712 = vsel %vm1709, %v1711, %v1707
    %v1713 = vmul.f32 1.0, %v1712
    %v1714 = vtanh.pop %v1656
    %v1715 = vmul.f32 %v1698, %v1567
    %v1716 = vmul.f32 %v1683, %v1714
    %v1717 = vadd.f32 %v1715, %v1716
    %v1718 = vtanh.pop %v1717
    %v1719 = vmul.f32 %v1713, %v1718
    %v1721 = vrot.slane %v1719, 1
    %v1722 = vrot.slane %v1719, 2
    %v1723 = vrot.slane %v1719, 3
    %v1724 = vrot.slane %v1719, 4
    %v1725 = vrot.slane %v1719, 5
    %v1726 = vrot.slane %v1719, 6
    %v1727 = vrot.slane %v1719, 7
    %1735 = vst [vmem:[#allocation9 + $0x9] sm:$0x1] %v1719
    %1736 = vst [vmem:[#allocation9 + $0x19] sm:$0x1] %v1721
    %1737 = vst [vmem:[#allocation9 + $0x29] sm:$0x1] %v1722
    %1738 = vst [vmem:[#allocation9 + $0x39] sm:$0x1] %v1723
    %1739 = vst [vmem:[#allocation9 + $0x49] sm:$0x1] %v1724
    %1740 = vst [vmem:[#allocation9 + $0x59] sm:$0x1] %v1725
    %1741 = vst [vmem:[#allocation9 + $0x69] sm:$0x1] %v1726
    %1742 = vst [vmem:[#allocation9 + $0x79] sm:$0x1] %v1727
    %s1743 = scalar_lea.vmem [#allocation4], 160
    %v1744 = vld [vmem:[%s1743] sm:$0xff]
    %v1745 = vld [vmem:[%s1743 + $0x8] sm:$0xff]
    %v1746 = vunpack.c.l.bf16 %v1744
    %v1747 = vunpack.c.h.bf16 %v1744
    %v1748 = vunpack.c.l.bf16 %v1745
    %v1749 = vunpack.c.h.bf16 %v1745
    %v1750 = vpack.c.bf16 %v1719, %v1719
    %1751 = vmatpush.bf16.msra.mxu0 %v215
    %1752 = vmatpush.bf16.msra.mxu0 %v211
    %1753 = vmatpush.bf16.msra.mxu0 %v207
    %1754 = vmatpush.bf16.msra.mxu0 %v203
    %1755 = vmatpush.bf16.msra.mxu0 %v199
    %1756 = vmatpush.bf16.msra.mxu0 %v195
    %1757 = vmatpush.bf16.msra.mxu0 %v191
    %1758 = vmatpush.bf16.msra.mxu0 %v187
    %1759 = vmatmul.bf16.gmra.mxu0 %v1750
    %v1760 = vpop.f32.mrf.mxu0
    %v1761 = vadd.f32 0.0, %v1760
    %v1762 = vpop.f32.mrf.mxu0
    %1763 = vdwg.mxu0
    %1764 = vmatpush.bf16.msra.mxu0 %v216
    %1765 = vmatpush.bf16.msra.mxu0 %v212
    %1766 = vmatpush.bf16.msra.mxu0 %v208
    %1767 = vmatpush.bf16.msra.mxu0 %v204
    %1768 = vmatpush.bf16.msra.mxu0 %v200
    %1769 = vmatpush.bf16.msra.mxu0 %v196
    %1770 = vmatpush.bf16.msra.mxu0 %v192
    %1771 = vmatpush.bf16.msra.mxu0 %v188
    %1772 = vmatmul.bf16.gmra.mxu0 %v1750
    %v1773 = vpop.f32.mrf.mxu0
    %v1774 = vadd.f32 0.0, %v1773
    %v1775 = vpop.f32.mrf.mxu0
    %1776 = vdwg.mxu0
    %1777 = vmatpush.bf16.msra.mxu0 %v217
    %1778 = vmatpush.bf16.msra.mxu0 %v213
    %1779 = vmatpush.bf16.msra.mxu0 %v209
    %1780 = vmatpush.bf16.msra.mxu0 %v205
    %1781 = vmatpush.bf16.msra.mxu0 %v201
    %1782 = vmatpush.bf16.msra.mxu0 %v197
    %1783 = vmatpush.bf16.msra.mxu0 %v193
    %1784 = vmatpush.bf16.msra.mxu0 %v189
    %1785 = vmatmul.bf16.gmra.mxu0 %v1750
    %v1786 = vpop.f32.mrf.mxu0
    %v1787 = vadd.f32 0.0, %v1786
    %v1788 = vpop.f32.mrf.mxu0
    %1789 = vdwg.mxu0
    %1790 = vmatpush.bf16.msra.mxu0 %v218
    %1791 = vmatpush.bf16.msra.mxu0 %v214
    %1792 = vmatpush.bf16.msra.mxu0 %v210
    %1793 = vmatpush.bf16.msra.mxu0 %v206
    %1794 = vmatpush.bf16.msra.mxu0 %v202
    %1795 = vmatpush.bf16.msra.mxu0 %v198
    %1796 = vmatpush.bf16.msra.mxu0 %v194
    %1797 = vmatpush.bf16.msra.mxu0 %v190
    %1798 = vmatmul.bf16.gmra.mxu0 %v1750
    %v1799 = vpop.f32.mrf.mxu0
    %v1800 = vadd.f32 0.0, %v1799
    %v1801 = vpop.f32.mrf.mxu0
    %1802 = vdwg.mxu0
    %v1803 = vadd.f32 %v1746, %v1761
    %v1804 = vadd.f32 %v1747, %v1774
    %v1805 = vadd.f32 %v1748, %v1787
    %v1806 = vadd.f32 %v1749, %v1800
    %v1807 = vxor.u32 %v1803, 2147483648
    %v1808 = vxor.u32 %v1804, 2147483648
    %v1809 = vxor.u32 %v1805, 2147483648
    %v1810 = vmul.f32 %v1807, 1.442695
    %v1811 = vpow.pop %v1810
    %v1812 = vmul.f32 %v1808, 1.442695
    %v1813 = vpow.pop %v1812
    %v1814 = vmul.f32 %v1809, 1.442695
    %v1815 = vpow.pop %v1814
    %v1816 = vadd.f32 %v1811, 1.0
    %v1817 = vadd.f32 %v1813, 1.0
    %v1818 = vadd.f32 %v1815, 1.0
    %v1819 = vrcp.pop %v1816
    %v1820 = vmul.f32 %v1816, %v1819
    %v1821 = vsub.f32 1.0, %v1820
    %v1822 = vmul.f32 %v1819, %v1821
    %v1823 = vadd.f32 %v1819, %v1822
    %vm1824 = vweird.f32 %v1816
    %vm1825 = vweird.f32 %v1819
    %vm1826 = vmor %vm1824, %vm1825
    %v1827 = vsel %vm1826, %v1819, %v1823
    %v1828 = vand.u32 2147483647, %v1816
    %vm1829 = vcmp.eq.f32.partialorder %v1828, 8.507059e+37
    %v1830 = vand.u32 %v1816, 2147483648
    %v1831 = vor.u32 1.1754944e-38, %v1830
    %v1832 = vsel %vm1829, %v1831, %v1827
    %v1833 = vmul.f32 1.0, %v1832
    %v1834 = vrcp.pop %v1817
    %v1835 = vmul.f32 %v1817, %v1834
    %v1836 = vsub.f32 1.0, %v1835
    %v1837 = vmul.f32 %v1834, %v1836
    %v1838 = vadd.f32 %v1834, %v1837
    %vm1839 = vweird.f32 %v1817
    %vm1840 = vweird.f32 %v1834
    %vm1841 = vmor %vm1839, %vm1840
    %v1842 = vsel %vm1841, %v1834, %v1838
    %v1843 = vand.u32 2147483647, %v1817
    %vm1844 = vcmp.eq.f32.partialorder %v1843, 8.507059e+37
    %v1845 = vand.u32 %v1817, 2147483648
    %v1846 = vor.u32 1.1754944e-38, %v1845
    %v1847 = vsel %vm1844, %v1846, %v1842
    %v1848 = vmul.f32 1.0, %v1847
    %v1849 = vrcp.pop %v1818
    %v1850 = vmul.f32 %v1818, %v1849
    %v1851 = vsub.f32 1.0, %v1850
    %v1852 = vmul.f32 %v1849, %v1851
    %v1853 = vadd.f32 %v1849, %v1852
    %vm1854 = vweird.f32 %v1818
    %vm1855 = vweird.f32 %v1849
    %vm1856 = vmor %vm1854, %vm1855
    %v1857 = vsel %vm1856, %v1849, %v1853
    %v1858 = vand.u32 2147483647, %v1818
    %vm1859 = vcmp.eq.f32.partialorder %v1858, 8.507059e+37
    %v1860 = vand.u32 %v1818, 2147483648
    %v1861 = vor.u32 1.1754944e-38, %v1860
    %v1862 = vsel %vm1859, %v1861, %v1857
    %v1863 = vmul.f32 1.0, %v1862
    %v1864 = vtanh.pop %v1806
    %v1865 = vmul.f32 %v1848, %v1717
    %v1866 = vmul.f32 %v1833, %v1864
    %v1867 = vadd.f32 %v1865, %v1866
    %v1868 = vtanh.pop %v1867
    %v1869 = vmul.f32 %v1863, %v1868
    %v1871 = vrot.slane %v1869, 1
    %v1872 = vrot.slane %v1869, 2
    %v1873 = vrot.slane %v1869, 3
    %v1874 = vrot.slane %v1869, 4
    %v1875 = vrot.slane %v1869, 5
    %v1876 = vrot.slane %v1869, 6
    %v1877 = vrot.slane %v1869, 7
    %1885 = vst [vmem:[#allocation9 + $0xa] sm:$0x1] %v1869
    %1886 = vst [vmem:[#allocation9 + $0x1a] sm:$0x1] %v1871
    %1887 = vst [vmem:[#allocation9 + $0x2a] sm:$0x1] %v1872
    %1888 = vst [vmem:[#allocation9 + $0x3a] sm:$0x1] %v1873
    %1889 = vst [vmem:[#allocation9 + $0x4a] sm:$0x1] %v1874
    %1890 = vst [vmem:[#allocation9 + $0x5a] sm:$0x1] %v1875
    %1891 = vst [vmem:[#allocation9 + $0x6a] sm:$0x1] %v1876
    %1892 = vst [vmem:[#allocation9 + $0x7a] sm:$0x1] %v1877
    %s1893 = scalar_lea.vmem [#allocation4], 176
    %v1894 = vld [vmem:[%s1893] sm:$0xff]
    %v1895 = vld [vmem:[%s1893 + $0x8] sm:$0xff]
    %v1896 = vunpack.c.l.bf16 %v1894
    %v1897 = vunpack.c.h.bf16 %v1894
    %v1898 = vunpack.c.l.bf16 %v1895
    %v1899 = vunpack.c.h.bf16 %v1895
    %v1900 = vpack.c.bf16 %v1869, %v1869
    %1901 = vmatpush.bf16.msra.mxu0 %v215
    %1902 = vmatpush.bf16.msra.mxu0 %v211
    %1903 = vmatpush.bf16.msra.mxu0 %v207
    %1904 = vmatpush.bf16.msra.mxu0 %v203
    %1905 = vmatpush.bf16.msra.mxu0 %v199
    %1906 = vmatpush.bf16.msra.mxu0 %v195
    %1907 = vmatpush.bf16.msra.mxu0 %v191
    %1908 = vmatpush.bf16.msra.mxu0 %v187
    %1909 = vmatmul.bf16.gmra.mxu0 %v1900
    %v1910 = vpop.f32.mrf.mxu0
    %v1911 = vadd.f32 0.0, %v1910
    %v1912 = vpop.f32.mrf.mxu0
    %1913 = vdwg.mxu0
    %1914 = vmatpush.bf16.msra.mxu0 %v216
    %1915 = vmatpush.bf16.msra.mxu0 %v212
    %1916 = vmatpush.bf16.msra.mxu0 %v208
    %1917 = vmatpush.bf16.msra.mxu0 %v204
    %1918 = vmatpush.bf16.msra.mxu0 %v200
    %1919 = vmatpush.bf16.msra.mxu0 %v196
    %1920 = vmatpush.bf16.msra.mxu0 %v192
    %1921 = vmatpush.bf16.msra.mxu0 %v188
    %1922 = vmatmul.bf16.gmra.mxu0 %v1900
    %v1923 = vpop.f32.mrf.mxu0
    %v1924 = vadd.f32 0.0, %v1923
    %v1925 = vpop.f32.mrf.mxu0
    %1926 = vdwg.mxu0
    %1927 = vmatpush.bf16.msra.mxu0 %v217
    %1928 = vmatpush.bf16.msra.mxu0 %v213
    %1929 = vmatpush.bf16.msra.mxu0 %v209
    %1930 = vmatpush.bf16.msra.mxu0 %v205
    %1931 = vmatpush.bf16.msra.mxu0 %v201
    %1932 = vmatpush.bf16.msra.mxu0 %v197
    %1933 = vmatpush.bf16.msra.mxu0 %v193
    %1934 = vmatpush.bf16.msra.mxu0 %v189
    %1935 = vmatmul.bf16.gmra.mxu0 %v1900
    %v1936 = vpop.f32.mrf.mxu0
    %v1937 = vadd.f32 0.0, %v1936
    %v1938 = vpop.f32.mrf.mxu0
    %1939 = vdwg.mxu0
    %1940 = vmatpush.bf16.msra.mxu0 %v218
    %1941 = vmatpush.bf16.msra.mxu0 %v214
    %1942 = vmatpush.bf16.msra.mxu0 %v210
    %1943 = vmatpush.bf16.msra.mxu0 %v206
    %1944 = vmatpush.bf16.msra.mxu0 %v202
    %1945 = vmatpush.bf16.msra.mxu0 %v198
    %1946 = vmatpush.bf16.msra.mxu0 %v194
    %1947 = vmatpush.bf16.msra.mxu0 %v190
    %1948 = vmatmul.bf16.gmra.mxu0 %v1900
    %v1949 = vpop.f32.mrf.mxu0
    %v1950 = vadd.f32 0.0, %v1949
    %v1951 = vpop.f32.mrf.mxu0
    %1952 = vdwg.mxu0
    %v1953 = vadd.f32 %v1896, %v1911
    %v1954 = vadd.f32 %v1897, %v1924
    %v1955 = vadd.f32 %v1898, %v1937
    %v1956 = vadd.f32 %v1899, %v1950
    %v1957 = vxor.u32 %v1953, 2147483648
    %v1958 = vxor.u32 %v1954, 2147483648
    %v1959 = vxor.u32 %v1955, 2147483648
    %v1960 = vmul.f32 %v1957, 1.442695
    %v1961 = vpow.pop %v1960
    %v1962 = vmul.f32 %v1958, 1.442695
    %v1963 = vpow.pop %v1962
    %v1964 = vmul.f32 %v1959, 1.442695
    %v1965 = vpow.pop %v1964
    %v1966 = vadd.f32 %v1961, 1.0
    %v1967 = vadd.f32 %v1963, 1.0
    %v1968 = vadd.f32 %v1965, 1.0
    %v1969 = vrcp.pop %v1966
    %v1970 = vmul.f32 %v1966, %v1969
    %v1971 = vsub.f32 1.0, %v1970
    %v1972 = vmul.f32 %v1969, %v1971
    %v1973 = vadd.f32 %v1969, %v1972
    %vm1974 = vweird.f32 %v1966
    %vm1975 = vweird.f32 %v1969
    %vm1976 = vmor %vm1974, %vm1975
    %v1977 = vsel %vm1976, %v1969, %v1973
    %v1978 = vand.u32 2147483647, %v1966
    %vm1979 = vcmp.eq.f32.partialorder %v1978, 8.507059e+37
    %v1980 = vand.u32 %v1966, 2147483648
    %v1981 = vor.u32 1.1754944e-38, %v1980
    %v1982 = vsel %vm1979, %v1981, %v1977
    %v1983 = vmul.f32 1.0, %v1982
    %v1984 = vrcp.pop %v1967
    %v1985 = vmul.f32 %v1967, %v1984
    %v1986 = vsub.f32 1.0, %v1985
    %v1987 = vmul.f32 %v1984, %v1986
    %v1988 = vadd.f32 %v1984, %v1987
    %vm1989 = vweird.f32 %v1967
    %vm1990 = vweird.f32 %v1984
    %vm1991 = vmor %vm1989, %vm1990
    %v1992 = vsel %vm1991, %v1984, %v1988
    %v1993 = vand.u32 2147483647, %v1967
    %vm1994 = vcmp.eq.f32.partialorder %v1993, 8.507059e+37
    %v1995 = vand.u32 %v1967, 2147483648
    %v1996 = vor.u32 1.1754944e-38, %v1995
    %v1997 = vsel %vm1994, %v1996, %v1992
    %v1998 = vmul.f32 1.0, %v1997
    %v1999 = vrcp.pop %v1968
    %v2000 = vmul.f32 %v1968, %v1999
    %v2001 = vsub.f32 1.0, %v2000
    %v2002 = vmul.f32 %v1999, %v2001
    %v2003 = vadd.f32 %v1999, %v2002
    %vm2004 = vweird.f32 %v1968
    %vm2005 = vweird.f32 %v1999
    %vm2006 = vmor %vm2004, %vm2005
    %v2007 = vsel %vm2006, %v1999, %v2003
    %v2008 = vand.u32 2147483647, %v1968
    %vm2009 = vcmp.eq.f32.partialorder %v2008, 8.507059e+37
    %v2010 = vand.u32 %v1968, 2147483648
    %v2011 = vor.u32 1.1754944e-38, %v2010
    %v2012 = vsel %vm2009, %v2011, %v2007
    %v2013 = vmul.f32 1.0, %v2012
    %v2014 = vtanh.pop %v1956
    %v2015 = vmul.f32 %v1998, %v1867
    %v2016 = vmul.f32 %v1983, %v2014
    %v2017 = vadd.f32 %v2015, %v2016
    %v2018 = vtanh.pop %v2017
    %v2019 = vmul.f32 %v2013, %v2018
    %v2021 = vrot.slane %v2019, 1
    %v2022 = vrot.slane %v2019, 2
    %v2023 = vrot.slane %v2019, 3
    %v2024 = vrot.slane %v2019, 4
    %v2025 = vrot.slane %v2019, 5
    %v2026 = vrot.slane %v2019, 6
    %v2027 = vrot.slane %v2019, 7
    %2035 = vst [vmem:[#allocation9 + $0xb] sm:$0x1] %v2019
    %2036 = vst [vmem:[#allocation9 + $0x1b] sm:$0x1] %v2021
    %2037 = vst [vmem:[#allocation9 + $0x2b] sm:$0x1] %v2022
    %2038 = vst [vmem:[#allocation9 + $0x3b] sm:$0x1] %v2023
    %2039 = vst [vmem:[#allocation9 + $0x4b] sm:$0x1] %v2024
    %2040 = vst [vmem:[#allocation9 + $0x5b] sm:$0x1] %v2025
    %2041 = vst [vmem:[#allocation9 + $0x6b] sm:$0x1] %v2026
    %2042 = vst [vmem:[#allocation9 + $0x7b] sm:$0x1] %v2027
    %s2043 = scalar_lea.vmem [#allocation4], 192
    %v2044 = vld [vmem:[%s2043] sm:$0xff]
    %v2045 = vld [vmem:[%s2043 + $0x8] sm:$0xff]
    %v2046 = vunpack.c.l.bf16 %v2044
    %v2047 = vunpack.c.h.bf16 %v2044
    %v2048 = vunpack.c.l.bf16 %v2045
    %v2049 = vunpack.c.h.bf16 %v2045
    %v2050 = vpack.c.bf16 %v2019, %v2019
    %2051 = vmatpush.bf16.msra.mxu0 %v215
    %2052 = vmatpush.bf16.msra.mxu0 %v211
    %2053 = vmatpush.bf16.msra.mxu0 %v207
    %2054 = vmatpush.bf16.msra.mxu0 %v203
    %2055 = vmatpush.bf16.msra.mxu0 %v199
    %2056 = vmatpush.bf16.msra.mxu0 %v195
    %2057 = vmatpush.bf16.msra.mxu0 %v191
    %2058 = vmatpush.bf16.msra.mxu0 %v187
    %2059 = vmatmul.bf16.gmra.mxu0 %v2050
    %v2060 = vpop.f32.mrf.mxu0
    %v2061 = vadd.f32 0.0, %v2060
    %v2062 = vpop.f32.mrf.mxu0
    %2063 = vdwg.mxu0
    %2064 = vmatpush.bf16.msra.mxu0 %v216
    %2065 = vmatpush.bf16.msra.mxu0 %v212
    %2066 = vmatpush.bf16.msra.mxu0 %v208
    %2067 = vmatpush.bf16.msra.mxu0 %v204
    %2068 = vmatpush.bf16.msra.mxu0 %v200
    %2069 = vmatpush.bf16.msra.mxu0 %v196
    %2070 = vmatpush.bf16.msra.mxu0 %v192
    %2071 = vmatpush.bf16.msra.mxu0 %v188
    %2072 = vmatmul.bf16.gmra.mxu0 %v2050
    %v2073 = vpop.f32.mrf.mxu0
    %v2074 = vadd.f32 0.0, %v2073
    %v2075 = vpop.f32.mrf.mxu0
    %2076 = vdwg.mxu0
    %2077 = vmatpush.bf16.msra.mxu0 %v217
    %2078 = vmatpush.bf16.msra.mxu0 %v213
    %2079 = vmatpush.bf16.msra.mxu0 %v209
    %2080 = vmatpush.bf16.msra.mxu0 %v205
    %2081 = vmatpush.bf16.msra.mxu0 %v201
    %2082 = vmatpush.bf16.msra.mxu0 %v197
    %2083 = vmatpush.bf16.msra.mxu0 %v193
    %2084 = vmatpush.bf16.msra.mxu0 %v189
    %2085 = vmatmul.bf16.gmra.mxu0 %v2050
    %v2086 = vpop.f32.mrf.mxu0
    %v2087 = vadd.f32 0.0, %v2086
    %v2088 = vpop.f32.mrf.mxu0
    %2089 = vdwg.mxu0
    %2090 = vmatpush.bf16.msra.mxu0 %v218
    %2091 = vmatpush.bf16.msra.mxu0 %v214
    %2092 = vmatpush.bf16.msra.mxu0 %v210
    %2093 = vmatpush.bf16.msra.mxu0 %v206
    %2094 = vmatpush.bf16.msra.mxu0 %v202
    %2095 = vmatpush.bf16.msra.mxu0 %v198
    %2096 = vmatpush.bf16.msra.mxu0 %v194
    %2097 = vmatpush.bf16.msra.mxu0 %v190
    %2098 = vmatmul.bf16.gmra.mxu0 %v2050
    %v2099 = vpop.f32.mrf.mxu0
    %v2100 = vadd.f32 0.0, %v2099
    %v2101 = vpop.f32.mrf.mxu0
    %2102 = vdwg.mxu0
    %v2103 = vadd.f32 %v2046, %v2061
    %v2104 = vadd.f32 %v2047, %v2074
    %v2105 = vadd.f32 %v2048, %v2087
    %v2106 = vadd.f32 %v2049, %v2100
    %v2107 = vxor.u32 %v2103, 2147483648
    %v2108 = vxor.u32 %v2104, 2147483648
    %v2109 = vxor.u32 %v2105, 2147483648
    %v2110 = vmul.f32 %v2107, 1.442695
    %v2111 = vpow.pop %v2110
    %v2112 = vmul.f32 %v2108, 1.442695
    %v2113 = vpow.pop %v2112
    %v2114 = vmul.f32 %v2109, 1.442695
    %v2115 = vpow.pop %v2114
    %v2116 = vadd.f32 %v2111, 1.0
    %v2117 = vadd.f32 %v2113, 1.0
    %v2118 = vadd.f32 %v2115, 1.0
    %v2119 = vrcp.pop %v2116
    %v2120 = vmul.f32 %v2116, %v2119
    %v2121 = vsub.f32 1.0, %v2120
    %v2122 = vmul.f32 %v2119, %v2121
    %v2123 = vadd.f32 %v2119, %v2122
    %vm2124 = vweird.f32 %v2116
    %vm2125 = vweird.f32 %v2119
    %vm2126 = vmor %vm2124, %vm2125
    %v2127 = vsel %vm2126, %v2119, %v2123
    %v2128 = vand.u32 2147483647, %v2116
    %vm2129 = vcmp.eq.f32.partialorder %v2128, 8.507059e+37
    %v2130 = vand.u32 %v2116, 2147483648
    %v2131 = vor.u32 1.1754944e-38, %v2130
    %v2132 = vsel %vm2129, %v2131, %v2127
    %v2133 = vmul.f32 1.0, %v2132
    %v2134 = vrcp.pop %v2117
    %v2135 = vmul.f32 %v2117, %v2134
    %v2136 = vsub.f32 1.0, %v2135
    %v2137 = vmul.f32 %v2134, %v2136
    %v2138 = vadd.f32 %v2134, %v2137
    %vm2139 = vweird.f32 %v2117
    %vm2140 = vweird.f32 %v2134
    %vm2141 = vmor %vm2139, %vm2140
    %v2142 = vsel %vm2141, %v2134, %v2138
    %v2143 = vand.u32 2147483647, %v2117
    %vm2144 = vcmp.eq.f32.partialorder %v2143, 8.507059e+37
    %v2145 = vand.u32 %v2117, 2147483648
    %v2146 = vor.u32 1.1754944e-38, %v2145
    %v2147 = vsel %vm2144, %v2146, %v2142
    %v2148 = vmul.f32 1.0, %v2147
    %v2149 = vrcp.pop %v2118
    %v2150 = vmul.f32 %v2118, %v2149
    %v2151 = vsub.f32 1.0, %v2150
    %v2152 = vmul.f32 %v2149, %v2151
    %v2153 = vadd.f32 %v2149, %v2152
    %vm2154 = vweird.f32 %v2118
    %vm2155 = vweird.f32 %v2149
    %vm2156 = vmor %vm2154, %vm2155
    %v2157 = vsel %vm2156, %v2149, %v2153
    %v2158 = vand.u32 2147483647, %v2118
    %vm2159 = vcmp.eq.f32.partialorder %v2158, 8.507059e+37
    %v2160 = vand.u32 %v2118, 2147483648
    %v2161 = vor.u32 1.1754944e-38, %v2160
    %v2162 = vsel %vm2159, %v2161, %v2157
    %v2163 = vmul.f32 1.0, %v2162
    %v2164 = vtanh.pop %v2106
    %v2165 = vmul.f32 %v2148, %v2017
    %v2166 = vmul.f32 %v2133, %v2164
    %v2167 = vadd.f32 %v2165, %v2166
    %v2168 = vtanh.pop %v2167
    %v2169 = vmul.f32 %v2163, %v2168
    %v2171 = vrot.slane %v2169, 1
    %v2172 = vrot.slane %v2169, 2
    %v2173 = vrot.slane %v2169, 3
    %v2174 = vrot.slane %v2169, 4
    %v2175 = vrot.slane %v2169, 5
    %v2176 = vrot.slane %v2169, 6
    %v2177 = vrot.slane %v2169, 7
    %2185 = vst [vmem:[#allocation9 + $0xc] sm:$0x1] %v2169
    %2186 = vst [vmem:[#allocation9 + $0x1c] sm:$0x1] %v2171
    %2187 = vst [vmem:[#allocation9 + $0x2c] sm:$0x1] %v2172
    %2188 = vst [vmem:[#allocation9 + $0x3c] sm:$0x1] %v2173
    %2189 = vst [vmem:[#allocation9 + $0x4c] sm:$0x1] %v2174
    %2190 = vst [vmem:[#allocation9 + $0x5c] sm:$0x1] %v2175
    %2191 = vst [vmem:[#allocation9 + $0x6c] sm:$0x1] %v2176
    %2192 = vst [vmem:[#allocation9 + $0x7c] sm:$0x1] %v2177
    %s2193 = scalar_lea.vmem [#allocation4], 208
    %v2194 = vld [vmem:[%s2193] sm:$0xff]
    %v2195 = vld [vmem:[%s2193 + $0x8] sm:$0xff]
    %v2196 = vunpack.c.l.bf16 %v2194
    %v2197 = vunpack.c.h.bf16 %v2194
    %v2198 = vunpack.c.l.bf16 %v2195
    %v2199 = vunpack.c.h.bf16 %v2195
    %v2200 = vpack.c.bf16 %v2169, %v2169
    %2201 = vmatpush.bf16.msra.mxu0 %v215
    %2202 = vmatpush.bf16.msra.mxu0 %v211
    %2203 = vmatpush.bf16.msra.mxu0 %v207
    %2204 = vmatpush.bf16.msra.mxu0 %v203
    %2205 = vmatpush.bf16.msra.mxu0 %v199
    %2206 = vmatpush.bf16.msra.mxu0 %v195
    %2207 = vmatpush.bf16.msra.mxu0 %v191
    %2208 = vmatpush.bf16.msra.mxu0 %v187
    %2209 = vmatmul.bf16.gmra.mxu0 %v2200
    %v2210 = vpop.f32.mrf.mxu0
    %v2211 = vadd.f32 0.0, %v2210
    %v2212 = vpop.f32.mrf.mxu0
    %2213 = vdwg.mxu0
    %2214 = vmatpush.bf16.msra.mxu0 %v216
    %2215 = vmatpush.bf16.msra.mxu0 %v212
    %2216 = vmatpush.bf16.msra.mxu0 %v208
    %2217 = vmatpush.bf16.msra.mxu0 %v204
    %2218 = vmatpush.bf16.msra.mxu0 %v200
    %2219 = vmatpush.bf16.msra.mxu0 %v196
    %2220 = vmatpush.bf16.msra.mxu0 %v192
    %2221 = vmatpush.bf16.msra.mxu0 %v188
    %2222 = vmatmul.bf16.gmra.mxu0 %v2200
    %v2223 = vpop.f32.mrf.mxu0
    %v2224 = vadd.f32 0.0, %v2223
    %v2225 = vpop.f32.mrf.mxu0
    %2226 = vdwg.mxu0
    %2227 = vmatpush.bf16.msra.mxu0 %v217
    %2228 = vmatpush.bf16.msra.mxu0 %v213
    %2229 = vmatpush.bf16.msra.mxu0 %v209
    %2230 = vmatpush.bf16.msra.mxu0 %v205
    %2231 = vmatpush.bf16.msra.mxu0 %v201
    %2232 = vmatpush.bf16.msra.mxu0 %v197
    %2233 = vmatpush.bf16.msra.mxu0 %v193
    %2234 = vmatpush.bf16.msra.mxu0 %v189
    %2235 = vmatmul.bf16.gmra.mxu0 %v2200
    %v2236 = vpop.f32.mrf.mxu0
    %v2237 = vadd.f32 0.0, %v2236
    %v2238 = vpop.f32.mrf.mxu0
    %2239 = vdwg.mxu0
    %2240 = vmatpush.bf16.msra.mxu0 %v218
    %2241 = vmatpush.bf16.msra.mxu0 %v214
    %2242 = vmatpush.bf16.msra.mxu0 %v210
    %2243 = vmatpush.bf16.msra.mxu0 %v206
    %2244 = vmatpush.bf16.msra.mxu0 %v202
    %2245 = vmatpush.bf16.msra.mxu0 %v198
    %2246 = vmatpush.bf16.msra.mxu0 %v194
    %2247 = vmatpush.bf16.msra.mxu0 %v190
    %2248 = vmatmul.bf16.gmra.mxu0 %v2200
    %v2249 = vpop.f32.mrf.mxu0
    %v2250 = vadd.f32 0.0, %v2249
    %v2251 = vpop.f32.mrf.mxu0
    %2252 = vdwg.mxu0
    %v2253 = vadd.f32 %v2196, %v2211
    %v2254 = vadd.f32 %v2197, %v2224
    %v2255 = vadd.f32 %v2198, %v2237
    %v2256 = vadd.f32 %v2199, %v2250
    %v2257 = vxor.u32 %v2253, 2147483648
    %v2258 = vxor.u32 %v2254, 2147483648
    %v2259 = vxor.u32 %v2255, 2147483648
    %v2260 = vmul.f32 %v2257, 1.442695
    %v2261 = vpow.pop %v2260
    %v2262 = vmul.f32 %v2258, 1.442695
    %v2263 = vpow.pop %v2262
    %v2264 = vmul.f32 %v2259, 1.442695
    %v2265 = vpow.pop %v2264
    %v2266 = vadd.f32 %v2261, 1.0
    %v2267 = vadd.f32 %v2263, 1.0
    %v2268 = vadd.f32 %v2265, 1.0
    %v2269 = vrcp.pop %v2266
    %v2270 = vmul.f32 %v2266, %v2269
    %v2271 = vsub.f32 1.0, %v2270
    %v2272 = vmul.f32 %v2269, %v2271
    %v2273 = vadd.f32 %v2269, %v2272
    %vm2274 = vweird.f32 %v2266
    %vm2275 = vweird.f32 %v2269
    %vm2276 = vmor %vm2274, %vm2275
    %v2277 = vsel %vm2276, %v2269, %v2273
    %v2278 = vand.u32 2147483647, %v2266
    %vm2279 = vcmp.eq.f32.partialorder %v2278, 8.507059e+37
    %v2280 = vand.u32 %v2266, 2147483648
    %v2281 = vor.u32 1.1754944e-38, %v2280
    %v2282 = vsel %vm2279, %v2281, %v2277
    %v2283 = vmul.f32 1.0, %v2282
    %v2284 = vrcp.pop %v2267
    %v2285 = vmul.f32 %v2267, %v2284
    %v2286 = vsub.f32 1.0, %v2285
    %v2287 = vmul.f32 %v2284, %v2286
    %v2288 = vadd.f32 %v2284, %v2287
    %vm2289 = vweird.f32 %v2267
    %vm2290 = vweird.f32 %v2284
    %vm2291 = vmor %vm2289, %vm2290
    %v2292 = vsel %vm2291, %v2284, %v2288
    %v2293 = vand.u32 2147483647, %v2267
    %vm2294 = vcmp.eq.f32.partialorder %v2293, 8.507059e+37
    %v2295 = vand.u32 %v2267, 2147483648
    %v2296 = vor.u32 1.1754944e-38, %v2295
    %v2297 = vsel %vm2294, %v2296, %v2292
    %v2298 = vmul.f32 1.0, %v2297
    %v2299 = vrcp.pop %v2268
    %v2300 = vmul.f32 %v2268, %v2299
    %v2301 = vsub.f32 1.0, %v2300
    %v2302 = vmul.f32 %v2299, %v2301
    %v2303 = vadd.f32 %v2299, %v2302
    %vm2304 = vweird.f32 %v2268
    %vm2305 = vweird.f32 %v2299
    %vm2306 = vmor %vm2304, %vm2305
    %v2307 = vsel %vm2306, %v2299, %v2303
    %v2308 = vand.u32 2147483647, %v2268
    %vm2309 = vcmp.eq.f32.partialorder %v2308, 8.507059e+37
    %v2310 = vand.u32 %v2268, 2147483648
    %v2311 = vor.u32 1.1754944e-38, %v2310
    %v2312 = vsel %vm2309, %v2311, %v2307
    %v2313 = vmul.f32 1.0, %v2312
    %v2314 = vtanh.pop %v2256
    %v2315 = vmul.f32 %v2298, %v2167
    %v2316 = vmul.f32 %v2283, %v2314
    %v2317 = vadd.f32 %v2315, %v2316
    %v2318 = vtanh.pop %v2317
    %v2319 = vmul.f32 %v2313, %v2318
    %v2321 = vrot.slane %v2319, 1
    %v2322 = vrot.slane %v2319, 2
    %v2323 = vrot.slane %v2319, 3
    %v2324 = vrot.slane %v2319, 4
    %v2325 = vrot.slane %v2319, 5
    %v2326 = vrot.slane %v2319, 6
    %v2327 = vrot.slane %v2319, 7
    %2335 = vst [vmem:[#allocation9 + $0xd] sm:$0x1] %v2319
    %2336 = vst [vmem:[#allocation9 + $0x1d] sm:$0x1] %v2321
    %2337 = vst [vmem:[#allocation9 + $0x2d] sm:$0x1] %v2322
    %2338 = vst [vmem:[#allocation9 + $0x3d] sm:$0x1] %v2323
    %2339 = vst [vmem:[#allocation9 + $0x4d] sm:$0x1] %v2324
    %2340 = vst [vmem:[#allocation9 + $0x5d] sm:$0x1] %v2325
    %2341 = vst [vmem:[#allocation9 + $0x6d] sm:$0x1] %v2326
    %2342 = vst [vmem:[#allocation9 + $0x7d] sm:$0x1] %v2327
    %s2343 = scalar_lea.vmem [#allocation4], 224
    %v2344 = vld [vmem:[%s2343] sm:$0xff]
    %v2345 = vld [vmem:[%s2343 + $0x8] sm:$0xff]
    %v2346 = vunpack.c.l.bf16 %v2344
    %v2347 = vunpack.c.h.bf16 %v2344
    %v2348 = vunpack.c.l.bf16 %v2345
    %v2349 = vunpack.c.h.bf16 %v2345
    %v2350 = vpack.c.bf16 %v2319, %v2319
    %2351 = vmatpush.bf16.msra.mxu0 %v215
    %2352 = vmatpush.bf16.msra.mxu0 %v211
    %2353 = vmatpush.bf16.msra.mxu0 %v207
    %2354 = vmatpush.bf16.msra.mxu0 %v203
    %2355 = vmatpush.bf16.msra.mxu0 %v199
    %2356 = vmatpush.bf16.msra.mxu0 %v195
    %2357 = vmatpush.bf16.msra.mxu0 %v191
    %2358 = vmatpush.bf16.msra.mxu0 %v187
    %2359 = vmatmul.bf16.gmra.mxu0 %v2350
    %v2360 = vpop.f32.mrf.mxu0
    %v2361 = vadd.f32 0.0, %v2360
    %v2362 = vpop.f32.mrf.mxu0
    %2363 = vdwg.mxu0
    %2364 = vmatpush.bf16.msra.mxu0 %v216
    %2365 = vmatpush.bf16.msra.mxu0 %v212
    %2366 = vmatpush.bf16.msra.mxu0 %v208
    %2367 = vmatpush.bf16.msra.mxu0 %v204
    %2368 = vmatpush.bf16.msra.mxu0 %v200
    %2369 = vmatpush.bf16.msra.mxu0 %v196
    %2370 = vmatpush.bf16.msra.mxu0 %v192
    %2371 = vmatpush.bf16.msra.mxu0 %v188
    %2372 = vmatmul.bf16.gmra.mxu0 %v2350
    %v2373 = vpop.f32.mrf.mxu0
    %v2374 = vadd.f32 0.0, %v2373
    %v2375 = vpop.f32.mrf.mxu0
    %2376 = vdwg.mxu0
    %2377 = vmatpush.bf16.msra.mxu0 %v217
    %2378 = vmatpush.bf16.msra.mxu0 %v213
    %2379 = vmatpush.bf16.msra.mxu0 %v209
    %2380 = vmatpush.bf16.msra.mxu0 %v205
    %2381 = vmatpush.bf16.msra.mxu0 %v201
    %2382 = vmatpush.bf16.msra.mxu0 %v197
    %2383 = vmatpush.bf16.msra.mxu0 %v193
    %2384 = vmatpush.bf16.msra.mxu0 %v189
    %2385 = vmatmul.bf16.gmra.mxu0 %v2350
    %v2386 = vpop.f32.mrf.mxu0
    %v2387 = vadd.f32 0.0, %v2386
    %v2388 = vpop.f32.mrf.mxu0
    %2389 = vdwg.mxu0
    %2390 = vmatpush.bf16.msra.mxu0 %v218
    %2391 = vmatpush.bf16.msra.mxu0 %v214
    %2392 = vmatpush.bf16.msra.mxu0 %v210
    %2393 = vmatpush.bf16.msra.mxu0 %v206
    %2394 = vmatpush.bf16.msra.mxu0 %v202
    %2395 = vmatpush.bf16.msra.mxu0 %v198
    %2396 = vmatpush.bf16.msra.mxu0 %v194
    %2397 = vmatpush.bf16.msra.mxu0 %v190
    %2398 = vmatmul.bf16.gmra.mxu0 %v2350
    %v2399 = vpop.f32.mrf.mxu0
    %v2400 = vadd.f32 0.0, %v2399
    %v2401 = vpop.f32.mrf.mxu0
    %2402 = vdwg.mxu0
    %v2403 = vadd.f32 %v2346, %v2361
    %v2404 = vadd.f32 %v2347, %v2374
    %v2405 = vadd.f32 %v2348, %v2387
    %v2406 = vadd.f32 %v2349, %v2400
    %v2407 = vxor.u32 %v2403, 2147483648
    %v2408 = vxor.u32 %v2404, 2147483648
    %v2409 = vxor.u32 %v2405, 2147483648
    %v2410 = vmul.f32 %v2407, 1.442695
    %v2411 = vpow.pop %v2410
    %v2412 = vmul.f32 %v2408, 1.442695
    %v2413 = vpow.pop %v2412
    %v2414 = vmul.f32 %v2409, 1.442695
    %v2415 = vpow.pop %v2414
    %v2416 = vadd.f32 %v2411, 1.0
    %v2417 = vadd.f32 %v2413, 1.0
    %v2418 = vadd.f32 %v2415, 1.0
    %v2419 = vrcp.pop %v2416
    %v2420 = vmul.f32 %v2416, %v2419
    %v2421 = vsub.f32 1.0, %v2420
    %v2422 = vmul.f32 %v2419, %v2421
    %v2423 = vadd.f32 %v2419, %v2422
    %vm2424 = vweird.f32 %v2416
    %vm2425 = vweird.f32 %v2419
    %vm2426 = vmor %vm2424, %vm2425
    %v2427 = vsel %vm2426, %v2419, %v2423
    %v2428 = vand.u32 2147483647, %v2416
    %vm2429 = vcmp.eq.f32.partialorder %v2428, 8.507059e+37
    %v2430 = vand.u32 %v2416, 2147483648
    %v2431 = vor.u32 1.1754944e-38, %v2430
    %v2432 = vsel %vm2429, %v2431, %v2427
    %v2433 = vmul.f32 1.0, %v2432
    %v2434 = vrcp.pop %v2417
    %v2435 = vmul.f32 %v2417, %v2434
    %v2436 = vsub.f32 1.0, %v2435
    %v2437 = vmul.f32 %v2434, %v2436
    %v2438 = vadd.f32 %v2434, %v2437
    %vm2439 = vweird.f32 %v2417
    %vm2440 = vweird.f32 %v2434
    %vm2441 = vmor %vm2439, %vm2440
    %v2442 = vsel %vm2441, %v2434, %v2438
    %v2443 = vand.u32 2147483647, %v2417
    %vm2444 = vcmp.eq.f32.partialorder %v2443, 8.507059e+37
    %v2445 = vand.u32 %v2417, 2147483648
    %v2446 = vor.u32 1.1754944e-38, %v2445
    %v2447 = vsel %vm2444, %v2446, %v2442
    %v2448 = vmul.f32 1.0, %v2447
    %v2449 = vrcp.pop %v2418
    %v2450 = vmul.f32 %v2418, %v2449
    %v2451 = vsub.f32 1.0, %v2450
    %v2452 = vmul.f32 %v2449, %v2451
    %v2453 = vadd.f32 %v2449, %v2452
    %vm2454 = vweird.f32 %v2418
    %vm2455 = vweird.f32 %v2449
    %vm2456 = vmor %vm2454, %vm2455
    %v2457 = vsel %vm2456, %v2449, %v2453
    %v2458 = vand.u32 2147483647, %v2418
    %vm2459 = vcmp.eq.f32.partialorder %v2458, 8.507059e+37
    %v2460 = vand.u32 %v2418, 2147483648
    %v2461 = vor.u32 1.1754944e-38, %v2460
    %v2462 = vsel %vm2459, %v2461, %v2457
    %v2463 = vmul.f32 1.0, %v2462
    %v2464 = vtanh.pop %v2406
    %v2465 = vmul.f32 %v2448, %v2317
    %v2466 = vmul.f32 %v2433, %v2464
    %v2467 = vadd.f32 %v2465, %v2466
    %v2468 = vtanh.pop %v2467
    %v2469 = vmul.f32 %v2463, %v2468
    %v2471 = vrot.slane %v2469, 1
    %v2472 = vrot.slane %v2469, 2
    %v2473 = vrot.slane %v2469, 3
    %v2474 = vrot.slane %v2469, 4
    %v2475 = vrot.slane %v2469, 5
    %v2476 = vrot.slane %v2469, 6
    %v2477 = vrot.slane %v2469, 7
    %2485 = vst [vmem:[#allocation9 + $0xe] sm:$0x1] %v2469
    %2486 = vst [vmem:[#allocation9 + $0x1e] sm:$0x1] %v2471
    %2487 = vst [vmem:[#allocation9 + $0x2e] sm:$0x1] %v2472
    %2488 = vst [vmem:[#allocation9 + $0x3e] sm:$0x1] %v2473
    %2489 = vst [vmem:[#allocation9 + $0x4e] sm:$0x1] %v2474
    %2490 = vst [vmem:[#allocation9 + $0x5e] sm:$0x1] %v2475
    %2491 = vst [vmem:[#allocation9 + $0x6e] sm:$0x1] %v2476
    %2492 = vst [vmem:[#allocation9 + $0x7e] sm:$0x1] %v2477
    %s2493 = scalar_lea.vmem [#allocation4], 240
    %v2494 = vld [vmem:[%s2493] sm:$0xff]
    %v2495 = vld [vmem:[%s2493 + $0x8] sm:$0xff]
    %v2496 = vunpack.c.l.bf16 %v2494
    %v2497 = vunpack.c.h.bf16 %v2494
    %v2498 = vunpack.c.l.bf16 %v2495
    %v2499 = vunpack.c.h.bf16 %v2495
    %v2500 = vpack.c.bf16 %v2469, %v2469
    %2501 = vmatpush.bf16.msra.mxu0 %v215
    %2502 = vmatpush.bf16.msra.mxu0 %v211
    %2503 = vmatpush.bf16.msra.mxu0 %v207
    %2504 = vmatpush.bf16.msra.mxu0 %v203
    %2505 = vmatpush.bf16.msra.mxu0 %v199
    %2506 = vmatpush.bf16.msra.mxu0 %v195
    %2507 = vmatpush.bf16.msra.mxu0 %v191
    %2508 = vmatpush.bf16.msra.mxu0 %v187
    %2509 = vmatmul.bf16.gmra.mxu0 %v2500
    %v2510 = vpop.f32.mrf.mxu0
    %v2511 = vadd.f32 0.0, %v2510
    %v2512 = vpop.f32.mrf.mxu0
    %2513 = vdwg.mxu0
    %2514 = vmatpush.bf16.msra.mxu0 %v216
    %2515 = vmatpush.bf16.msra.mxu0 %v212
    %2516 = vmatpush.bf16.msra.mxu0 %v208
    %2517 = vmatpush.bf16.msra.mxu0 %v204
    %2518 = vmatpush.bf16.msra.mxu0 %v200
    %2519 = vmatpush.bf16.msra.mxu0 %v196
    %2520 = vmatpush.bf16.msra.mxu0 %v192
    %2521 = vmatpush.bf16.msra.mxu0 %v188
    %2522 = vmatmul.bf16.gmra.mxu0 %v2500
    %v2523 = vpop.f32.mrf.mxu0
    %v2524 = vadd.f32 0.0, %v2523
    %v2525 = vpop.f32.mrf.mxu0
    %2526 = vdwg.mxu0
    %2527 = vmatpush.bf16.msra.mxu0 %v217
    %2528 = vmatpush.bf16.msra.mxu0 %v213
    %2529 = vmatpush.bf16.msra.mxu0 %v209
    %2530 = vmatpush.bf16.msra.mxu0 %v205
    %2531 = vmatpush.bf16.msra.mxu0 %v201
    %2532 = vmatpush.bf16.msra.mxu0 %v197
    %2533 = vmatpush.bf16.msra.mxu0 %v193
    %2534 = vmatpush.bf16.msra.mxu0 %v189
    %2535 = vmatmul.bf16.gmra.mxu0 %v2500
    %v2536 = vpop.f32.mrf.mxu0
    %v2537 = vadd.f32 0.0, %v2536
    %v2538 = vpop.f32.mrf.mxu0
    %2539 = vdwg.mxu0
    %2540 = vmatpush.bf16.msra.mxu0 %v218
    %2541 = vmatpush.bf16.msra.mxu0 %v214
    %2542 = vmatpush.bf16.msra.mxu0 %v210
    %2543 = vmatpush.bf16.msra.mxu0 %v206
    %2544 = vmatpush.bf16.msra.mxu0 %v202
    %2545 = vmatpush.bf16.msra.mxu0 %v198
    %2546 = vmatpush.bf16.msra.mxu0 %v194
    %2547 = vmatpush.bf16.msra.mxu0 %v190
    %2548 = vmatmul.bf16.gmra.mxu0 %v2500
    %v2549 = vpop.f32.mrf.mxu0
    %v2550 = vadd.f32 0.0, %v2549
    %v2551 = vpop.f32.mrf.mxu0
    %2552 = vdwg.mxu0
    %v2553 = vadd.f32 %v2496, %v2511
    %v2554 = vadd.f32 %v2497, %v2524
    %v2555 = vadd.f32 %v2498, %v2537
    %v2556 = vadd.f32 %v2499, %v2550
    %v2557 = vxor.u32 %v2553, 2147483648
    %v2558 = vxor.u32 %v2554, 2147483648
    %v2559 = vxor.u32 %v2555, 2147483648
    %v2560 = vmul.f32 %v2557, 1.442695
    %v2561 = vpow.pop %v2560
    %v2562 = vmul.f32 %v2558, 1.442695
    %v2563 = vpow.pop %v2562
    %v2564 = vmul.f32 %v2559, 1.442695
    %v2565 = vpow.pop %v2564
    %v2566 = vadd.f32 %v2561, 1.0
    %v2567 = vadd.f32 %v2563, 1.0
    %v2568 = vadd.f32 %v2565, 1.0
    %v2569 = vrcp.pop %v2566
    %v2570 = vmul.f32 %v2566, %v2569
    %v2571 = vsub.f32 1.0, %v2570
    %v2572 = vmul.f32 %v2569, %v2571
    %v2573 = vadd.f32 %v2569, %v2572
    %vm2574 = vweird.f32 %v2566
    %vm2575 = vweird.f32 %v2569
    %vm2576 = vmor %vm2574, %vm2575
    %v2577 = vsel %vm2576, %v2569, %v2573
    %v2578 = vand.u32 2147483647, %v2566
    %vm2579 = vcmp.eq.f32.partialorder %v2578, 8.507059e+37
    %v2580 = vand.u32 %v2566, 2147483648
    %v2581 = vor.u32 1.1754944e-38, %v2580
    %v2582 = vsel %vm2579, %v2581, %v2577
    %v2583 = vmul.f32 1.0, %v2582
    %v2584 = vrcp.pop %v2567
    %v2585 = vmul.f32 %v2567, %v2584
    %v2586 = vsub.f32 1.0, %v2585
    %v2587 = vmul.f32 %v2584, %v2586
    %v2588 = vadd.f32 %v2584, %v2587
    %vm2589 = vweird.f32 %v2567
    %vm2590 = vweird.f32 %v2584
    %vm2591 = vmor %vm2589, %vm2590
    %v2592 = vsel %vm2591, %v2584, %v2588
    %v2593 = vand.u32 2147483647, %v2567
    %vm2594 = vcmp.eq.f32.partialorder %v2593, 8.507059e+37
    %v2595 = vand.u32 %v2567, 2147483648
    %v2596 = vor.u32 1.1754944e-38, %v2595
    %v2597 = vsel %vm2594, %v2596, %v2592
    %v2598 = vmul.f32 1.0, %v2597
    %v2599 = vrcp.pop %v2568
    %v2600 = vmul.f32 %v2568, %v2599
    %v2601 = vsub.f32 1.0, %v2600
    %v2602 = vmul.f32 %v2599, %v2601
    %v2603 = vadd.f32 %v2599, %v2602
    %vm2604 = vweird.f32 %v2568
    %vm2605 = vweird.f32 %v2599
    %vm2606 = vmor %vm2604, %vm2605
    %v2607 = vsel %vm2606, %v2599, %v2603
    %v2608 = vand.u32 2147483647, %v2568
    %vm2609 = vcmp.eq.f32.partialorder %v2608, 8.507059e+37
    %v2610 = vand.u32 %v2568, 2147483648
    %v2611 = vor.u32 1.1754944e-38, %v2610
    %v2612 = vsel %vm2609, %v2611, %v2607
    %v2613 = vmul.f32 1.0, %v2612
    %v2614 = vtanh.pop %v2556
    %v2615 = vmul.f32 %v2598, %v2467
    %v2616 = vmul.f32 %v2583, %v2614
    %v2617 = vadd.f32 %v2615, %v2616
    %v2618 = vtanh.pop %v2617
    %v2619 = vmul.f32 %v2613, %v2618
    %v2621 = vrot.slane %v2619, 1
    %v2622 = vrot.slane %v2619, 2
    %v2623 = vrot.slane %v2619, 3
    %v2624 = vrot.slane %v2619, 4
    %v2625 = vrot.slane %v2619, 5
    %v2626 = vrot.slane %v2619, 6
    %v2627 = vrot.slane %v2619, 7
    %2635 = vst [vmem:[#allocation9 + $0xf] sm:$0x1] %v2619
    %2636 = vst [vmem:[#allocation9 + $0x1f] sm:$0x1] %v2621
    %2637 = vst [vmem:[#allocation9 + $0x2f] sm:$0x1] %v2622
    %2638 = vst [vmem:[#allocation9 + $0x3f] sm:$0x1] %v2623
    %2639 = vst [vmem:[#allocation9 + $0x4f] sm:$0x1] %v2624
    %2640 = vst [vmem:[#allocation9 + $0x5f] sm:$0x1] %v2625
    %2641 = vst [vmem:[#allocation9 + $0x6f] sm:$0x1] %v2626
    %2642 = vst [vmem:[#allocation9 + $0x7f] sm:$0x1] %v2627
    %2643 = vst [vmem:[#allocation2] sm:$0xff] %v2619
    %2644 = vst [vmem:[#allocation3] sm:$0xff] %v2617
    // Predicated region
    $region22: #{tpu_custom_call.1} parent=1 // pred_check
      _
    $region23: #{tpu_custom_call.1} parent=1 // pred_check_branch
      %2646 = sbr.rel (0) target = $region25
    $region24: #{tpu_custom_call.1} parent=1 // pred_region
      %2648 = vsyncadd [#allocation6], 0
      %s2649 = sshll.u32 [#allocation9], 4
      %s2650 = int_to_ptr.vmem [resolvable:$true] %s2649
      %s2651 = sshll.u32 %s2, 4
      %s2652 = int_to_ptr.hbm [resolvable:$true] %s2651
      %2657 = dma.vmem_to_hbm [thread:$0]  %s2650, 2048, %s2652, [#allocation6], 128, 128, 8
    $region25: #{tpu_custom_call.1} parent=1 // pred_fallthru
      _
    // Predicated region
    $region26: #{tpu_custom_call.1} parent=1 // pred_check
      _
    $region27: #{tpu_custom_call.1} parent=1 // pred_check_branch
      %2659 = sbr.rel (0) target = $region29
    $region28: #{tpu_custom_call.1} parent=1 // pred_region
      %2661 = dma.done [#allocation6], 2048
    $region29: #{tpu_custom_call.1} parent=1 // pred_fallthru
      _
    %2662 = vsyncpa [#allocation5], 1
    %2663 = vsyncpa [#allocation8], 1
    %2664 = vsyncpa [#allocation6], 1

</llo_original>
